<compile_context>
chip_gen: v5e
topology: v5e:2x2
jax: 0.10.0
libtpu: 0.0.40
codegen_flags: <defaults>
</compile_context>

<pallas_src>
import functools

import jax
import jax.numpy as jnp
from jax.experimental import pallas as pl
from jax.experimental.pallas import tpu as pltpu

BN_EPS = 1e-5
VMEM_SPEC = pl.BlockSpec(memory_space=pltpu.MemorySpace.VMEM)

# Generation-aware scoped-VMEM limit (v5e/v6e physical: 128 MiB, v7x: 64 MiB).
try:
    _VMEM_CAP = int(pltpu.get_tpu_info().vmem_capacity_bytes)
except Exception:  # pragma: no cover - conservative fallback
    _VMEM_CAP = 64 << 20
_COMPILER_PARAMS = pltpu.CompilerParams(
    vmem_limit_bytes=max(16 << 20, int(_VMEM_CAP * 0.8)))


# ----------------------------------------------------------------------------
# Pallas kernels
# ----------------------------------------------------------------------------
def _conv_bn_relu_pool_kernel(p_ref, wt_ref, g_ref, be_ref, o_ref, *,
                              ms_pad, inv_count):
    """Fused conv-as-GEMM + BatchNorm(training stats) + affine + ReLU + 2x2 max.

    p_ref  : (K, 4*ms_pad + mx_pad) bf16  im2col columns: the four pool-window
             slabs, then the pool-dropped leftovers (only feed BN statistics).
             Pad columns are zero (and there is no bias), so they contribute
             nothing to the sums; `inv_count` uses the true element count.
    wt_ref : (Cout, K)  bf16   conv weight, transposed
    g_ref, be_ref : (Cout, 1) f32  BN gamma, beta
    o_ref  : (Cout, ms_pad) bf16   pooled activations, lane axis = N*PH*PW
    """
    # One weight-stationary GEMM for all slabs (MXU, f32 accumulation).
    y = jnp.dot(wt_ref[...], p_ref[...], preferred_element_type=jnp.float32)

    # Single-pass BN statistics: sum and sum-of-squares in f32.
    ssum = jnp.sum(y, axis=1, keepdims=True)
    ssq = jnp.sum(y * y, axis=1, keepdims=True)
    mean = ssum * inv_count
    var = ssq * inv_count - mean * mean            # biased (BN training mode)

    scale = g_ref[...] * jax.lax.rsqrt(var + BN_EPS)
    shift = be_ref[...] - mean * scale

    # BN affine + ReLU only on the four pooled slabs (leftovers not needed),
    # then the 2x2 max as tile-aligned static lane slices.
    z = jnp.maximum(y[:, :4 * ms_pad] * scale + shift, 0.0)
    o_ref[...] = jnp.maximum(
        jnp.maximum(z[:, 0 * ms_pad:1 * ms_pad], z[:, 1 * ms_pad:2 * ms_pad]),
        jnp.maximum(z[:, 2 * ms_pad:3 * ms_pad], z[:, 3 * ms_pad:4 * ms_pad]),
    ).astype(o_ref.dtype)


def _mlp_kernel(x_ref, w1_ref, b1_ref, w2_ref, b2_ref, o_ref):
    """fc1 + ReLU + fc2 (output padded to 128 lanes), fused; bf16 matmuls."""
    h = jnp.dot(x_ref[...], w1_ref[...],
                preferred_element_type=jnp.float32) + b1_ref[...]
    h = jnp.maximum(h, 0.0).astype(jnp.bfloat16)
    o_ref[...] = jnp.dot(h, w2_ref[...],
                         preferred_element_type=jnp.float32) + b2_ref[...]


# ----------------------------------------------------------------------------
# pallas_call wrappers (whole arrays fit in VMEM at these sizes -> no grid)
# ----------------------------------------------------------------------------
def conv_bn_relu_pool(slab, wt, g, be, ms_pad, count):
    cout = wt.shape[0]
    kernel = functools.partial(_conv_bn_relu_pool_kernel,
                               ms_pad=ms_pad, inv_count=1.0 / count)
    return pl.pallas_call(
        kernel,
        out_shape=jax.ShapeDtypeStruct((cout, ms_pad), jnp.bfloat16),
        in_specs=[VMEM_SPEC] * 4,
        out_specs=VMEM_SPEC,
        compiler_params=_COMPILER_PARAMS,
    )(slab, wt, g, be)


def mlp(x, w1, b1, w2, b2):
    return pl.pallas_call(
        _mlp_kernel,
        out_shape=jax.ShapeDtypeStruct((x.shape[0], w2.shape[1]), jnp.float32),
        in_specs=[VMEM_SPEC] * 5,
        out_specs=VMEM_SPEC,
        compiler_params=_COMPILER_PARAMS,
    )(x, w1, b1, w2, b2)


# ----------------------------------------------------------------------------
# plain-JAX glue (tiny data movement only, all bf16)
# ----------------------------------------------------------------------------
def _round_up(n, m):
    return (n + m - 1) // m * m


def _pad_rows(x, target):
    pad = target - x.shape[0]
    return x if pad == 0 else jnp.pad(x, ((0, pad), (0, 0)))


def _conv_stage_inputs(a, k):
    """a: (N, H, W, C) NHWC bf16.

    Returns (slab, ms, ms_pad, count, (n, ph, pw)) where slab is
    (K, 4*ms_pad + mx_pad) bf16: four 128-padded pool-window slabs followed by
    the 128-padded pool-dropped leftovers (BN statistics only). Lane order
    within each slab is (n, ph, pw); K order is kh*k*C + kw*C + c.
    """
    n, h, w, c = a.shape
    oh, ow = h - k + 1, w - k + 1
    ph, pw = oh // 2, ow // 2
    K = k * k * c

    cols = [a[:, kh:kh + oh, kw:kw + ow, :] for kh in range(k) for kw in range(k)]
    pf = jnp.concatenate(cols, axis=3)                        # (N, OH, OW, K)

    ms = n * ph * pw
    ms_pad = _round_up(ms, 128)
    pieces = []
    for sh in range(2):
        for sw in range(2):
            s = pf[:, sh:2 * ph:2, sw:2 * pw:2, :].reshape(ms, K)
            pieces.append(_pad_rows(s, ms_pad))

    # Conv outputs dropped by the pool still feed the BN statistics.
    ex = jnp.concatenate(
        [pf[:, 2 * ph:, :, :].reshape(-1, K),
         pf[:, :2 * ph, 2 * pw:, :].reshape(-1, K)], axis=0)
    mx_pad = _round_up(max(ex.shape[0], 1), 128)
    pieces.append(_pad_rows(ex, mx_pad))

    slab = jnp.concatenate(pieces, axis=0).T                  # (K, Mtot)
    count = n * oh * ow                                       # true BN count
    return slab.astype(jnp.bfloat16), ms, ms_pad, count, (n, ph, pw)


def prepare_params(params):
    """One-time weight layout preparation, done OUTSIDE the jitted forward."""
    f32, bf16 = jnp.float32, jnp.bfloat16

    def conv_wT(w):  # (Cout,Cin,KH,KW) -> (Cout, KH*KW*Cin), matches patch K
        cout = w.shape[0]
        return jnp.transpose(w, (0, 2, 3, 1)).reshape(cout, -1)

    def col(v):      # (C,) -> (C, 1) f32 (channel axis on sublanes)
        return v.reshape(-1, 1).astype(f32)

    fw2_pad = jnp.zeros((128, params["fw2"].shape[1]), f32).at[:10].set(
        params["fw2"])
    fb2_pad = jnp.zeros((128,), f32).at[:10].set(params["fb2"])

    # NOTE: conv biases b1/b2 are intentionally NOT used — under training-mode
    # BatchNorm the bias cancels exactly (mean shifts by b, variance unchanged).
    return {
        "w1t": conv_wT(params["w1"]).astype(bf16),             # (32, 48)
        "g1": col(params["g1"]), "be1": col(params["be1"]),
        "w2t": conv_wT(params["w2"]).astype(bf16),             # (32, 512)
        "g2": col(params["g2"]), "be2": col(params["be2"]),
        "fw1t": params["fw1"].T.astype(bf16),                  # (800, 256)
        "fb1": params["fb1"][None, :].astype(f32),             # (1, 256)
        "fw2t": fw2_pad.T.astype(bf16),                        # (256, 128)
        "fb2": fb2_pad[None, :],                               # (1, 128)
    }


# ----------------------------------------------------------------------------
# Full forward pass
# ----------------------------------------------------------------------------
def cnn1_forward(x, prep):
    """x: (N, 3, 32, 32) float32 (NCHW, PyTorch convention). Returns (N, 10)."""
    n = x.shape[0]
    a1 = jnp.transpose(x, (0, 2, 3, 1)).astype(jnp.bfloat16)       # (N,32,32,3)

    # ---- stage 1: conv1 + BN(train stats) + ReLU + maxpool (one kernel) ----
    slab1, ms1, ms1_pad, cnt1, (_, ph1, pw1) = _conv_stage_inputs(a1, 4)
    o1 = conv_bn_relu_pool(slab1, prep["w1t"], prep["g1"], prep["be1"],
                           ms1_pad, cnt1)                          # (32, ms1_pad) bf16

    # ---- stage 2: conv2 + BN(train stats) + ReLU + maxpool (one kernel) ----
    a2 = jnp.transpose(o1[:, :ms1].reshape(32, n, ph1, pw1),
                       (1, 2, 3, 0))                               # (N,14,14,32) bf16
    slab2, ms2, ms2_pad, cnt2, (_, ph2, pw2) = _conv_stage_inputs(a2, 4)
    o2 = conv_bn_relu_pool(slab2, prep["w2t"], prep["g2"], prep["be2"],
                           ms2_pad, cnt2)                          # (32, ms2_pad) bf16

    # ---- flatten exactly like torch.flatten on NCHW: (N, C*H*W), bf16 ----
    flat = jnp.transpose(o2[:, :ms2].reshape(32, n, ph2 * pw2),
                         (1, 0, 2)).reshape(n, 32 * ph2 * pw2)     # (N, 800)

    # ---- fc1 + ReLU + fc2 (fc2 padded to 128 lanes inside the kernel) ----
    logits = mlp(flat, prep["fw1t"], prep["fb1"], prep["fw2t"], prep["fb2"])
    return logits[:, :10]

# TODO(synk): BatchNorm running_mean/running_var bookkeeping (training-time
# side effect that does not affect this forward's output) is not replicated.
# TODO(synk): stage-2 im2col stays as small XLA glue; a fully in-kernel
# shifted-dot im2col (raw (N,14,14,32) in VMEM) needs non-tile-aligned 4-D
# reshapes/dots and was left out for lowering robustness.
# TODO(synk): for large batches the conv-stage kernels should get an M-tiled
# grid ('parallel' semantics, two-phase sum/sumsq BN) to use both v7x
# TensorCores and bound VMEM; at batch 2 the gridless form is launch-latency
# optimal.


# ----------------------------------------------------------------------------
def init_params(key):
    ks = jax.random.split(key, 12)
    f32 = jnp.float32
    return {
        # conv1: Conv2d(3, 32, 4)
        "w1": 0.1 * jax.random.normal(ks[0], (32, 3, 4, 4), f32),
        "b1": 0.1 * jax.random.normal(ks[1], (32,), f32),
        "g1": 1.0 + 0.1 * jax.random.normal(ks[2], (32,), f32),
        "be1": 0.1 * jax.random.normal(ks[3], (32,), f32),
        # conv2: Conv2d(32, 32, 4)
        "w2": 0.05 * jax.random.normal(ks[4], (32, 32, 4, 4), f32),
        "b2": 0.1 * jax.random.normal(ks[5], (32,), f32),
        "g2": 1.0 + 0.1 * jax.random.normal(ks[6], (32,), f32),
        "be2": 0.1 * jax.random.normal(ks[7], (32,), f32),
        # fc1: Linear(800, 256) — PyTorch weight layout (out, in)
        "fw1": 0.03 * jax.random.normal(ks[8], (256, 800), f32),
        "fb1": 0.1 * jax.random.normal(ks[9], (256,), f32),
        # fc2: Linear(256, 10)
        "fw2": 0.05 * jax.random.normal(ks[10], (10, 256), f32),
        "fb2": 0.1 * jax.random.normal(ks[11], (10,), f32),
    }


if __name__ == "__main__":
    key = jax.random.PRNGKey(0)
    k_x, k_p = jax.random.split(key)
    # Input must be 3x32x32 so the flatten yields 800 features (fc1 in-dim).
    x = jax.random.normal(k_x, (2, 3, 32, 32), jnp.float32)
    params = init_params(k_p)
    prep = prepare_params(params)          # weight layout prep outside the jit

    out = jax.jit(cnn1_forward)(x, prep)
    out = jax.block_until_ready(out)
    assert out.shape == (2, 10) and out.dtype == jnp.float32
    print("KERNEL_OK")
</pallas_src>

<mosaic_0001>
module attributes {stable_mosaic.version = 11 : i64} {
  func.func @_conv_bn_relu_pool_kernel(%arg0: memref<48x2176xbf16, #tpu.memory_space<vmem>>, %arg1: memref<32x48xbf16, #tpu.memory_space<vmem>>, %arg2: memref<32x1xf32, #tpu.memory_space<vmem>>, %arg3: memref<32x1xf32, #tpu.memory_space<vmem>>, %arg4: memref<32x512xbf16, #tpu.memory_space<vmem>>) attributes {dimension_semantics = [], scalar_prefetch = 0 : i64, scratch_operands = 0 : i64, tpu.core_type = #tpu.core_type<tc>} {
    %c0 = arith.constant 0 : index
    %c0_0 = arith.constant 0 : index
    %0 = vector.load %arg1[%c0, %c0_0] : memref<32x48xbf16, #tpu.memory_space<vmem>>, vector<32x48xbf16>
    %c0_1 = arith.constant 0 : index
    %c0_2 = arith.constant 0 : index
    %1 = vector.load %arg0[%c0_1, %c0_2] : memref<48x2176xbf16, #tpu.memory_space<vmem>>, vector<48x2176xbf16>
    %cst = arith.constant dense<0.000000e+00> : vector<32x2176xf32>
    %2 = tpu.matmul %0, %1, %cst {dimension_numbers = #tpu.dot_dimension_numbers<[1], [0], [0], [1], [0, 0, 1, 1], [], []>} : vector<32x48xbf16>, vector<48x2176xbf16>, vector<32x2176xf32> -> vector<32x2176xf32>
    %cst_3 = arith.constant dense<0.000000e+00> : vector<32xf32>
    %3 = vector.multi_reduction <add>, %2, %cst_3 [1] : vector<32x2176xf32> to vector<32xf32>
    %4 = vector.shape_cast %3 : vector<32xf32> to vector<32x1xf32>
    %5 = arith.mulf %2, %2 : vector<32x2176xf32>
    %cst_4 = arith.constant dense<0.000000e+00> : vector<32xf32>
    %6 = vector.multi_reduction <add>, %5, %cst_4 [1] : vector<32x2176xf32> to vector<32xf32>
    %7 = vector.shape_cast %6 : vector<32xf32> to vector<32x1xf32>
    %cst_5 = arith.constant 5.94530313E-4 : f32
    %8 = vector.broadcast %cst_5 : f32 to vector<32x1xf32>
    %9 = arith.mulf %4, %8 : vector<32x1xf32>
    %cst_6 = arith.constant 5.94530313E-4 : f32
    %10 = vector.broadcast %cst_6 : f32 to vector<32x1xf32>
    %11 = arith.mulf %7, %10 : vector<32x1xf32>
    %12 = arith.mulf %9, %9 : vector<32x1xf32>
    %13 = arith.subf %11, %12 : vector<32x1xf32>
    %c0_7 = arith.constant 0 : index
    %c0_8 = arith.constant 0 : index
    %14 = vector.load %arg2[%c0_7, %c0_8] : memref<32x1xf32, #tpu.memory_space<vmem>>, vector<32x1xf32>
    %cst_9 = arith.constant 9.99999974E-6 : f32
    %15 = vector.broadcast %cst_9 : f32 to vector<32x1xf32>
    %16 = arith.addf %13, %15 : vector<32x1xf32>
    %17 = math.rsqrt %16 : vector<32x1xf32>
    %18 = arith.mulf %14, %17 : vector<32x1xf32>
    %c0_10 = arith.constant 0 : index
    %c0_11 = arith.constant 0 : index
    %19 = vector.load %arg3[%c0_10, %c0_11] : memref<32x1xf32, #tpu.memory_space<vmem>>, vector<32x1xf32>
    %20 = arith.mulf %9, %18 : vector<32x1xf32>
    %21 = arith.subf %19, %20 : vector<32x1xf32>
    %22 = vector.extract_strided_slice %2 {offsets = [0, 0], sizes = [32, 2048], strides = [1, 1]} : vector<32x2176xf32> to vector<32x2048xf32>
    %23 = vector.broadcast %18 : vector<32x1xf32> to vector<32x2048xf32>
    %24 = arith.mulf %22, %23 : vector<32x2048xf32>
    %25 = vector.broadcast %21 : vector<32x1xf32> to vector<32x2048xf32>
    %26 = arith.addf %24, %25 : vector<32x2048xf32>
    %cst_12 = arith.constant 0.000000e+00 : f32
    %27 = vector.broadcast %cst_12 : f32 to vector<32x2048xf32>
    %28 = arith.maximumf %26, %27 : vector<32x2048xf32>
    %29 = vector.extract_strided_slice %28 {offsets = [0, 0], sizes = [32, 512], strides = [1, 1]} : vector<32x2048xf32> to vector<32x512xf32>
    %30 = vector.extract_strided_slice %28 {offsets = [0, 512], sizes = [32, 512], strides = [1, 1]} : vector<32x2048xf32> to vector<32x512xf32>
    %31 = arith.maximumf %29, %30 : vector<32x512xf32>
    %32 = vector.extract_strided_slice %28 {offsets = [0, 1024], sizes = [32, 512], strides = [1, 1]} : vector<32x2048xf32> to vector<32x512xf32>
    %33 = vector.extract_strided_slice %28 {offsets = [0, 1536], sizes = [32, 512], strides = [1, 1]} : vector<32x2048xf32> to vector<32x512xf32>
    %34 = arith.maximumf %32, %33 : vector<32x512xf32>
    %35 = arith.maximumf %31, %34 : vector<32x512xf32>
    %36 = arith.truncf %35 : vector<32x512xf32> to vector<32x512xbf16>
    %c0_13 = arith.constant 0 : index
    %c0_14 = arith.constant 0 : index
    %37 = vector.load %arg4[%c0_13, %c0_14] : memref<32x512xbf16, #tpu.memory_space<vmem>>, vector<32x512xbf16>
    tpu.vector_store %arg4[%c0_13, %c0_14], %36 {strides = array<i32>} : memref<32x512xbf16, #tpu.memory_space<vmem>>, vector<32x512xbf16>,
    return
  }
}

module attributes {stable_mosaic.version = 11 : i64} {
  func.func @_conv_bn_relu_pool_kernel(%arg0: memref<512x640xbf16, #tpu.memory_space<vmem>>, %arg1: memref<32x512xbf16, #tpu.memory_space<vmem>>, %arg2: memref<32x1xf32, #tpu.memory_space<vmem>>, %arg3: memref<32x1xf32, #tpu.memory_space<vmem>>, %arg4: memref<32x128xbf16, #tpu.memory_space<vmem>>) attributes {dimension_semantics = [], scalar_prefetch = 0 : i64, scratch_operands = 0 : i64, tpu.core_type = #tpu.core_type<tc>} {
    %c0 = arith.constant 0 : index
    %c0_0 = arith.constant 0 : index
    %0 = vector.load %arg1[%c0, %c0_0] : memref<32x512xbf16, #tpu.memory_space<vmem>>, vector<32x512xbf16>
    %c0_1 = arith.constant 0 : index
    %c0_2 = arith.constant 0 : index
    %1 = vector.load %arg0[%c0_1, %c0_2] : memref<512x640xbf16, #tpu.memory_space<vmem>>, vector<512x640xbf16>
    %cst = arith.constant dense<0.000000e+00> : vector<32x640xf32>
    %2 = tpu.matmul %0, %1, %cst {dimension_numbers = #tpu.dot_dimension_numbers<[1], [0], [0], [1], [0, 0, 1, 1], [], []>} : vector<32x512xbf16>, vector<512x640xbf16>, vector<32x640xf32> -> vector<32x640xf32>
    %cst_3 = arith.constant dense<0.000000e+00> : vector<32xf32>
    %3 = vector.multi_reduction <add>, %2, %cst_3 [1] : vector<32x640xf32> to vector<32xf32>
    %4 = vector.shape_cast %3 : vector<32xf32> to vector<32x1xf32>
    %5 = arith.mulf %2, %2 : vector<32x640xf32>
    %cst_4 = arith.constant dense<0.000000e+00> : vector<32xf32>
    %6 = vector.multi_reduction <add>, %5, %cst_4 [1] : vector<32x640xf32> to vector<32xf32>
    %7 = vector.shape_cast %6 : vector<32xf32> to vector<32x1xf32>
    %cst_5 = arith.constant 0.00413223123 : f32
    %8 = vector.broadcast %cst_5 : f32 to vector<32x1xf32>
    %9 = arith.mulf %4, %8 : vector<32x1xf32>
    %cst_6 = arith.constant 0.00413223123 : f32
    %10 = vector.broadcast %cst_6 : f32 to vector<32x1xf32>
    %11 = arith.mulf %7, %10 : vector<32x1xf32>
    %12 = arith.mulf %9, %9 : vector<32x1xf32>
    %13 = arith.subf %11, %12 : vector<32x1xf32>
    %c0_7 = arith.constant 0 : index
    %c0_8 = arith.constant 0 : index
    %14 = vector.load %arg2[%c0_7, %c0_8] : memref<32x1xf32, #tpu.memory_space<vmem>>, vector<32x1xf32>
    %cst_9 = arith.constant 9.99999974E-6 : f32
    %15 = vector.broadcast %cst_9 : f32 to vector<32x1xf32>
    %16 = arith.addf %13, %15 : vector<32x1xf32>
    %17 = math.rsqrt %16 : vector<32x1xf32>
    %18 = arith.mulf %14, %17 : vector<32x1xf32>
    %c0_10 = arith.constant 0 : index
    %c0_11 = arith.constant 0 : index
    %19 = vector.load %arg3[%c0_10, %c0_11] : memref<32x1xf32, #tpu.memory_space<vmem>>, vector<32x1xf32>
    %20 = arith.mulf %9, %18 : vector<32x1xf32>
    %21 = arith.subf %19, %20 : vector<32x1xf32>
    %22 = vector.extract_strided_slice %2 {offsets = [0, 0], sizes = [32, 512], strides = [1, 1]} : vector<32x640xf32> to vector<32x512xf32>
    %23 = vector.broadcast %18 : vector<32x1xf32> to vector<32x512xf32>
    %24 = arith.mulf %22, %23 : vector<32x512xf32>
    %25 = vector.broadcast %21 : vector<32x1xf32> to vector<32x512xf32>
    %26 = arith.addf %24, %25 : vector<32x512xf32>
    %cst_12 = arith.constant 0.000000e+00 : f32
    %27 = vector.broadcast %cst_12 : f32 to vector<32x512xf32>
    %28 = arith.maximumf %26, %27 : vector<32x512xf32>
    %29 = vector.extract_strided_slice %28 {offsets = [0, 0], sizes = [32, 128], strides = [1, 1]} : vector<32x512xf32> to vector<32x128xf32>
    %30 = vector.extract_strided_slice %28 {offsets = [0, 128], sizes = [32, 128], strides = [1, 1]} : vector<32x512xf32> to vector<32x128xf32>
    %31 = arith.maximumf %29, %30 : vector<32x128xf32>
    %32 = vector.extract_strided_slice %28 {offsets = [0, 256], sizes = [32, 128], strides = [1, 1]} : vector<32x512xf32> to vector<32x128xf32>
    %33 = vector.extract_strided_slice %28 {offsets = [0, 384], sizes = [32, 128], strides = [1, 1]} : vector<32x512xf32> to vector<32x128xf32>
    %34 = arith.maximumf %32, %33 : vector<32x128xf32>
    %35 = arith.maximumf %31, %34 : vector<32x128xf32>
    %36 = arith.truncf %35 : vector<32x128xf32> to vector<32x128xbf16>
    %c0_13 = arith.constant 0 : index
    %c0_14 = arith.constant 0 : index
    %37 = vector.load %arg4[%c0_13, %c0_14] : memref<32x128xbf16, #tpu.memory_space<vmem>>, vector<32x128xbf16>
    tpu.vector_store %arg4[%c0_13, %c0_14], %36 {strides = array<i32>} : memref<32x128xbf16, #tpu.memory_space<vmem>>, vector<32x128xbf16>,
    return
  }
}

module attributes {stable_mosaic.version = 11 : i64} {
  func.func @_mlp_kernel(%arg0: memref<2x800xbf16, #tpu.memory_space<vmem>>, %arg1: memref<800x256xbf16, #tpu.memory_space<vmem>>, %arg2: memref<1x256xf32, #tpu.memory_space<vmem>>, %arg3: memref<256x128xbf16, #tpu.memory_space<vmem>>, %arg4: memref<1x128xf32, #tpu.memory_space<vmem>>, %arg5: memref<2x128xf32, #tpu.memory_space<vmem>>) attributes {dimension_semantics = [], scalar_prefetch = 0 : i64, scratch_operands = 0 : i64, tpu.core_type = #tpu.core_type<tc>} {
    %c0 = arith.constant 0 : index
    %c0_0 = arith.constant 0 : index
    %0 = vector.load %arg0[%c0, %c0_0] : memref<2x800xbf16, #tpu.memory_space<vmem>>, vector<2x800xbf16>
    %c0_1 = arith.constant 0 : index
    %c0_2 = arith.constant 0 : index
    %1 = vector.load %arg1[%c0_1, %c0_2] : memref<800x256xbf16, #tpu.memory_space<vmem>>, vector<800x256xbf16>
    %cst = arith.constant dense<0.000000e+00> : vector<2x256xf32>
    %2 = tpu.matmul %0, %1, %cst {dimension_numbers = #tpu.dot_dimension_numbers<[1], [0], [0], [1], [0, 0, 1, 1], [], []>} : vector<2x800xbf16>, vector<800x256xbf16>, vector<2x256xf32> -> vector<2x256xf32>
    %c0_3 = arith.constant 0 : index
    %c0_4 = arith.constant 0 : index
    %3 = vector.load %arg2[%c0_3, %c0_4] : memref<1x256xf32, #tpu.memory_space<vmem>>, vector<1x256xf32>
    %4 = vector.broadcast %3 : vector<1x256xf32> to vector<2x256xf32>
    %5 = arith.addf %2, %4 : vector<2x256xf32>
    %cst_5 = arith.constant 0.000000e+00 : f32
    %6 = vector.broadcast %cst_5 : f32 to vector<2x256xf32>
    %7 = arith.maximumf %5, %6 : vector<2x256xf32>
    %8 = arith.truncf %7 : vector<2x256xf32> to vector<2x256xbf16>
    %c0_6 = arith.constant 0 : index
    %c0_7 = arith.constant 0 : index
    %9 = vector.load %arg3[%c0_6, %c0_7] : memref<256x128xbf16, #tpu.memory_space<vmem>>, vector<256x128xbf16>
    %cst_8 = arith.constant dense<0.000000e+00> : vector<2x128xf32>
    %10 = tpu.matmul %8, %9, %cst_8 {dimension_numbers = #tpu.dot_dimension_numbers<[1], [0], [0], [1], [0, 0, 1, 1], [], []>} : vector<2x256xbf16>, vector<256x128xbf16>, vector<2x128xf32> -> vector<2x128xf32>
    %c0_9 = arith.constant 0 : index
    %c0_10 = arith.constant 0 : index
    %11 = vector.load %arg4[%c0_9, %c0_10] : memref<1x128xf32, #tpu.memory_space<vmem>>, vector<1x128xf32>
    %12 = vector.broadcast %11 : vector<1x128xf32> to vector<2x128xf32>
    %13 = arith.addf %10, %12 : vector<2x128xf32>
    %c0_11 = arith.constant 0 : index
    %c0_12 = arith.constant 0 : index
    %14 = vector.load %arg5[%c0_11, %c0_12] : memref<2x128xf32, #tpu.memory_space<vmem>>, vector<2x128xf32>
    tpu.vector_store %arg5[%c0_11, %c0_12], %13 {strides = array<i32>} : memref<2x128xf32, #tpu.memory_space<vmem>>, vector<2x128xf32>,
    return
  }
}

</mosaic_0001>

<llo_original>
// kernel: cnn1_forward.3
$region0: #{cnn1_forward.3}
  #allocation0 [shape = 'u32[]', space=smem, size = 0x4, offset = 0x4, fixed_abs, tag = 'smem constant byte address 0x4 - core index']
  #allocation1 [shape = 'u32[72,128]{1,0:T(1,128)}', space=vmem, size = 0x9000, scoped, tag = 'internal scratch']
  %s0 = inlined_call_operand.vmem [shape: bf16[48,2176], index: 0, kind: input, shape index: {}]
  %s1 = inlined_call_operand.vmem [shape: bf16[32,48], index: 1, kind: input, shape index: {}]
  %s2 = inlined_call_operand.vmem [shape: f32[32,1], index: 2, kind: input, shape index: {}]
  %s3 = inlined_call_operand.vmem [shape: f32[32,1], index: 3, kind: input, shape index: {}]
  %s4 = inlined_call_operand.vmem [shape: bf16[32,512], index: 4, kind: output, shape index: {}]
  %s5 = sld [smem:[#allocation0]]
  $region26: #{cnn1_forward.3} parent=0
    _
  %s7 = ssub.s32 1, %s5
  %s8 = scalar_select 0, %s7, %s5
  // Predicated region
  $region2: #{cnn1_forward.3} parent=0 // pred_check
    _
  $region3: #{cnn1_forward.3} parent=0 // pred_check_branch
    %10 = sbr.rel (0) target = $region5
  $region4: #{cnn1_forward.3} parent=0 // pred_region
    _
  $region5: #{cnn1_forward.3} parent=0 // pred_fallthru
    _
  // Predicated region
  $region6: #{cnn1_forward.3} parent=0 // pred_check
    _
  $region7: #{cnn1_forward.3} parent=0 // pred_check_branch
    %12 = sbr.rel (0) target = $region9
  $region8: #{cnn1_forward.3} parent=0 // pred_region
    _
  $region9: #{cnn1_forward.3} parent=0 // pred_fallthru
    _
  // Predicated region
  $region10: #{cnn1_forward.3} parent=0 // pred_check
    _
  $region11: #{cnn1_forward.3} parent=0 // pred_check_branch
    %14 = sbr.rel (0) target = $region13
  $region12: #{cnn1_forward.3} parent=0 // pred_region
    _
  $region13: #{cnn1_forward.3} parent=0 // pred_fallthru
    _
  // Predicated region
  $region14: #{cnn1_forward.3} parent=0 // pred_check
    _
  $region15: #{cnn1_forward.3} parent=0 // pred_check_branch
    %16 = sbr.rel (0) target = $region17
  $region16: #{cnn1_forward.3} parent=0 // pred_region
    _
  $region17: #{cnn1_forward.3} parent=0 // pred_fallthru
    _
  %v18 = vld [vmem:[%s1] sm:$0xf]
  %v19 = vld [vmem:[%s1 + $0x4] sm:$0xf]
  %v20 = vld [vmem:[%s1 + $0x8] sm:$0xf]
  %v21 = vld [vmem:[%s1 + $0xc] sm:$0xf]
  %v22 = vld [vmem:[%s0] sm:$0xff]
  %v23 = vld [vmem:[%s0 + $0x8] sm:$0xff]
  %v24 = vld [vmem:[%s0 + $0x10] sm:$0xff]
  %v25 = vld [vmem:[%s0 + $0x18] sm:$0xff]
  %v26 = vld [vmem:[%s0 + $0x20] sm:$0xff]
  %v27 = vld [vmem:[%s0 + $0x28] sm:$0xff]
  %v28 = vld [vmem:[%s0 + $0x30] sm:$0xff]
  %v29 = vld [vmem:[%s0 + $0x38] sm:$0xff]
  %v30 = vld [vmem:[%s0 + $0x40] sm:$0xf]
  %v31 = vld [vmem:[%s0 + $0x44] sm:$0xff]
  %v32 = vld [vmem:[%s0 + $0x4c] sm:$0xff]
  %v33 = vld [vmem:[%s0 + $0x54] sm:$0xff]
  %v34 = vld [vmem:[%s0 + $0x5c] sm:$0xff]
  %v35 = vld [vmem:[%s0 + $0x64] sm:$0xff]
  %v36 = vld [vmem:[%s0 + $0x6c] sm:$0xff]
  %v37 = vld [vmem:[%s0 + $0x74] sm:$0xff]
  %v38 = vld [vmem:[%s0 + $0x7c] sm:$0xff]
  %v39 = vld [vmem:[%s0 + $0x84] sm:$0xf]
  %v40 = vld [vmem:[%s0 + $0x88] sm:$0xff]
  %v41 = vld [vmem:[%s0 + $0x90] sm:$0xff]
  %v42 = vld [vmem:[%s0 + $0x98] sm:$0xff]
  %v43 = vld [vmem:[%s0 + $0xa0] sm:$0xff]
  %v44 = vld [vmem:[%s0 + $0xa8] sm:$0xff]
  %v45 = vld [vmem:[%s0 + $0xb0] sm:$0xff]
  %v46 = vld [vmem:[%s0 + $0xb8] sm:$0xff]
  %v47 = vld [vmem:[%s0 + $0xc0] sm:$0xff]
  %v48 = vld [vmem:[%s0 + $0xc8] sm:$0xf]
  %v49 = vld [vmem:[%s0 + $0xcc] sm:$0xff]
  %v50 = vld [vmem:[%s0 + $0xd4] sm:$0xff]
  %v51 = vld [vmem:[%s0 + $0xdc] sm:$0xff]
  %v52 = vld [vmem:[%s0 + $0xe4] sm:$0xff]
  %v53 = vld [vmem:[%s0 + $0xec] sm:$0xff]
  %v54 = vld [vmem:[%s0 + $0xf4] sm:$0xff]
  %v55 = vld [vmem:[%s0 + $0xfc] sm:$0xff]
  %v56 = vld [vmem:[%s0 + $0x104] sm:$0xff]
  %v57 = vld [vmem:[%s0 + $0x10c] sm:$0xf]
  %v58 = vld [vmem:[%s0 + $0x110] sm:$0xff]
  %v59 = vld [vmem:[%s0 + $0x118] sm:$0xff]
  %v60 = vld [vmem:[%s0 + $0x120] sm:$0xff]
  %v61 = vld [vmem:[%s0 + $0x128] sm:$0xff]
  %v62 = vld [vmem:[%s0 + $0x130] sm:$0xff]
  %v63 = vld [vmem:[%s0 + $0x138] sm:$0xff]
  %v64 = vld [vmem:[%s0 + $0x140] sm:$0xff]
  %v65 = vld [vmem:[%s0 + $0x148] sm:$0xff]
  %v66 = vld [vmem:[%s0 + $0x150] sm:$0xf]
  %v67 = vld [vmem:[%s0 + $0x154] sm:$0xff]
  %v68 = vld [vmem:[%s0 + $0x15c] sm:$0xff]
  %v69 = vld [vmem:[%s0 + $0x164] sm:$0xff]
  %v70 = vld [vmem:[%s0 + $0x16c] sm:$0xff]
  %v71 = vld [vmem:[%s0 + $0x174] sm:$0xff]
  %v72 = vld [vmem:[%s0 + $0x17c] sm:$0xff]
  %v73 = vld [vmem:[%s0 + $0x184] sm:$0xff]
  %v74 = vld [vmem:[%s0 + $0x18c] sm:$0xff]
  %v75 = vld [vmem:[%s0 + $0x194] sm:$0xf]
  %v80 = vunpack.c.l.b16 %v18
  %v81 = vunpack.c.l.b16 %v19
  %v82 = vunpack.c.l.b16 %v20
  %v83 = vunpack.c.l.b16 %v21
  %v84 = vpack.c.b16 %v81, %v80
  %v85 = vpack.c.b16 %v83, %v82
  %v140 = vunpack.c.l.b16 %v22
  %v141 = vunpack.c.h.b16 %v22
  %v142 = vunpack.c.l.b16 %v23
  %v143 = vunpack.c.h.b16 %v23
  %v144 = vunpack.c.l.b16 %v24
  %v145 = vunpack.c.h.b16 %v24
  %v146 = vunpack.c.l.b16 %v25
  %v147 = vunpack.c.h.b16 %v25
  %v148 = vunpack.c.l.b16 %v26
  %v149 = vunpack.c.h.b16 %v26
  %v150 = vunpack.c.l.b16 %v27
  %v151 = vunpack.c.h.b16 %v27
  %v152 = vunpack.c.l.b16 %v28
  %v153 = vunpack.c.h.b16 %v28
  %v154 = vunpack.c.l.b16 %v29
  %v155 = vunpack.c.h.b16 %v29
  %v156 = vunpack.c.l.b16 %v30
  %v157 = vunpack.c.l.b16 %v31
  %v158 = vunpack.c.h.b16 %v31
  %v159 = vunpack.c.l.b16 %v32
  %v160 = vunpack.c.h.b16 %v32
  %v161 = vunpack.c.l.b16 %v33
  %v162 = vunpack.c.h.b16 %v33
  %v163 = vunpack.c.l.b16 %v34
  %v164 = vunpack.c.h.b16 %v34
  %v165 = vunpack.c.l.b16 %v35
  %v166 = vunpack.c.h.b16 %v35
  %v167 = vunpack.c.l.b16 %v36
  %v168 = vunpack.c.h.b16 %v36
  %v169 = vunpack.c.l.b16 %v37
  %v170 = vunpack.c.h.b16 %v37
  %v171 = vunpack.c.l.b16 %v38
  %v172 = vunpack.c.h.b16 %v38
  %v173 = vunpack.c.l.b16 %v39
  %v174 = vunpack.c.l.b16 %v40
  %v175 = vunpack.c.h.b16 %v40
  %v176 = vunpack.c.l.b16 %v41
  %v177 = vunpack.c.h.b16 %v41
  %v178 = vunpack.c.l.b16 %v42
  %v179 = vunpack.c.h.b16 %v42
  %v180 = vunpack.c.l.b16 %v43
  %v181 = vunpack.c.h.b16 %v43
  %v182 = vunpack.c.l.b16 %v44
  %v183 = vunpack.c.h.b16 %v44
  %v184 = vunpack.c.l.b16 %v45
  %v185 = vunpack.c.h.b16 %v45
  %v186 = vunpack.c.l.b16 %v46
  %v187 = vunpack.c.h.b16 %v46
  %v188 = vunpack.c.l.b16 %v47
  %v189 = vunpack.c.h.b16 %v47
  %v190 = vunpack.c.l.b16 %v48
  %v191 = vunpack.c.l.b16 %v49
  %v192 = vunpack.c.h.b16 %v49
  %v193 = vunpack.c.l.b16 %v50
  %v194 = vunpack.c.h.b16 %v50
  %v195 = vunpack.c.l.b16 %v51
  %v196 = vunpack.c.h.b16 %v51
  %v197 = vunpack.c.l.b16 %v52
  %v198 = vunpack.c.h.b16 %v52
  %v199 = vunpack.c.l.b16 %v53
  %v200 = vunpack.c.h.b16 %v53
  %v201 = vunpack.c.l.b16 %v54
  %v202 = vunpack.c.h.b16 %v54
  %v203 = vunpack.c.l.b16 %v55
  %v204 = vunpack.c.h.b16 %v55
  %v205 = vunpack.c.l.b16 %v56
  %v206 = vunpack.c.h.b16 %v56
  %v207 = vunpack.c.l.b16 %v57
  %v208 = vunpack.c.l.b16 %v58
  %v209 = vunpack.c.h.b16 %v58
  %v210 = vunpack.c.l.b16 %v59
  %v211 = vunpack.c.h.b16 %v59
  %v212 = vunpack.c.l.b16 %v60
  %v213 = vunpack.c.h.b16 %v60
  %v214 = vunpack.c.l.b16 %v61
  %v215 = vunpack.c.h.b16 %v61
  %v216 = vunpack.c.l.b16 %v62
  %v217 = vunpack.c.h.b16 %v62
  %v218 = vunpack.c.l.b16 %v63
  %v219 = vunpack.c.h.b16 %v63
  %v220 = vunpack.c.l.b16 %v64
  %v221 = vunpack.c.h.b16 %v64
  %v222 = vunpack.c.l.b16 %v65
  %v223 = vunpack.c.h.b16 %v65
  %v224 = vunpack.c.l.b16 %v66
  %v225 = vunpack.c.l.b16 %v67
  %v226 = vunpack.c.h.b16 %v67
  %v227 = vunpack.c.l.b16 %v68
  %v228 = vunpack.c.h.b16 %v68
  %v229 = vunpack.c.l.b16 %v69
  %v230 = vunpack.c.h.b16 %v69
  %v231 = vunpack.c.l.b16 %v70
  %v232 = vunpack.c.h.b16 %v70
  %v233 = vunpack.c.l.b16 %v71
  %v234 = vunpack.c.h.b16 %v71
  %v235 = vunpack.c.l.b16 %v72
  %v236 = vunpack.c.h.b16 %v72
  %v237 = vunpack.c.l.b16 %v73
  %v238 = vunpack.c.h.b16 %v73
  %v239 = vunpack.c.l.b16 %v74
  %v240 = vunpack.c.h.b16 %v74
  %v241 = vunpack.c.l.b16 %v75
  %v242 = vpack.c.b16 %v157, %v140
  %v243 = vpack.c.b16 %v158, %v141
  %v244 = vpack.c.b16 %v159, %v142
  %v245 = vpack.c.b16 %v160, %v143
  %v246 = vpack.c.b16 %v161, %v144
  %v247 = vpack.c.b16 %v162, %v145
  %v248 = vpack.c.b16 %v163, %v146
  %v249 = vpack.c.b16 %v164, %v147
  %v250 = vpack.c.b16 %v165, %v148
  %v251 = vpack.c.b16 %v166, %v149
  %v252 = vpack.c.b16 %v167, %v150
  %v253 = vpack.c.b16 %v168, %v151
  %v254 = vpack.c.b16 %v169, %v152
  %v255 = vpack.c.b16 %v170, %v153
  %v256 = vpack.c.b16 %v171, %v154
  %v257 = vpack.c.b16 %v172, %v155
  %v258 = vpack.c.b16 %v173, %v156
  %v259 = vpack.c.b16 %v191, %v174
  %v260 = vpack.c.b16 %v192, %v175
  %v261 = vpack.c.b16 %v193, %v176
  %v262 = vpack.c.b16 %v194, %v177
  %v263 = vpack.c.b16 %v195, %v178
  %v264 = vpack.c.b16 %v196, %v179
  %v265 = vpack.c.b16 %v197, %v180
  %v266 = vpack.c.b16 %v198, %v181
  %v267 = vpack.c.b16 %v199, %v182
  %v268 = vpack.c.b16 %v200, %v183
  %v269 = vpack.c.b16 %v201, %v184
  %v270 = vpack.c.b16 %v202, %v185
  %v271 = vpack.c.b16 %v203, %v186
  %v272 = vpack.c.b16 %v204, %v187
  %v273 = vpack.c.b16 %v205, %v188
  %v274 = vpack.c.b16 %v206, %v189
  %v275 = vpack.c.b16 %v207, %v190
  %v276 = vpack.c.b16 %v225, %v208
  %v277 = vpack.c.b16 %v226, %v209
  %v278 = vpack.c.b16 %v227, %v210
  %v279 = vpack.c.b16 %v228, %v211
  %v280 = vpack.c.b16 %v229, %v212
  %v281 = vpack.c.b16 %v230, %v213
  %v282 = vpack.c.b16 %v231, %v214
  %v283 = vpack.c.b16 %v232, %v215
  %v284 = vpack.c.b16 %v233, %v216
  %v285 = vpack.c.b16 %v234, %v217
  %v286 = vpack.c.b16 %v235, %v218
  %v287 = vpack.c.b16 %v236, %v219
  %v288 = vpack.c.b16 %v237, %v220
  %v289 = vpack.c.b16 %v238, %v221
  %v290 = vpack.c.b16 %v239, %v222
  %v291 = vpack.c.b16 %v240, %v223
  %v292 = vpack.c.b16 %v241, %v224
  %vm344 = vcmask 392192
  %v346 = vsel %vm344, %v84, 0
  %v349 = vsel %vm344, %v85, 0
  %351 = vmatpush.bf16.msra.mxu0 0
  %352 = vmatpush.bf16.msra.mxu0 0
  %353 = vmatpush.bf16.msra.mxu0 0
  %354 = vmatpush.bf16.msra.mxu0 0
  %355 = vmatpush.bf16.msra.mxu0 0
  %356 = vmatpush.bf16.msra.mxu0 %v276
  %357 = vmatpush.bf16.msra.mxu0 %v259
  %358 = vmatpush.bf16.msra.mxu0 %v242
  %359 = vmatmul.bf16.gmra.mxu0 %v346
  %v360 = vpop.f32.mrf.mxu0
  %v361 = vadd.f32 0.0, %v360
  %v362 = vpop.f32.mrf.mxu0
  %v363 = vadd.f32 0.0, %v362
  %364 = vmatmul.bf16.gmra.mxu0 %v349
  %v365 = vpop.f32.mrf.mxu0
  %v366 = vadd.f32 0.0, %v365
  %v367 = vpop.f32.mrf.mxu0
  %v368 = vadd.f32 0.0, %v367
  %369 = vdwg.mxu0
  %370 = vmatpush.bf16.msra.mxu0 0
  %371 = vmatpush.bf16.msra.mxu0 0
  %372 = vmatpush.bf16.msra.mxu0 0
  %373 = vmatpush.bf16.msra.mxu0 0
  %374 = vmatpush.bf16.msra.mxu0 0
  %375 = vmatpush.bf16.msra.mxu0 %v277
  %376 = vmatpush.bf16.msra.mxu0 %v260
  %377 = vmatpush.bf16.msra.mxu0 %v243
  %378 = vmatmul.bf16.gmra.mxu0 %v346
  %v379 = vpop.f32.mrf.mxu0
  %v380 = vadd.f32 0.0, %v379
  %v381 = vpop.f32.mrf.mxu0
  %v382 = vadd.f32 0.0, %v381
  %383 = vmatmul.bf16.gmra.mxu0 %v349
  %v384 = vpop.f32.mrf.mxu0
  %v385 = vadd.f32 0.0, %v384
  %v386 = vpop.f32.mrf.mxu0
  %v387 = vadd.f32 0.0, %v386
  %388 = vdwg.mxu0
  %389 = vmatpush.bf16.msra.mxu0 0
  %390 = vmatpush.bf16.msra.mxu0 0
  %391 = vmatpush.bf16.msra.mxu0 0
  %392 = vmatpush.bf16.msra.mxu0 0
  %393 = vmatpush.bf16.msra.mxu0 0
  %394 = vmatpush.bf16.msra.mxu0 %v278
  %395 = vmatpush.bf16.msra.mxu0 %v261
  %396 = vmatpush.bf16.msra.mxu0 %v244
  %397 = vmatmul.bf16.gmra.mxu0 %v346
  %v398 = vpop.f32.mrf.mxu0
  %v399 = vadd.f32 0.0, %v398
  %v400 = vpop.f32.mrf.mxu0
  %v401 = vadd.f32 0.0, %v400
  %402 = vmatmul.bf16.gmra.mxu0 %v349
  %v403 = vpop.f32.mrf.mxu0
  %v404 = vadd.f32 0.0, %v403
  %v405 = vpop.f32.mrf.mxu0
  %v406 = vadd.f32 0.0, %v405
  %407 = vdwg.mxu0
  %408 = vmatpush.bf16.msra.mxu0 0
  %409 = vmatpush.bf16.msra.mxu0 0
  %410 = vmatpush.bf16.msra.mxu0 0
  %411 = vmatpush.bf16.msra.mxu0 0
  %412 = vmatpush.bf16.msra.mxu0 0
  %413 = vmatpush.bf16.msra.mxu0 %v279
  %414 = vmatpush.bf16.msra.mxu0 %v262
  %415 = vmatpush.bf16.msra.mxu0 %v245
  %416 = vmatmul.bf16.gmra.mxu0 %v346
  %v417 = vpop.f32.mrf.mxu0
  %v418 = vadd.f32 0.0, %v417
  %v419 = vpop.f32.mrf.mxu0
  %v420 = vadd.f32 0.0, %v419
  %421 = vmatmul.bf16.gmra.mxu0 %v349
  %v422 = vpop.f32.mrf.mxu0
  %v423 = vadd.f32 0.0, %v422
  %v424 = vpop.f32.mrf.mxu0
  %v425 = vadd.f32 0.0, %v424
  %426 = vdwg.mxu0
  %427 = vmatpush.bf16.msra.mxu0 0
  %428 = vmatpush.bf16.msra.mxu0 0
  %429 = vmatpush.bf16.msra.mxu0 0
  %430 = vmatpush.bf16.msra.mxu0 0
  %431 = vmatpush.bf16.msra.mxu0 0
  %432 = vmatpush.bf16.msra.mxu0 %v280
  %433 = vmatpush.bf16.msra.mxu0 %v263
  %434 = vmatpush.bf16.msra.mxu0 %v246
  %435 = vmatmul.bf16.gmra.mxu0 %v346
  %v436 = vpop.f32.mrf.mxu0
  %v437 = vadd.f32 0.0, %v436
  %v438 = vpop.f32.mrf.mxu0
  %v439 = vadd.f32 0.0, %v438
  %440 = vmatmul.bf16.gmra.mxu0 %v349
  %v441 = vpop.f32.mrf.mxu0
  %v442 = vadd.f32 0.0, %v441
  %v443 = vpop.f32.mrf.mxu0
  %v444 = vadd.f32 0.0, %v443
  %445 = vdwg.mxu0
  %446 = vmatpush.bf16.msra.mxu0 0
  %447 = vmatpush.bf16.msra.mxu0 0
  %448 = vmatpush.bf16.msra.mxu0 0
  %449 = vmatpush.bf16.msra.mxu0 0
  %450 = vmatpush.bf16.msra.mxu0 0
  %451 = vmatpush.bf16.msra.mxu0 %v281
  %452 = vmatpush.bf16.msra.mxu0 %v264
  %453 = vmatpush.bf16.msra.mxu0 %v247
  %454 = vmatmul.bf16.gmra.mxu0 %v346
  %v455 = vpop.f32.mrf.mxu0
  %v456 = vadd.f32 0.0, %v455
  %v457 = vpop.f32.mrf.mxu0
  %v458 = vadd.f32 0.0, %v457
  %459 = vmatmul.bf16.gmra.mxu0 %v349
  %v460 = vpop.f32.mrf.mxu0
  %v461 = vadd.f32 0.0, %v460
  %v462 = vpop.f32.mrf.mxu0
  %v463 = vadd.f32 0.0, %v462
  %464 = vdwg.mxu0
  %465 = vmatpush.bf16.msra.mxu0 0
  %466 = vmatpush.bf16.msra.mxu0 0
  %467 = vmatpush.bf16.msra.mxu0 0
  %468 = vmatpush.bf16.msra.mxu0 0
  %469 = vmatpush.bf16.msra.mxu0 0
  %470 = vmatpush.bf16.msra.mxu0 %v282
  %471 = vmatpush.bf16.msra.mxu0 %v265
  %472 = vmatpush.bf16.msra.mxu0 %v248
  %473 = vmatmul.bf16.gmra.mxu0 %v346
  %v474 = vpop.f32.mrf.mxu0
  %v475 = vadd.f32 0.0, %v474
  %v476 = vpop.f32.mrf.mxu0
  %v477 = vadd.f32 0.0, %v476
  %478 = vmatmul.bf16.gmra.mxu0 %v349
  %v479 = vpop.f32.mrf.mxu0
  %v480 = vadd.f32 0.0, %v479
  %v481 = vpop.f32.mrf.mxu0
  %v482 = vadd.f32 0.0, %v481
  %483 = vdwg.mxu0
  %484 = vmatpush.bf16.msra.mxu0 0
  %485 = vmatpush.bf16.msra.mxu0 0
  %486 = vmatpush.bf16.msra.mxu0 0
  %487 = vmatpush.bf16.msra.mxu0 0
  %488 = vmatpush.bf16.msra.mxu0 0
  %489 = vmatpush.bf16.msra.mxu0 %v283
  %490 = vmatpush.bf16.msra.mxu0 %v266
  %491 = vmatpush.bf16.msra.mxu0 %v249
  %492 = vmatmul.bf16.gmra.mxu0 %v346
  %v493 = vpop.f32.mrf.mxu0
  %v494 = vadd.f32 0.0, %v493
  %v495 = vpop.f32.mrf.mxu0
  %v496 = vadd.f32 0.0, %v495
  %497 = vmatmul.bf16.gmra.mxu0 %v349
  %v498 = vpop.f32.mrf.mxu0
  %v499 = vadd.f32 0.0, %v498
  %v500 = vpop.f32.mrf.mxu0
  %v501 = vadd.f32 0.0, %v500
  %502 = vdwg.mxu0
  %503 = vmatpush.bf16.msra.mxu0 0
  %504 = vmatpush.bf16.msra.mxu0 0
  %505 = vmatpush.bf16.msra.mxu0 0
  %506 = vmatpush.bf16.msra.mxu0 0
  %507 = vmatpush.bf16.msra.mxu0 0
  %508 = vmatpush.bf16.msra.mxu0 %v284
  %509 = vmatpush.bf16.msra.mxu0 %v267
  %510 = vmatpush.bf16.msra.mxu0 %v250
  %511 = vmatmul.bf16.gmra.mxu0 %v346
  %v512 = vpop.f32.mrf.mxu0
  %v513 = vadd.f32 0.0, %v512
  %v514 = vpop.f32.mrf.mxu0
  %v515 = vadd.f32 0.0, %v514
  %516 = vmatmul.bf16.gmra.mxu0 %v349
  %v517 = vpop.f32.mrf.mxu0
  %v518 = vadd.f32 0.0, %v517
  %v519 = vpop.f32.mrf.mxu0
  %v520 = vadd.f32 0.0, %v519
  %521 = vdwg.mxu0
  %522 = vmatpush.bf16.msra.mxu0 0
  %523 = vmatpush.bf16.msra.mxu0 0
  %524 = vmatpush.bf16.msra.mxu0 0
  %525 = vmatpush.bf16.msra.mxu0 0
  %526 = vmatpush.bf16.msra.mxu0 0
  %527 = vmatpush.bf16.msra.mxu0 %v285
  %528 = vmatpush.bf16.msra.mxu0 %v268
  %529 = vmatpush.bf16.msra.mxu0 %v251
  %530 = vmatmul.bf16.gmra.mxu0 %v346
  %v531 = vpop.f32.mrf.mxu0
  %v532 = vadd.f32 0.0, %v531
  %v533 = vpop.f32.mrf.mxu0
  %v534 = vadd.f32 0.0, %v533
  %535 = vmatmul.bf16.gmra.mxu0 %v349
  %v536 = vpop.f32.mrf.mxu0
  %v537 = vadd.f32 0.0, %v536
  %v538 = vpop.f32.mrf.mxu0
  %v539 = vadd.f32 0.0, %v538
  %540 = vdwg.mxu0
  %541 = vmatpush.bf16.msra.mxu0 0
  %542 = vmatpush.bf16.msra.mxu0 0
  %543 = vmatpush.bf16.msra.mxu0 0
  %544 = vmatpush.bf16.msra.mxu0 0
  %545 = vmatpush.bf16.msra.mxu0 0
  %546 = vmatpush.bf16.msra.mxu0 %v286
  %547 = vmatpush.bf16.msra.mxu0 %v269
  %548 = vmatpush.bf16.msra.mxu0 %v252
  %549 = vmatmul.bf16.gmra.mxu0 %v346
  %v550 = vpop.f32.mrf.mxu0
  %v551 = vadd.f32 0.0, %v550
  %v552 = vpop.f32.mrf.mxu0
  %v553 = vadd.f32 0.0, %v552
  %554 = vmatmul.bf16.gmra.mxu0 %v349
  %v555 = vpop.f32.mrf.mxu0
  %v556 = vadd.f32 0.0, %v555
  %v557 = vpop.f32.mrf.mxu0
  %v558 = vadd.f32 0.0, %v557
  %559 = vdwg.mxu0
  %560 = vmatpush.bf16.msra.mxu0 0
  %561 = vmatpush.bf16.msra.mxu0 0
  %562 = vmatpush.bf16.msra.mxu0 0
  %563 = vmatpush.bf16.msra.mxu0 0
  %564 = vmatpush.bf16.msra.mxu0 0
  %565 = vmatpush.bf16.msra.mxu0 %v287
  %566 = vmatpush.bf16.msra.mxu0 %v270
  %567 = vmatpush.bf16.msra.mxu0 %v253
  %568 = vmatmul.bf16.gmra.mxu0 %v346
  %v569 = vpop.f32.mrf.mxu0
  %v570 = vadd.f32 0.0, %v569
  %v571 = vpop.f32.mrf.mxu0
  %v572 = vadd.f32 0.0, %v571
  %573 = vmatmul.bf16.gmra.mxu0 %v349
  %v574 = vpop.f32.mrf.mxu0
  %v575 = vadd.f32 0.0, %v574
  %v576 = vpop.f32.mrf.mxu0
  %v577 = vadd.f32 0.0, %v576
  %578 = vdwg.mxu0
  %579 = vmatpush.bf16.msra.mxu0 0
  %580 = vmatpush.bf16.msra.mxu0 0
  %581 = vmatpush.bf16.msra.mxu0 0
  %582 = vmatpush.bf16.msra.mxu0 0
  %583 = vmatpush.bf16.msra.mxu0 0
  %584 = vmatpush.bf16.msra.mxu0 %v288
  %585 = vmatpush.bf16.msra.mxu0 %v271
  %586 = vmatpush.bf16.msra.mxu0 %v254
  %587 = vmatmul.bf16.gmra.mxu0 %v346
  %v588 = vpop.f32.mrf.mxu0
  %v589 = vadd.f32 0.0, %v588
  %v590 = vpop.f32.mrf.mxu0
  %v591 = vadd.f32 0.0, %v590
  %592 = vmatmul.bf16.gmra.mxu0 %v349
  %v593 = vpop.f32.mrf.mxu0
  %v594 = vadd.f32 0.0, %v593
  %v595 = vpop.f32.mrf.mxu0
  %v596 = vadd.f32 0.0, %v595
  %597 = vdwg.mxu0
  %598 = vmatpush.bf16.msra.mxu0 0
  %599 = vmatpush.bf16.msra.mxu0 0
  %600 = vmatpush.bf16.msra.mxu0 0
  %601 = vmatpush.bf16.msra.mxu0 0
  %602 = vmatpush.bf16.msra.mxu0 0
  %603 = vmatpush.bf16.msra.mxu0 %v289
  %604 = vmatpush.bf16.msra.mxu0 %v272
  %605 = vmatpush.bf16.msra.mxu0 %v255
  %606 = vmatmul.bf16.gmra.mxu0 %v346
  %v607 = vpop.f32.mrf.mxu0
  %v608 = vadd.f32 0.0, %v607
  %v609 = vpop.f32.mrf.mxu0
  %v610 = vadd.f32 0.0, %v609
  %611 = vmatmul.bf16.gmra.mxu0 %v349
  %v612 = vpop.f32.mrf.mxu0
  %v613 = vadd.f32 0.0, %v612
  %v614 = vpop.f32.mrf.mxu0
  %v615 = vadd.f32 0.0, %v614
  %616 = vdwg.mxu0
  %617 = vmatpush.bf16.msra.mxu0 0
  %618 = vmatpush.bf16.msra.mxu0 0
  %619 = vmatpush.bf16.msra.mxu0 0
  %620 = vmatpush.bf16.msra.mxu0 0
  %621 = vmatpush.bf16.msra.mxu0 0
  %622 = vmatpush.bf16.msra.mxu0 %v290
  %623 = vmatpush.bf16.msra.mxu0 %v273
  %624 = vmatpush.bf16.msra.mxu0 %v256
  %625 = vmatmul.bf16.gmra.mxu0 %v346
  %v626 = vpop.f32.mrf.mxu0
  %v627 = vadd.f32 0.0, %v626
  %v628 = vpop.f32.mrf.mxu0
  %v629 = vadd.f32 0.0, %v628
  %630 = vmatmul.bf16.gmra.mxu0 %v349
  %v631 = vpop.f32.mrf.mxu0
  %v632 = vadd.f32 0.0, %v631
  %v633 = vpop.f32.mrf.mxu0
  %v634 = vadd.f32 0.0, %v633
  %635 = vdwg.mxu0
  %636 = vmatpush.bf16.msra.mxu0 0
  %637 = vmatpush.bf16.msra.mxu0 0
  %638 = vmatpush.bf16.msra.mxu0 0
  %639 = vmatpush.bf16.msra.mxu0 0
  %640 = vmatpush.bf16.msra.mxu0 0
  %641 = vmatpush.bf16.msra.mxu0 %v291
  %642 = vmatpush.bf16.msra.mxu0 %v274
  %643 = vmatpush.bf16.msra.mxu0 %v257
  %644 = vmatmul.bf16.gmra.mxu0 %v346
  %v645 = vpop.f32.mrf.mxu0
  %v646 = vadd.f32 0.0, %v645
  %v647 = vpop.f32.mrf.mxu0
  %v648 = vadd.f32 0.0, %v647
  %649 = vmatmul.bf16.gmra.mxu0 %v349
  %v650 = vpop.f32.mrf.mxu0
  %v651 = vadd.f32 0.0, %v650
  %v652 = vpop.f32.mrf.mxu0
  %v653 = vadd.f32 0.0, %v652
  %654 = vdwg.mxu0
  %655 = vmatpush.bf16.msra.mxu0 0
  %656 = vmatpush.bf16.msra.mxu0 0
  %657 = vmatpush.bf16.msra.mxu0 0
  %658 = vmatpush.bf16.msra.mxu0 0
  %659 = vmatpush.bf16.msra.mxu0 0
  %660 = vmatpush.bf16.msra.mxu0 %v292
  %661 = vmatpush.bf16.msra.mxu0 %v275
  %662 = vmatpush.bf16.msra.mxu0 %v258
  %663 = vmatmul.bf16.gmra.mxu0 %v346
  %v664 = vpop.f32.mrf.mxu0
  %v665 = vadd.f32 0.0, %v664
  %v666 = vpop.f32.mrf.mxu0
  %v667 = vadd.f32 0.0, %v666
  %668 = vmatmul.bf16.gmra.mxu0 %v349
  %v669 = vpop.f32.mrf.mxu0
  %v670 = vadd.f32 0.0, %v669
  %v671 = vpop.f32.mrf.mxu0
  %v672 = vadd.f32 0.0, %v671
  %673 = vdwg.mxu0
  %v674 = vadd.f32 %v361, %v380
  %v675 = vadd.f32 %v674, %v399
  %v676 = vadd.f32 %v675, %v418
  %v677 = vadd.f32 %v676, %v437
  %v678 = vadd.f32 %v677, %v456
  %v679 = vadd.f32 %v678, %v475
  %v680 = vadd.f32 %v679, %v494
  %v681 = vadd.f32 %v680, %v513
  %v682 = vadd.f32 %v681, %v532
  %v683 = vadd.f32 %v682, %v551
  %v684 = vadd.f32 %v683, %v570
  %v685 = vadd.f32 %v684, %v589
  %v686 = vadd.f32 %v685, %v608
  %v687 = vadd.f32 %v686, %v627
  %v688 = vadd.f32 %v687, %v646
  %v689 = vadd.f32 %v688, %v665
  %690 = vadd.xlane.f32.xlu0 %v689
  %v691 = vpop.xlane.xlu0 %690
  %v692 = vadd.f32 %v363, %v382
  %v693 = vadd.f32 %v692, %v401
  %v694 = vadd.f32 %v693, %v420
  %v695 = vadd.f32 %v694, %v439
  %v696 = vadd.f32 %v695, %v458
  %v697 = vadd.f32 %v696, %v477
  %v698 = vadd.f32 %v697, %v496
  %v699 = vadd.f32 %v698, %v515
  %v700 = vadd.f32 %v699, %v534
  %v701 = vadd.f32 %v700, %v553
  %v702 = vadd.f32 %v701, %v572
  %v703 = vadd.f32 %v702, %v591
  %v704 = vadd.f32 %v703, %v610
  %v705 = vadd.f32 %v704, %v629
  %v706 = vadd.f32 %v705, %v648
  %v707 = vadd.f32 %v706, %v667
  %708 = vadd.xlane.f32.xlu0 %v707
  %v709 = vpop.xlane.xlu0 %708
  %v710 = vadd.f32 %v366, %v385
  %v711 = vadd.f32 %v710, %v404
  %v712 = vadd.f32 %v711, %v423
  %v713 = vadd.f32 %v712, %v442
  %v714 = vadd.f32 %v713, %v461
  %v715 = vadd.f32 %v714, %v480
  %v716 = vadd.f32 %v715, %v499
  %v717 = vadd.f32 %v716, %v518
  %v718 = vadd.f32 %v717, %v537
  %v719 = vadd.f32 %v718, %v556
  %v720 = vadd.f32 %v719, %v575
  %v721 = vadd.f32 %v720, %v594
  %v722 = vadd.f32 %v721, %v613
  %v723 = vadd.f32 %v722, %v632
  %v724 = vadd.f32 %v723, %v651
  %v725 = vadd.f32 %v724, %v670
  %726 = vadd.xlane.f32.xlu0 %v725
  %v727 = vpop.xlane.xlu0 %726
  %v728 = vadd.f32 %v368, %v387
  %v729 = vadd.f32 %v728, %v406
  %v730 = vadd.f32 %v729, %v425
  %v731 = vadd.f32 %v730, %v444
  %v732 = vadd.f32 %v731, %v463
  %v733 = vadd.f32 %v732, %v482
  %v734 = vadd.f32 %v733, %v501
  %v735 = vadd.f32 %v734, %v520
  %v736 = vadd.f32 %v735, %v539
  %v737 = vadd.f32 %v736, %v558
  %v738 = vadd.f32 %v737, %v577
  %v739 = vadd.f32 %v738, %v596
  %v740 = vadd.f32 %v739, %v615
  %v741 = vadd.f32 %v740, %v634
  %v742 = vadd.f32 %v741, %v653
  %v743 = vadd.f32 %v742, %v672
  %744 = vadd.xlane.f32.xlu0 %v743
  %v745 = vpop.xlane.xlu0 %744
  %v746 = vmul.f32 %v361, %v361
  %v747 = vmul.f32 %v380, %v380
  %v748 = vmul.f32 %v399, %v399
  %v749 = vmul.f32 %v418, %v418
  %v750 = vmul.f32 %v437, %v437
  %v751 = vmul.f32 %v456, %v456
  %v752 = vmul.f32 %v475, %v475
  %v753 = vmul.f32 %v494, %v494
  %v754 = vmul.f32 %v513, %v513
  %v755 = vmul.f32 %v532, %v532
  %v756 = vmul.f32 %v551, %v551
  %v757 = vmul.f32 %v570, %v570
  %v758 = vmul.f32 %v589, %v589
  %v759 = vmul.f32 %v608, %v608
  %v760 = vmul.f32 %v627, %v627
  %v761 = vmul.f32 %v646, %v646
  %v762 = vmul.f32 %v665, %v665
  %v763 = vmul.f32 %v363, %v363
  %v764 = vmul.f32 %v382, %v382
  %v765 = vmul.f32 %v401, %v401
  %v766 = vmul.f32 %v420, %v420
  %v767 = vmul.f32 %v439, %v439
  %v768 = vmul.f32 %v458, %v458
  %v769 = vmul.f32 %v477, %v477
  %v770 = vmul.f32 %v496, %v496
  %v771 = vmul.f32 %v515, %v515
  %v772 = vmul.f32 %v534, %v534
  %v773 = vmul.f32 %v553, %v553
  %v774 = vmul.f32 %v572, %v572
  %v775 = vmul.f32 %v591, %v591
  %v776 = vmul.f32 %v610, %v610
  %v777 = vmul.f32 %v629, %v629
  %v778 = vmul.f32 %v648, %v648
  %v779 = vmul.f32 %v667, %v667
  %v780 = vmul.f32 %v366, %v366
  %v781 = vmul.f32 %v385, %v385
  %v782 = vmul.f32 %v404, %v404
  %v783 = vmul.f32 %v423, %v423
  %v784 = vmul.f32 %v442, %v442
  %v785 = vmul.f32 %v461, %v461
  %v786 = vmul.f32 %v480, %v480
  %v787 = vmul.f32 %v499, %v499
  %v788 = vmul.f32 %v518, %v518
  %v789 = vmul.f32 %v537, %v537
  %v790 = vmul.f32 %v556, %v556
  %v791 = vmul.f32 %v575, %v575
  %v792 = vmul.f32 %v594, %v594
  %v793 = vmul.f32 %v613, %v613
  %v794 = vmul.f32 %v632, %v632
  %v795 = vmul.f32 %v651, %v651
  %v796 = vmul.f32 %v670, %v670
  %v797 = vmul.f32 %v368, %v368
  %v798 = vmul.f32 %v387, %v387
  %v799 = vmul.f32 %v406, %v406
  %v800 = vmul.f32 %v425, %v425
  %v801 = vmul.f32 %v444, %v444
  %v802 = vmul.f32 %v463, %v463
  %v803 = vmul.f32 %v482, %v482
  %v804 = vmul.f32 %v501, %v501
  %v805 = vmul.f32 %v520, %v520
  %v806 = vmul.f32 %v539, %v539
  %v807 = vmul.f32 %v558, %v558
  %v808 = vmul.f32 %v577, %v577
  %v809 = vmul.f32 %v596, %v596
  %v810 = vmul.f32 %v615, %v615
  %v811 = vmul.f32 %v634, %v634
  %v812 = vmul.f32 %v653, %v653
  %v813 = vmul.f32 %v672, %v672
  %v814 = vadd.f32 %v746, %v747
  %v815 = vadd.f32 %v814, %v748
  %v816 = vadd.f32 %v815, %v749
  %v817 = vadd.f32 %v816, %v750
  %v818 = vadd.f32 %v817, %v751
  %v819 = vadd.f32 %v818, %v752
  %v820 = vadd.f32 %v819, %v753
  %v821 = vadd.f32 %v820, %v754
  %v822 = vadd.f32 %v821, %v755
  %v823 = vadd.f32 %v822, %v756
  %v824 = vadd.f32 %v823, %v757
  %v825 = vadd.f32 %v824, %v758
  %v826 = vadd.f32 %v825, %v759
  %v827 = vadd.f32 %v826, %v760
  %v828 = vadd.f32 %v827, %v761
  %v829 = vadd.f32 %v828, %v762
  %830 = vadd.xlane.f32.xlu0 %v829
  %v831 = vpop.xlane.xlu0 %830
  %v832 = vadd.f32 %v763, %v764
  %v833 = vadd.f32 %v832, %v765
  %v834 = vadd.f32 %v833, %v766
  %v835 = vadd.f32 %v834, %v767
  %v836 = vadd.f32 %v835, %v768
  %v837 = vadd.f32 %v836, %v769
  %v838 = vadd.f32 %v837, %v770
  %v839 = vadd.f32 %v838, %v771
  %v840 = vadd.f32 %v839, %v772
  %v841 = vadd.f32 %v840, %v773
  %v842 = vadd.f32 %v841, %v774
  %v843 = vadd.f32 %v842, %v775
  %v844 = vadd.f32 %v843, %v776
  %v845 = vadd.f32 %v844, %v777
  %v846 = vadd.f32 %v845, %v778
  %v847 = vadd.f32 %v846, %v779
  %848 = vadd.xlane.f32.xlu0 %v847
  %v849 = vpop.xlane.xlu0 %848
  %v850 = vadd.f32 %v780, %v781
  %v851 = vadd.f32 %v850, %v782
  %v852 = vadd.f32 %v851, %v783
  %v853 = vadd.f32 %v852, %v784
  %v854 = vadd.f32 %v853, %v785
  %v855 = vadd.f32 %v854, %v786
  %v856 = vadd.f32 %v855, %v787
  %v857 = vadd.f32 %v856, %v788
  %v858 = vadd.f32 %v857, %v789
  %v859 = vadd.f32 %v858, %v790
  %v860 = vadd.f32 %v859, %v791
  %v861 = vadd.f32 %v860, %v792
  %v862 = vadd.f32 %v861, %v793
  %v863 = vadd.f32 %v862, %v794
  %v864 = vadd.f32 %v863, %v795
  %v865 = vadd.f32 %v864, %v796
  %866 = vadd.xlane.f32.xlu0 %v865
  %v867 = vpop.xlane.xlu0 %866
  %v868 = vadd.f32 %v797, %v798
  %v869 = vadd.f32 %v868, %v799
  %v870 = vadd.f32 %v869, %v800
  %v871 = vadd.f32 %v870, %v801
  %v872 = vadd.f32 %v871, %v802
  %v873 = vadd.f32 %v872, %v803
  %v874 = vadd.f32 %v873, %v804
  %v875 = vadd.f32 %v874, %v805
  %v876 = vadd.f32 %v875, %v806
  %v877 = vadd.f32 %v876, %v807
  %v878 = vadd.f32 %v877, %v808
  %v879 = vadd.f32 %v878, %v809
  %v880 = vadd.f32 %v879, %v810
  %v881 = vadd.f32 %v880, %v811
  %v882 = vadd.f32 %v881, %v812
  %v883 = vadd.f32 %v882, %v813
  %884 = vadd.xlane.f32.xlu0 %v883
  %v885 = vpop.xlane.xlu0 %884
  %v886 = vmul.f32 %v691, 0.0005945303
  %v887 = vmul.f32 %v709, 0.0005945303
  %v888 = vmul.f32 %v727, 0.0005945303
  %v889 = vmul.f32 %v745, 0.0005945303
  %v890 = vmul.f32 %v831, 0.0005945303
  %v891 = vmul.f32 %v849, 0.0005945303
  %v892 = vmul.f32 %v867, 0.0005945303
  %v893 = vmul.f32 %v885, 0.0005945303
  %v894 = vmul.f32 %v886, %v886
  %v895 = vmul.f32 %v887, %v887
  %v896 = vmul.f32 %v888, %v888
  %v897 = vmul.f32 %v889, %v889
  %v898 = vsub.f32 %v890, %v894
  %v899 = vsub.f32 %v891, %v895
  %v900 = vsub.f32 %v892, %v896
  %v901 = vsub.f32 %v893, %v897
  %v902 = vld [vmem:[%s2] sm:$0xff]
  %v903 = vld [vmem:[%s2 + $0x8] sm:$0xff]
  %v904 = vld [vmem:[%s2 + $0x10] sm:$0xff]
  %v905 = vld [vmem:[%s2 + $0x18] sm:$0xff]
  %v906 = vadd.f32 %v898, 1e-05
  %v907 = vadd.f32 %v899, 1e-05
  %v908 = vadd.f32 %v900, 1e-05
  %v909 = vadd.f32 %v901, 1e-05
  %v910 = vrsqrt.pop %v906
  %v911 = vmul.f32 %v910, %v906
  %v912 = vmul.f32 %v911, %v910
  %v913 = vmul.f32 0.5, %v912
  %v914 = vsub.f32 1.5, %v913
  %v915 = vmul.f32 %v910, %v914
  %vm916 = vweird.f32 %v906
  %vm917 = vweird.f32 %v910
  %vm918 = vmor %vm916, %vm917
  %v919 = vsel %vm918, %v910, %v915
  %v920 = vrsqrt.pop %v907
  %v921 = vmul.f32 %v920, %v907
  %v922 = vmul.f32 %v921, %v920
  %v923 = vmul.f32 0.5, %v922
  %v924 = vsub.f32 1.5, %v923
  %v925 = vmul.f32 %v920, %v924
  %vm926 = vweird.f32 %v907
  %vm927 = vweird.f32 %v920
  %vm928 = vmor %vm926, %vm927
  %v929 = vsel %vm928, %v920, %v925
  %v930 = vrsqrt.pop %v908
  %v931 = vmul.f32 %v930, %v908
  %v932 = vmul.f32 %v931, %v930
  %v933 = vmul.f32 0.5, %v932
  %v934 = vsub.f32 1.5, %v933
  %v935 = vmul.f32 %v930, %v934
  %vm936 = vweird.f32 %v908
  %vm937 = vweird.f32 %v930
  %vm938 = vmor %vm936, %vm937
  %v939 = vsel %vm938, %v930, %v935
  %v940 = vrsqrt.pop %v909
  %v941 = vmul.f32 %v940, %v909
  %v942 = vmul.f32 %v941, %v940
  %v943 = vmul.f32 0.5, %v942
  %v944 = vsub.f32 1.5, %v943
  %v945 = vmul.f32 %v940, %v944
  %vm946 = vweird.f32 %v909
  %vm947 = vweird.f32 %v940
  %vm948 = vmor %vm946, %vm947
  %v949 = vsel %vm948, %v940, %v945
  %v950 = vmul.f32 %v902, %v919
  %v951 = vmul.f32 %v903, %v929
  %v952 = vmul.f32 %v904, %v939
  %v953 = vmul.f32 %v905, %v949
  %v954 = vld [vmem:[%s3] sm:$0xff]
  %v955 = vld [vmem:[%s3 + $0x8] sm:$0xff]
  %v956 = vld [vmem:[%s3 + $0x10] sm:$0xff]
  %v957 = vld [vmem:[%s3 + $0x18] sm:$0xff]
  %v958 = vmul.f32 %v886, %v950
  %v959 = vmul.f32 %v887, %v951
  %v960 = vmul.f32 %v888, %v952
  %v961 = vmul.f32 %v889, %v953
  %v962 = vsub.f32 %v954, %v958
  %v963 = vsub.f32 %v955, %v959
  %v964 = vsub.f32 %v956, %v960
  %v965 = vsub.f32 %v957, %v961
  %967 = vset.pattern.permute.xlu0 0
  %968 = vperm.xlu0 %967, %v950
  %v969 = vpop.permute.xlu0 %968
  %972 = vset.pattern.permute.xlu0 0
  %973 = vperm.xlu0 %972, %v951
  %v974 = vpop.permute.xlu0 %973
  %977 = vset.pattern.permute.xlu0 0
  %978 = vperm.xlu0 %977, %v952
  %v979 = vpop.permute.xlu0 %978
  %982 = vset.pattern.permute.xlu0 0
  %983 = vperm.xlu0 %982, %v953
  %v984 = vpop.permute.xlu0 %983
  %v986 = vmul.f32 %v361, %v969
  %v987 = vmul.f32 %v380, %v969
  %v988 = vmul.f32 %v399, %v969
  %v989 = vmul.f32 %v418, %v969
  %v990 = vmul.f32 %v437, %v969
  %v991 = vmul.f32 %v456, %v969
  %v992 = vmul.f32 %v475, %v969
  %v993 = vmul.f32 %v494, %v969
  %v994 = vmul.f32 %v513, %v969
  %v995 = vmul.f32 %v532, %v969
  %v996 = vmul.f32 %v551, %v969
  %v997 = vmul.f32 %v570, %v969
  %v998 = vmul.f32 %v589, %v969
  %v999 = vmul.f32 %v608, %v969
  %v1000 = vmul.f32 %v627, %v969
  %v1001 = vmul.f32 %v646, %v969
  %v1002 = vmul.f32 %v363, %v974
  %v1003 = vmul.f32 %v382, %v974
  %v1004 = vmul.f32 %v401, %v974
  %v1005 = vmul.f32 %v420, %v974
  %v1006 = vmul.f32 %v439, %v974
  %v1007 = vmul.f32 %v458, %v974
  %v1008 = vmul.f32 %v477, %v974
  %v1009 = vmul.f32 %v496, %v974
  %v1010 = vmul.f32 %v515, %v974
  %v1011 = vmul.f32 %v534, %v974
  %v1012 = vmul.f32 %v553, %v974
  %v1013 = vmul.f32 %v572, %v974
  %v1014 = vmul.f32 %v591, %v974
  %v1015 = vmul.f32 %v610, %v974
  %v1016 = vmul.f32 %v629, %v974
  %v1017 = vmul.f32 %v648, %v974
  %v1018 = vmul.f32 %v366, %v979
  %v1019 = vmul.f32 %v385, %v979
  %v1020 = vmul.f32 %v404, %v979
  %v1021 = vmul.f32 %v423, %v979
  %v1022 = vmul.f32 %v442, %v979
  %v1023 = vmul.f32 %v461, %v979
  %v1024 = vmul.f32 %v480, %v979
  %v1025 = vmul.f32 %v499, %v979
  %v1026 = vmul.f32 %v518, %v979
  %v1027 = vmul.f32 %v537, %v979
  %v1028 = vmul.f32 %v556, %v979
  %v1029 = vmul.f32 %v575, %v979
  %v1030 = vmul.f32 %v594, %v979
  %v1031 = vmul.f32 %v613, %v979
  %v1032 = vmul.f32 %v632, %v979
  %v1033 = vmul.f32 %v651, %v979
  %v1034 = vmul.f32 %v368, %v984
  %v1035 = vmul.f32 %v387, %v984
  %v1036 = vmul.f32 %v406, %v984
  %v1037 = vmul.f32 %v425, %v984
  %v1038 = vmul.f32 %v444, %v984
  %v1039 = vmul.f32 %v463, %v984
  %v1040 = vmul.f32 %v482, %v984
  %v1041 = vmul.f32 %v501, %v984
  %v1042 = vmul.f32 %v520, %v984
  %v1043 = vmul.f32 %v539, %v984
  %v1044 = vmul.f32 %v558, %v984
  %v1045 = vmul.f32 %v577, %v984
  %v1046 = vmul.f32 %v596, %v984
  %v1047 = vmul.f32 %v615, %v984
  %v1048 = vmul.f32 %v634, %v984
  %v1049 = vmul.f32 %v653, %v984
  %1051 = vset.pattern.permute.xlu0 0
  %1052 = vperm.xlu0 %1051, %v962
  %v1053 = vpop.permute.xlu0 %1052
  %1056 = vset.pattern.permute.xlu0 0
  %1057 = vperm.xlu0 %1056, %v963
  %v1058 = vpop.permute.xlu0 %1057
  %1061 = vset.pattern.permute.xlu0 0
  %1062 = vperm.xlu0 %1061, %v964
  %v1063 = vpop.permute.xlu0 %1062
  %1066 = vset.pattern.permute.xlu0 0
  %1067 = vperm.xlu0 %1066, %v965
  %v1068 = vpop.permute.xlu0 %1067
  %v1070 = vadd.f32 %v986, %v1053
  %v1071 = vadd.f32 %v987, %v1053
  %v1072 = vadd.f32 %v988, %v1053
  %v1073 = vadd.f32 %v989, %v1053
  %v1074 = vadd.f32 %v990, %v1053
  %v1075 = vadd.f32 %v991, %v1053
  %v1076 = vadd.f32 %v992, %v1053
  %v1077 = vadd.f32 %v993, %v1053
  %v1078 = vadd.f32 %v994, %v1053
  %v1079 = vadd.f32 %v995, %v1053
  %v1080 = vadd.f32 %v996, %v1053
  %v1081 = vadd.f32 %v997, %v1053
  %v1082 = vadd.f32 %v998, %v1053
  %v1083 = vadd.f32 %v999, %v1053
  %v1084 = vadd.f32 %v1000, %v1053
  %v1085 = vadd.f32 %v1001, %v1053
  %v1086 = vadd.f32 %v1002, %v1058
  %v1087 = vadd.f32 %v1003, %v1058
  %v1088 = vadd.f32 %v1004, %v1058
  %v1089 = vadd.f32 %v1005, %v1058
  %v1090 = vadd.f32 %v1006, %v1058
  %v1091 = vadd.f32 %v1007, %v1058
  %v1092 = vadd.f32 %v1008, %v1058
  %v1093 = vadd.f32 %v1009, %v1058
  %v1094 = vadd.f32 %v1010, %v1058
  %v1095 = vadd.f32 %v1011, %v1058
  %v1096 = vadd.f32 %v1012, %v1058
  %v1097 = vadd.f32 %v1013, %v1058
  %v1098 = vadd.f32 %v1014, %v1058
  %v1099 = vadd.f32 %v1015, %v1058
  %v1100 = vadd.f32 %v1016, %v1058
  %v1101 = vadd.f32 %v1017, %v1058
  %v1102 = vadd.f32 %v1018, %v1063
  %v1103 = vadd.f32 %v1019, %v1063
  %v1104 = vadd.f32 %v1020, %v1063
  %v1105 = vadd.f32 %v1021, %v1063
  %v1106 = vadd.f32 %v1022, %v1063
  %v1107 = vadd.f32 %v1023, %v1063
  %v1108 = vadd.f32 %v1024, %v1063
  %v1109 = vadd.f32 %v1025, %v1063
  %v1110 = vadd.f32 %v1026, %v1063
  %v1111 = vadd.f32 %v1027, %v1063
  %v1112 = vadd.f32 %v1028, %v1063
  %v1113 = vadd.f32 %v1029, %v1063
  %v1114 = vadd.f32 %v1030, %v1063
  %v1115 = vadd.f32 %v1031, %v1063
  %v1116 = vadd.f32 %v1032, %v1063
  %v1117 = vadd.f32 %v1033, %v1063
  %v1118 = vadd.f32 %v1034, %v1068
  %v1119 = vadd.f32 %v1035, %v1068
  %v1120 = vadd.f32 %v1036, %v1068
  %v1121 = vadd.f32 %v1037, %v1068
  %v1122 = vadd.f32 %v1038, %v1068
  %v1123 = vadd.f32 %v1039, %v1068
  %v1124 = vadd.f32 %v1040, %v1068
  %v1125 = vadd.f32 %v1041, %v1068
  %v1126 = vadd.f32 %v1042, %v1068
  %v1127 = vadd.f32 %v1043, %v1068
  %v1128 = vadd.f32 %v1044, %v1068
  %v1129 = vadd.f32 %v1045, %v1068
  %v1130 = vadd.f32 %v1046, %v1068
  %v1131 = vadd.f32 %v1047, %v1068
  %v1132 = vadd.f32 %v1048, %v1068
  %v1133 = vadd.f32 %v1049, %v1068
  %v1134 = vmax.f32 %v1070, 0.0
  %v1135 = vmax.f32 %v1071, 0.0
  %v1136 = vmax.f32 %v1072, 0.0
  %v1137 = vmax.f32 %v1073, 0.0
  %v1138 = vmax.f32 %v1074, 0.0
  %v1139 = vmax.f32 %v1075, 0.0
  %v1140 = vmax.f32 %v1076, 0.0
  %v1141 = vmax.f32 %v1077, 0.0
  %v1142 = vmax.f32 %v1078, 0.0
  %v1143 = vmax.f32 %v1079, 0.0
  %v1144 = vmax.f32 %v1080, 0.0
  %v1145 = vmax.f32 %v1081, 0.0
  %v1146 = vmax.f32 %v1082, 0.0
  %v1147 = vmax.f32 %v1083, 0.0
  %v1148 = vmax.f32 %v1084, 0.0
  %v1149 = vmax.f32 %v1085, 0.0
  %v1150 = vmax.f32 %v1086, 0.0
  %v1151 = vmax.f32 %v1087, 0.0
  %v1152 = vmax.f32 %v1088, 0.0
  %v1153 = vmax.f32 %v1089, 0.0
  %v1154 = vmax.f32 %v1090, 0.0
  %v1155 = vmax.f32 %v1091, 0.0
  %v1156 = vmax.f32 %v1092, 0.0
  %v1157 = vmax.f32 %v1093, 0.0
  %v1158 = vmax.f32 %v1094, 0.0
  %v1159 = vmax.f32 %v1095, 0.0
  %v1160 = vmax.f32 %v1096, 0.0
  %v1161 = vmax.f32 %v1097, 0.0
  %v1162 = vmax.f32 %v1098, 0.0
  %v1163 = vmax.f32 %v1099, 0.0
  %v1164 = vmax.f32 %v1100, 0.0
  %v1165 = vmax.f32 %v1101, 0.0
  %v1166 = vmax.f32 %v1102, 0.0
  %v1167 = vmax.f32 %v1103, 0.0
  %v1168 = vmax.f32 %v1104, 0.0
  %v1169 = vmax.f32 %v1105, 0.0
  %v1170 = vmax.f32 %v1106, 0.0
  %v1171 = vmax.f32 %v1107, 0.0
  %v1172 = vmax.f32 %v1108, 0.0
  %v1173 = vmax.f32 %v1109, 0.0
  %v1174 = vmax.f32 %v1110, 0.0
  %v1175 = vmax.f32 %v1111, 0.0
  %v1176 = vmax.f32 %v1112, 0.0
  %v1177 = vmax.f32 %v1113, 0.0
  %v1178 = vmax.f32 %v1114, 0.0
  %v1179 = vmax.f32 %v1115, 0.0
  %v1180 = vmax.f32 %v1116, 0.0
  %v1181 = vmax.f32 %v1117, 0.0
  %v1182 = vmax.f32 %v1118, 0.0
  %v1183 = vmax.f32 %v1119, 0.0
  %v1184 = vmax.f32 %v1120, 0.0
  %v1185 = vmax.f32 %v1121, 0.0
  %v1186 = vmax.f32 %v1122, 0.0
  %v1187 = vmax.f32 %v1123, 0.0
  %v1188 = vmax.f32 %v1124, 0.0
  %v1189 = vmax.f32 %v1125, 0.0
  %v1190 = vmax.f32 %v1126, 0.0
  %v1191 = vmax.f32 %v1127, 0.0
  %v1192 = vmax.f32 %v1128, 0.0
  %v1193 = vmax.f32 %v1129, 0.0
  %v1194 = vmax.f32 %v1130, 0.0
  %v1195 = vmax.f32 %v1131, 0.0
  %v1196 = vmax.f32 %v1132, 0.0
  %v1197 = vmax.f32 %v1133, 0.0
  %v1198 = vmax.f32 %v1134, %v1138
  %v1199 = vmax.f32 %v1135, %v1139
  %v1200 = vmax.f32 %v1136, %v1140
  %v1201 = vmax.f32 %v1137, %v1141
  %v1202 = vmax.f32 %v1150, %v1154
  %v1203 = vmax.f32 %v1151, %v1155
  %v1204 = vmax.f32 %v1152, %v1156
  %v1205 = vmax.f32 %v1153, %v1157
  %v1206 = vmax.f32 %v1166, %v1170
  %v1207 = vmax.f32 %v1167, %v1171
  %v1208 = vmax.f32 %v1168, %v1172
  %v1209 = vmax.f32 %v1169, %v1173
  %v1210 = vmax.f32 %v1182, %v1186
  %v1211 = vmax.f32 %v1183, %v1187
  %v1212 = vmax.f32 %v1184, %v1188
  %v1213 = vmax.f32 %v1185, %v1189
  %v1214 = vmax.f32 %v1142, %v1146
  %v1215 = vmax.f32 %v1143, %v1147
  %v1216 = vmax.f32 %v1144, %v1148
  %v1217 = vmax.f32 %v1145, %v1149
  %v1218 = vmax.f32 %v1158, %v1162
  %v1219 = vmax.f32 %v1159, %v1163
  %v1220 = vmax.f32 %v1160, %v1164
  %v1221 = vmax.f32 %v1161, %v1165
  %v1222 = vmax.f32 %v1174, %v1178
  %v1223 = vmax.f32 %v1175, %v1179
  %v1224 = vmax.f32 %v1176, %v1180
  %v1225 = vmax.f32 %v1177, %v1181
  %v1226 = vmax.f32 %v1190, %v1194
  %v1227 = vmax.f32 %v1191, %v1195
  %v1228 = vmax.f32 %v1192, %v1196
  %v1229 = vmax.f32 %v1193, %v1197
  %v1230 = vmax.f32 %v1198, %v1214
  %v1231 = vmax.f32 %v1199, %v1215
  %v1232 = vmax.f32 %v1200, %v1216
  %v1233 = vmax.f32 %v1201, %v1217
  %v1234 = vmax.f32 %v1202, %v1218
  %v1235 = vmax.f32 %v1203, %v1219
  %v1236 = vmax.f32 %v1204, %v1220
  %v1237 = vmax.f32 %v1205, %v1221
  %v1238 = vmax.f32 %v1206, %v1222
  %v1239 = vmax.f32 %v1207, %v1223
  %v1240 = vmax.f32 %v1208, %v1224
  %v1241 = vmax.f32 %v1209, %v1225
  %v1242 = vmax.f32 %v1210, %v1226
  %v1243 = vmax.f32 %v1211, %v1227
  %v1244 = vmax.f32 %v1212, %v1228
  %v1245 = vmax.f32 %v1213, %v1229
  %v1246 = vpack.c.bf16 %v1231, %v1230
  %v1247 = vpack.c.bf16 %v1233, %v1232
  %v1248 = vpack.c.bf16 %v1235, %v1234
  %v1249 = vpack.c.bf16 %v1237, %v1236
  %v1250 = vpack.c.bf16 %v1239, %v1238
  %v1251 = vpack.c.bf16 %v1241, %v1240
  %v1252 = vpack.c.bf16 %v1243, %v1242
  %v1253 = vpack.c.bf16 %v1245, %v1244
  %1254 = vst [vmem:[%s4] sm:$0xff] %v1246
  %1255 = vst [vmem:[%s4 + $0x8] sm:$0xff] %v1247
  %1256 = vst [vmem:[%s4 + $0x10] sm:$0xff] %v1248
  %1257 = vst [vmem:[%s4 + $0x18] sm:$0xff] %v1249
  %1258 = vst [vmem:[%s4 + $0x20] sm:$0xff] %v1250
  %1259 = vst [vmem:[%s4 + $0x28] sm:$0xff] %v1251
  %1260 = vst [vmem:[%s4 + $0x30] sm:$0xff] %v1252
  %1261 = vst [vmem:[%s4 + $0x38] sm:$0xff] %v1253
  // Predicated region
  $region18: #{cnn1_forward.3} parent=0 // pred_check
    _
  $region19: #{cnn1_forward.3} parent=0 // pred_check_branch
    %1263 = sbr.rel (0) target = $region21
  $region20: #{cnn1_forward.3} parent=0 // pred_region
    _
  $region21: #{cnn1_forward.3} parent=0 // pred_fallthru
    _
  // Predicated region
  $region22: #{cnn1_forward.3} parent=0 // pred_check
    _
  $region23: #{cnn1_forward.3} parent=0 // pred_check_branch
    %1265 = sbr.rel (0) target = $region25
  $region24: #{cnn1_forward.3} parent=0 // pred_region
    _
  $region25: #{cnn1_forward.3} parent=0 // pred_fallthru
    _

// kernel: cnn1_forward.4
$region0: #{cnn1_forward.4}
  #allocation0 [shape = 'u32[]', space=smem, size = 0x4, offset = 0x4, fixed_abs, tag = 'smem constant byte address 0x4 - core index']
  #allocation1 [shape = 'u32[72,128]{1,0:T(1,128)}', space=vmem, size = 0x9000, scoped, tag = 'internal scratch']
  %s0 = inlined_call_operand.vmem [shape: bf16[512,640], index: 0, kind: input, shape index: {}]
  %s1 = inlined_call_operand.vmem [shape: bf16[32,512], index: 1, kind: input, shape index: {}]
  %s2 = inlined_call_operand.vmem [shape: f32[32,1], index: 2, kind: input, shape index: {}]
  %s3 = inlined_call_operand.vmem [shape: f32[32,1], index: 3, kind: input, shape index: {}]
  %s4 = inlined_call_operand.vmem [shape: bf16[32,128], index: 4, kind: output, shape index: {}]
  %s5 = sld [smem:[#allocation0]]
  $region26: #{cnn1_forward.4} parent=0
    _
  %s7 = ssub.s32 1, %s5
  %s8 = scalar_select 0, %s7, %s5
  // Predicated region
  $region2: #{cnn1_forward.4} parent=0 // pred_check
    _
  $region3: #{cnn1_forward.4} parent=0 // pred_check_branch
    %10 = sbr.rel (0) target = $region5
  $region4: #{cnn1_forward.4} parent=0 // pred_region
    _
  $region5: #{cnn1_forward.4} parent=0 // pred_fallthru
    _
  // Predicated region
  $region6: #{cnn1_forward.4} parent=0 // pred_check
    _
  $region7: #{cnn1_forward.4} parent=0 // pred_check_branch
    %12 = sbr.rel (0) target = $region9
  $region8: #{cnn1_forward.4} parent=0 // pred_region
    _
  $region9: #{cnn1_forward.4} parent=0 // pred_fallthru
    _
  // Predicated region
  $region10: #{cnn1_forward.4} parent=0 // pred_check
    _
  $region11: #{cnn1_forward.4} parent=0 // pred_check_branch
    %14 = sbr.rel (0) target = $region13
  $region12: #{cnn1_forward.4} parent=0 // pred_region
    _
  $region13: #{cnn1_forward.4} parent=0 // pred_fallthru
    _
  // Predicated region
  $region14: #{cnn1_forward.4} parent=0 // pred_check
    _
  $region15: #{cnn1_forward.4} parent=0 // pred_check_branch
    %16 = sbr.rel (0) target = $region17
  $region16: #{cnn1_forward.4} parent=0 // pred_region
    _
  $region17: #{cnn1_forward.4} parent=0 // pred_fallthru
    _
  %v17 = vld [vmem:[%s1] sm:$0xff]
  %v18 = vld [vmem:[%s1 + $0x8] sm:$0xff]
  %v19 = vld [vmem:[%s1 + $0x10] sm:$0xff]
  %v20 = vld [vmem:[%s1 + $0x18] sm:$0xff]
  %v21 = vld [vmem:[%s1 + $0x20] sm:$0xff]
  %v22 = vld [vmem:[%s1 + $0x28] sm:$0xff]
  %v23 = vld [vmem:[%s1 + $0x30] sm:$0xff]
  %v24 = vld [vmem:[%s1 + $0x38] sm:$0xff]
  %v25 = vld [vmem:[%s0] sm:$0xff]
  %v26 = vld [vmem:[%s0 + $0x8] sm:$0xff]
  %v27 = vld [vmem:[%s0 + $0x10] sm:$0xf]
  %v28 = vld [vmem:[%s0 + $0x14] sm:$0xff]
  %v29 = vld [vmem:[%s0 + $0x1c] sm:$0xff]
  %v30 = vld [vmem:[%s0 + $0x24] sm:$0xf]
  %v31 = vld [vmem:[%s0 + $0x28] sm:$0xff]
  %v32 = vld [vmem:[%s0 + $0x30] sm:$0xff]
  %v33 = vld [vmem:[%s0 + $0x38] sm:$0xf]
  %v34 = vld [vmem:[%s0 + $0x3c] sm:$0xff]
  %v35 = vld [vmem:[%s0 + $0x44] sm:$0xff]
  %v36 = vld [vmem:[%s0 + $0x4c] sm:$0xf]
  %v37 = vld [vmem:[%s0 + $0x50] sm:$0xff]
  %v38 = vld [vmem:[%s0 + $0x58] sm:$0xff]
  %v39 = vld [vmem:[%s0 + $0x60] sm:$0xf]
  %v40 = vld [vmem:[%s0 + $0x64] sm:$0xff]
  %v41 = vld [vmem:[%s0 + $0x6c] sm:$0xff]
  %v42 = vld [vmem:[%s0 + $0x74] sm:$0xf]
  %v43 = vld [vmem:[%s0 + $0x78] sm:$0xff]
  %v44 = vld [vmem:[%s0 + $0x80] sm:$0xff]
  %v45 = vld [vmem:[%s0 + $0x88] sm:$0xf]
  %v46 = vld [vmem:[%s0 + $0x8c] sm:$0xff]
  %v47 = vld [vmem:[%s0 + $0x94] sm:$0xff]
  %v48 = vld [vmem:[%s0 + $0x9c] sm:$0xf]
  %v49 = vld [vmem:[%s0 + $0xa0] sm:$0xff]
  %v50 = vld [vmem:[%s0 + $0xa8] sm:$0xff]
  %v51 = vld [vmem:[%s0 + $0xb0] sm:$0xf]
  %v52 = vld [vmem:[%s0 + $0xb4] sm:$0xff]
  %v53 = vld [vmem:[%s0 + $0xbc] sm:$0xff]
  %v54 = vld [vmem:[%s0 + $0xc4] sm:$0xf]
  %v55 = vld [vmem:[%s0 + $0xc8] sm:$0xff]
  %v56 = vld [vmem:[%s0 + $0xd0] sm:$0xff]
  %v57 = vld [vmem:[%s0 + $0xd8] sm:$0xf]
  %v58 = vld [vmem:[%s0 + $0xdc] sm:$0xff]
  %v59 = vld [vmem:[%s0 + $0xe4] sm:$0xff]
  %v60 = vld [vmem:[%s0 + $0xec] sm:$0xf]
  %v61 = vld [vmem:[%s0 + $0xf0] sm:$0xff]
  %v62 = vld [vmem:[%s0 + $0xf8] sm:$0xff]
  %v63 = vld [vmem:[%s0 + $0x100] sm:$0xf]
  %v64 = vld [vmem:[%s0 + $0x104] sm:$0xff]
  %v65 = vld [vmem:[%s0 + $0x10c] sm:$0xff]
  %v66 = vld [vmem:[%s0 + $0x114] sm:$0xf]
  %v67 = vld [vmem:[%s0 + $0x118] sm:$0xff]
  %v68 = vld [vmem:[%s0 + $0x120] sm:$0xff]
  %v69 = vld [vmem:[%s0 + $0x128] sm:$0xf]
  %v70 = vld [vmem:[%s0 + $0x12c] sm:$0xff]
  %v71 = vld [vmem:[%s0 + $0x134] sm:$0xff]
  %v72 = vld [vmem:[%s0 + $0x13c] sm:$0xf]
  %v73 = vld [vmem:[%s0 + $0x140] sm:$0xff]
  %v74 = vld [vmem:[%s0 + $0x148] sm:$0xff]
  %v75 = vld [vmem:[%s0 + $0x150] sm:$0xf]
  %v76 = vld [vmem:[%s0 + $0x154] sm:$0xff]
  %v77 = vld [vmem:[%s0 + $0x15c] sm:$0xff]
  %v78 = vld [vmem:[%s0 + $0x164] sm:$0xf]
  %v79 = vld [vmem:[%s0 + $0x168] sm:$0xff]
  %v80 = vld [vmem:[%s0 + $0x170] sm:$0xff]
  %v81 = vld [vmem:[%s0 + $0x178] sm:$0xf]
  %v82 = vld [vmem:[%s0 + $0x17c] sm:$0xff]
  %v83 = vld [vmem:[%s0 + $0x184] sm:$0xff]
  %v84 = vld [vmem:[%s0 + $0x18c] sm:$0xf]
  %v85 = vld [vmem:[%s0 + $0x190] sm:$0xff]
  %v86 = vld [vmem:[%s0 + $0x198] sm:$0xff]
  %v87 = vld [vmem:[%s0 + $0x1a0] sm:$0xf]
  %v88 = vld [vmem:[%s0 + $0x1a4] sm:$0xff]
  %v89 = vld [vmem:[%s0 + $0x1ac] sm:$0xff]
  %v90 = vld [vmem:[%s0 + $0x1b4] sm:$0xf]
  %v91 = vld [vmem:[%s0 + $0x1b8] sm:$0xff]
  %v92 = vld [vmem:[%s0 + $0x1c0] sm:$0xff]
  %v93 = vld [vmem:[%s0 + $0x1c8] sm:$0xf]
  %v94 = vld [vmem:[%s0 + $0x1cc] sm:$0xff]
  %v95 = vld [vmem:[%s0 + $0x1d4] sm:$0xff]
  %v96 = vld [vmem:[%s0 + $0x1dc] sm:$0xf]
  %v97 = vld [vmem:[%s0 + $0x1e0] sm:$0xff]
  %v98 = vld [vmem:[%s0 + $0x1e8] sm:$0xff]
  %v99 = vld [vmem:[%s0 + $0x1f0] sm:$0xf]
  %v100 = vld [vmem:[%s0 + $0x1f4] sm:$0xff]
  %v101 = vld [vmem:[%s0 + $0x1fc] sm:$0xff]
  %v102 = vld [vmem:[%s0 + $0x204] sm:$0xf]
  %v103 = vld [vmem:[%s0 + $0x208] sm:$0xff]
  %v104 = vld [vmem:[%s0 + $0x210] sm:$0xff]
  %v105 = vld [vmem:[%s0 + $0x218] sm:$0xf]
  %v106 = vld [vmem:[%s0 + $0x21c] sm:$0xff]
  %v107 = vld [vmem:[%s0 + $0x224] sm:$0xff]
  %v108 = vld [vmem:[%s0 + $0x22c] sm:$0xf]
  %v109 = vld [vmem:[%s0 + $0x230] sm:$0xff]
  %v110 = vld [vmem:[%s0 + $0x238] sm:$0xff]
  %v111 = vld [vmem:[%s0 + $0x240] sm:$0xf]
  %v112 = vld [vmem:[%s0 + $0x244] sm:$0xff]
  %v113 = vld [vmem:[%s0 + $0x24c] sm:$0xff]
  %v114 = vld [vmem:[%s0 + $0x254] sm:$0xf]
  %v115 = vld [vmem:[%s0 + $0x258] sm:$0xff]
  %v116 = vld [vmem:[%s0 + $0x260] sm:$0xff]
  %v117 = vld [vmem:[%s0 + $0x268] sm:$0xf]
  %v118 = vld [vmem:[%s0 + $0x26c] sm:$0xff]
  %v119 = vld [vmem:[%s0 + $0x274] sm:$0xff]
  %v120 = vld [vmem:[%s0 + $0x27c] sm:$0xf]
  %v121 = vld [vmem:[%s0 + $0x280] sm:$0xff]
  %v122 = vld [vmem:[%s0 + $0x288] sm:$0xff]
  %v123 = vld [vmem:[%s0 + $0x290] sm:$0xf]
  %v124 = vld [vmem:[%s0 + $0x294] sm:$0xff]
  %v125 = vld [vmem:[%s0 + $0x29c] sm:$0xff]
  %v126 = vld [vmem:[%s0 + $0x2a4] sm:$0xf]
  %v127 = vld [vmem:[%s0 + $0x2a8] sm:$0xff]
  %v128 = vld [vmem:[%s0 + $0x2b0] sm:$0xff]
  %v129 = vld [vmem:[%s0 + $0x2b8] sm:$0xf]
  %v130 = vld [vmem:[%s0 + $0x2bc] sm:$0xff]
  %v131 = vld [vmem:[%s0 + $0x2c4] sm:$0xff]
  %v132 = vld [vmem:[%s0 + $0x2cc] sm:$0xf]
  %v133 = vld [vmem:[%s0 + $0x2d0] sm:$0xff]
  %v134 = vld [vmem:[%s0 + $0x2d8] sm:$0xff]
  %v135 = vld [vmem:[%s0 + $0x2e0] sm:$0xf]
  %v136 = vld [vmem:[%s0 + $0x2e4] sm:$0xff]
  %v137 = vld [vmem:[%s0 + $0x2ec] sm:$0xff]
  %v138 = vld [vmem:[%s0 + $0x2f4] sm:$0xf]
  %v139 = vld [vmem:[%s0 + $0x2f8] sm:$0xff]
  %v140 = vld [vmem:[%s0 + $0x300] sm:$0xff]
  %v141 = vld [vmem:[%s0 + $0x308] sm:$0xf]
  %v142 = vld [vmem:[%s0 + $0x30c] sm:$0xff]
  %v143 = vld [vmem:[%s0 + $0x314] sm:$0xff]
  %v144 = vld [vmem:[%s0 + $0x31c] sm:$0xf]
  %v145 = vld [vmem:[%s0 + $0x320] sm:$0xff]
  %v146 = vld [vmem:[%s0 + $0x328] sm:$0xff]
  %v147 = vld [vmem:[%s0 + $0x330] sm:$0xf]
  %v148 = vld [vmem:[%s0 + $0x334] sm:$0xff]
  %v149 = vld [vmem:[%s0 + $0x33c] sm:$0xff]
  %v150 = vld [vmem:[%s0 + $0x344] sm:$0xf]
  %v151 = vld [vmem:[%s0 + $0x348] sm:$0xff]
  %v152 = vld [vmem:[%s0 + $0x350] sm:$0xff]
  %v153 = vld [vmem:[%s0 + $0x358] sm:$0xf]
  %v154 = vld [vmem:[%s0 + $0x35c] sm:$0xff]
  %v155 = vld [vmem:[%s0 + $0x364] sm:$0xff]
  %v156 = vld [vmem:[%s0 + $0x36c] sm:$0xf]
  %v157 = vld [vmem:[%s0 + $0x370] sm:$0xff]
  %v158 = vld [vmem:[%s0 + $0x378] sm:$0xff]
  %v159 = vld [vmem:[%s0 + $0x380] sm:$0xf]
  %v160 = vld [vmem:[%s0 + $0x384] sm:$0xff]
  %v161 = vld [vmem:[%s0 + $0x38c] sm:$0xff]
  %v162 = vld [vmem:[%s0 + $0x394] sm:$0xf]
  %v163 = vld [vmem:[%s0 + $0x398] sm:$0xff]
  %v164 = vld [vmem:[%s0 + $0x3a0] sm:$0xff]
  %v165 = vld [vmem:[%s0 + $0x3a8] sm:$0xf]
  %v166 = vld [vmem:[%s0 + $0x3ac] sm:$0xff]
  %v167 = vld [vmem:[%s0 + $0x3b4] sm:$0xff]
  %v168 = vld [vmem:[%s0 + $0x3bc] sm:$0xf]
  %v169 = vld [vmem:[%s0 + $0x3c0] sm:$0xff]
  %v170 = vld [vmem:[%s0 + $0x3c8] sm:$0xff]
  %v171 = vld [vmem:[%s0 + $0x3d0] sm:$0xf]
  %v172 = vld [vmem:[%s0 + $0x3d4] sm:$0xff]
  %v173 = vld [vmem:[%s0 + $0x3dc] sm:$0xff]
  %v174 = vld [vmem:[%s0 + $0x3e4] sm:$0xf]
  %v175 = vld [vmem:[%s0 + $0x3e8] sm:$0xff]
  %v176 = vld [vmem:[%s0 + $0x3f0] sm:$0xff]
  %v177 = vld [vmem:[%s0 + $0x3f8] sm:$0xf]
  %v178 = vld [vmem:[%s0 + $0x3fc] sm:$0xff]
  %v179 = vld [vmem:[%s0 + $0x404] sm:$0xff]
  %v180 = vld [vmem:[%s0 + $0x40c] sm:$0xf]
  %v181 = vld [vmem:[%s0 + $0x410] sm:$0xff]
  %v182 = vld [vmem:[%s0 + $0x418] sm:$0xff]
  %v183 = vld [vmem:[%s0 + $0x420] sm:$0xf]
  %v184 = vld [vmem:[%s0 + $0x424] sm:$0xff]
  %v185 = vld [vmem:[%s0 + $0x42c] sm:$0xff]
  %v186 = vld [vmem:[%s0 + $0x434] sm:$0xf]
  %v187 = vld [vmem:[%s0 + $0x438] sm:$0xff]
  %v188 = vld [vmem:[%s0 + $0x440] sm:$0xff]
  %v189 = vld [vmem:[%s0 + $0x448] sm:$0xf]
  %v190 = vld [vmem:[%s0 + $0x44c] sm:$0xff]
  %v191 = vld [vmem:[%s0 + $0x454] sm:$0xff]
  %v192 = vld [vmem:[%s0 + $0x45c] sm:$0xf]
  %v193 = vld [vmem:[%s0 + $0x460] sm:$0xff]
  %v194 = vld [vmem:[%s0 + $0x468] sm:$0xff]
  %v195 = vld [vmem:[%s0 + $0x470] sm:$0xf]
  %v196 = vld [vmem:[%s0 + $0x474] sm:$0xff]
  %v197 = vld [vmem:[%s0 + $0x47c] sm:$0xff]
  %v198 = vld [vmem:[%s0 + $0x484] sm:$0xf]
  %v199 = vld [vmem:[%s0 + $0x488] sm:$0xff]
  %v200 = vld [vmem:[%s0 + $0x490] sm:$0xff]
  %v201 = vld [vmem:[%s0 + $0x498] sm:$0xf]
  %v202 = vld [vmem:[%s0 + $0x49c] sm:$0xff]
  %v203 = vld [vmem:[%s0 + $0x4a4] sm:$0xff]
  %v204 = vld [vmem:[%s0 + $0x4ac] sm:$0xf]
  %v205 = vld [vmem:[%s0 + $0x4b0] sm:$0xff]
  %v206 = vld [vmem:[%s0 + $0x4b8] sm:$0xff]
  %v207 = vld [vmem:[%s0 + $0x4c0] sm:$0xf]
  %v208 = vld [vmem:[%s0 + $0x4c4] sm:$0xff]
  %v209 = vld [vmem:[%s0 + $0x4cc] sm:$0xff]
  %v210 = vld [vmem:[%s0 + $0x4d4] sm:$0xf]
  %v211 = vld [vmem:[%s0 + $0x4d8] sm:$0xff]
  %v212 = vld [vmem:[%s0 + $0x4e0] sm:$0xff]
  %v213 = vld [vmem:[%s0 + $0x4e8] sm:$0xf]
  %v214 = vld [vmem:[%s0 + $0x4ec] sm:$0xff]
  %v215 = vld [vmem:[%s0 + $0x4f4] sm:$0xff]
  %v216 = vld [vmem:[%s0 + $0x4fc] sm:$0xf]
  %v225 = vunpack.c.l.b16 %v17
  %v226 = vunpack.c.h.b16 %v17
  %v227 = vunpack.c.l.b16 %v18
  %v228 = vunpack.c.h.b16 %v18
  %v229 = vunpack.c.l.b16 %v19
  %v230 = vunpack.c.h.b16 %v19
  %v231 = vunpack.c.l.b16 %v20
  %v232 = vunpack.c.h.b16 %v20
  %v233 = vunpack.c.l.b16 %v21
  %v234 = vunpack.c.h.b16 %v21
  %v235 = vunpack.c.l.b16 %v22
  %v236 = vunpack.c.h.b16 %v22
  %v237 = vunpack.c.l.b16 %v23
  %v238 = vunpack.c.h.b16 %v23
  %v239 = vunpack.c.l.b16 %v24
  %v240 = vunpack.c.h.b16 %v24
  %v241 = vpack.c.b16 %v229, %v225
  %v242 = vpack.c.b16 %v230, %v226
  %v243 = vpack.c.b16 %v231, %v227
  %v244 = vpack.c.b16 %v232, %v228
  %v245 = vpack.c.b16 %v237, %v233
  %v246 = vpack.c.b16 %v238, %v234
  %v247 = vpack.c.b16 %v239, %v235
  %v248 = vpack.c.b16 %v240, %v236
  %v449 = vunpack.c.l.b16 %v25
  %v450 = vunpack.c.h.b16 %v25
  %v451 = vunpack.c.l.b16 %v26
  %v452 = vunpack.c.h.b16 %v26
  %v453 = vunpack.c.l.b16 %v27
  %v454 = vunpack.c.l.b16 %v28
  %v455 = vunpack.c.h.b16 %v28
  %v456 = vunpack.c.l.b16 %v29
  %v457 = vunpack.c.h.b16 %v29
  %v458 = vunpack.c.l.b16 %v30
  %v459 = vunpack.c.l.b16 %v31
  %v460 = vunpack.c.h.b16 %v31
  %v461 = vunpack.c.l.b16 %v32
  %v462 = vunpack.c.h.b16 %v32
  %v463 = vunpack.c.l.b16 %v33
  %v464 = vunpack.c.l.b16 %v34
  %v465 = vunpack.c.h.b16 %v34
  %v466 = vunpack.c.l.b16 %v35
  %v467 = vunpack.c.h.b16 %v35
  %v468 = vunpack.c.l.b16 %v36
  %v469 = vunpack.c.l.b16 %v37
  %v470 = vunpack.c.h.b16 %v37
  %v471 = vunpack.c.l.b16 %v38
  %v472 = vunpack.c.h.b16 %v38
  %v473 = vunpack.c.l.b16 %v39
  %v474 = vunpack.c.l.b16 %v40
  %v475 = vunpack.c.h.b16 %v40
  %v476 = vunpack.c.l.b16 %v41
  %v477 = vunpack.c.h.b16 %v41
  %v478 = vunpack.c.l.b16 %v42
  %v479 = vunpack.c.l.b16 %v43
  %v480 = vunpack.c.h.b16 %v43
  %v481 = vunpack.c.l.b16 %v44
  %v482 = vunpack.c.h.b16 %v44
  %v483 = vunpack.c.l.b16 %v45
  %v484 = vunpack.c.l.b16 %v46
  %v485 = vunpack.c.h.b16 %v46
  %v486 = vunpack.c.l.b16 %v47
  %v487 = vunpack.c.h.b16 %v47
  %v488 = vunpack.c.l.b16 %v48
  %v489 = vunpack.c.l.b16 %v49
  %v490 = vunpack.c.h.b16 %v49
  %v491 = vunpack.c.l.b16 %v50
  %v492 = vunpack.c.h.b16 %v50
  %v493 = vunpack.c.l.b16 %v51
  %v494 = vunpack.c.l.b16 %v52
  %v495 = vunpack.c.h.b16 %v52
  %v496 = vunpack.c.l.b16 %v53
  %v497 = vunpack.c.h.b16 %v53
  %v498 = vunpack.c.l.b16 %v54
  %v499 = vunpack.c.l.b16 %v55
  %v500 = vunpack.c.h.b16 %v55
  %v501 = vunpack.c.l.b16 %v56
  %v502 = vunpack.c.h.b16 %v56
  %v503 = vunpack.c.l.b16 %v57
  %v504 = vunpack.c.l.b16 %v58
  %v505 = vunpack.c.h.b16 %v58
  %v506 = vunpack.c.l.b16 %v59
  %v507 = vunpack.c.h.b16 %v59
  %v508 = vunpack.c.l.b16 %v60
  %v509 = vunpack.c.l.b16 %v61
  %v510 = vunpack.c.h.b16 %v61
  %v511 = vunpack.c.l.b16 %v62
  %v512 = vunpack.c.h.b16 %v62
  %v513 = vunpack.c.l.b16 %v63
  %v514 = vunpack.c.l.b16 %v64
  %v515 = vunpack.c.h.b16 %v64
  %v516 = vunpack.c.l.b16 %v65
  %v517 = vunpack.c.h.b16 %v65
  %v518 = vunpack.c.l.b16 %v66
  %v519 = vunpack.c.l.b16 %v67
  %v520 = vunpack.c.h.b16 %v67
  %v521 = vunpack.c.l.b16 %v68
  %v522 = vunpack.c.h.b16 %v68
  %v523 = vunpack.c.l.b16 %v69
  %v524 = vunpack.c.l.b16 %v70
  %v525 = vunpack.c.h.b16 %v70
  %v526 = vunpack.c.l.b16 %v71
  %v527 = vunpack.c.h.b16 %v71
  %v528 = vunpack.c.l.b16 %v72
  %v529 = vunpack.c.l.b16 %v73
  %v530 = vunpack.c.h.b16 %v73
  %v531 = vunpack.c.l.b16 %v74
  %v532 = vunpack.c.h.b16 %v74
  %v533 = vunpack.c.l.b16 %v75
  %v534 = vunpack.c.l.b16 %v76
  %v535 = vunpack.c.h.b16 %v76
  %v536 = vunpack.c.l.b16 %v77
  %v537 = vunpack.c.h.b16 %v77
  %v538 = vunpack.c.l.b16 %v78
  %v539 = vunpack.c.l.b16 %v79
  %v540 = vunpack.c.h.b16 %v79
  %v541 = vunpack.c.l.b16 %v80
  %v542 = vunpack.c.h.b16 %v80
  %v543 = vunpack.c.l.b16 %v81
  %v544 = vunpack.c.l.b16 %v82
  %v545 = vunpack.c.h.b16 %v82
  %v546 = vunpack.c.l.b16 %v83
  %v547 = vunpack.c.h.b16 %v83
  %v548 = vunpack.c.l.b16 %v84
  %v549 = vunpack.c.l.b16 %v85
  %v550 = vunpack.c.h.b16 %v85
  %v551 = vunpack.c.l.b16 %v86
  %v552 = vunpack.c.h.b16 %v86
  %v553 = vunpack.c.l.b16 %v87
  %v554 = vunpack.c.l.b16 %v88
  %v555 = vunpack.c.h.b16 %v88
  %v556 = vunpack.c.l.b16 %v89
  %v557 = vunpack.c.h.b16 %v89
  %v558 = vunpack.c.l.b16 %v90
  %v559 = vunpack.c.l.b16 %v91
  %v560 = vunpack.c.h.b16 %v91
  %v561 = vunpack.c.l.b16 %v92
  %v562 = vunpack.c.h.b16 %v92
  %v563 = vunpack.c.l.b16 %v93
  %v564 = vunpack.c.l.b16 %v94
  %v565 = vunpack.c.h.b16 %v94
  %v566 = vunpack.c.l.b16 %v95
  %v567 = vunpack.c.h.b16 %v95
  %v568 = vunpack.c.l.b16 %v96
  %v569 = vunpack.c.l.b16 %v97
  %v570 = vunpack.c.h.b16 %v97
  %v571 = vunpack.c.l.b16 %v98
  %v572 = vunpack.c.h.b16 %v98
  %v573 = vunpack.c.l.b16 %v99
  %v574 = vunpack.c.l.b16 %v100
  %v575 = vunpack.c.h.b16 %v100
  %v576 = vunpack.c.l.b16 %v101
  %v577 = vunpack.c.h.b16 %v101
  %v578 = vunpack.c.l.b16 %v102
  %v579 = vunpack.c.l.b16 %v103
  %v580 = vunpack.c.h.b16 %v103
  %v581 = vunpack.c.l.b16 %v104
  %v582 = vunpack.c.h.b16 %v104
  %v583 = vunpack.c.l.b16 %v105
  %v584 = vunpack.c.l.b16 %v106
  %v585 = vunpack.c.h.b16 %v106
  %v586 = vunpack.c.l.b16 %v107
  %v587 = vunpack.c.h.b16 %v107
  %v588 = vunpack.c.l.b16 %v108
  %v589 = vunpack.c.l.b16 %v109
  %v590 = vunpack.c.h.b16 %v109
  %v591 = vunpack.c.l.b16 %v110
  %v592 = vunpack.c.h.b16 %v110
  %v593 = vunpack.c.l.b16 %v111
  %v594 = vunpack.c.l.b16 %v112
  %v595 = vunpack.c.h.b16 %v112
  %v596 = vunpack.c.l.b16 %v113
  %v597 = vunpack.c.h.b16 %v113
  %v598 = vunpack.c.l.b16 %v114
  %v599 = vunpack.c.l.b16 %v115
  %v600 = vunpack.c.h.b16 %v115
  %v601 = vunpack.c.l.b16 %v116
  %v602 = vunpack.c.h.b16 %v116
  %v603 = vunpack.c.l.b16 %v117
  %v604 = vunpack.c.l.b16 %v118
  %v605 = vunpack.c.h.b16 %v118
  %v606 = vunpack.c.l.b16 %v119
  %v607 = vunpack.c.h.b16 %v119
  %v608 = vunpack.c.l.b16 %v120
  %v609 = vunpack.c.l.b16 %v121
  %v610 = vunpack.c.h.b16 %v121
  %v611 = vunpack.c.l.b16 %v122
  %v612 = vunpack.c.h.b16 %v122
  %v613 = vunpack.c.l.b16 %v123
  %v614 = vunpack.c.l.b16 %v124
  %v615 = vunpack.c.h.b16 %v124
  %v616 = vunpack.c.l.b16 %v125
  %v617 = vunpack.c.h.b16 %v125
  %v618 = vunpack.c.l.b16 %v126
  %v619 = vunpack.c.l.b16 %v127
  %v620 = vunpack.c.h.b16 %v127
  %v621 = vunpack.c.l.b16 %v128
  %v622 = vunpack.c.h.b16 %v128
  %v623 = vunpack.c.l.b16 %v129
  %v624 = vunpack.c.l.b16 %v130
  %v625 = vunpack.c.h.b16 %v130
  %v626 = vunpack.c.l.b16 %v131
  %v627 = vunpack.c.h.b16 %v131
  %v628 = vunpack.c.l.b16 %v132
  %v629 = vunpack.c.l.b16 %v133
  %v630 = vunpack.c.h.b16 %v133
  %v631 = vunpack.c.l.b16 %v134
  %v632 = vunpack.c.h.b16 %v134
  %v633 = vunpack.c.l.b16 %v135
  %v634 = vunpack.c.l.b16 %v136
  %v635 = vunpack.c.h.b16 %v136
  %v636 = vunpack.c.l.b16 %v137
  %v637 = vunpack.c.h.b16 %v137
  %v638 = vunpack.c.l.b16 %v138
  %v639 = vunpack.c.l.b16 %v139
  %v640 = vunpack.c.h.b16 %v139
  %v641 = vunpack.c.l.b16 %v140
  %v642 = vunpack.c.h.b16 %v140
  %v643 = vunpack.c.l.b16 %v141
  %v644 = vunpack.c.l.b16 %v142
  %v645 = vunpack.c.h.b16 %v142
  %v646 = vunpack.c.l.b16 %v143
  %v647 = vunpack.c.h.b16 %v143
  %v648 = vunpack.c.l.b16 %v144
  %v649 = vunpack.c.l.b16 %v145
  %v650 = vunpack.c.h.b16 %v145
  %v651 = vunpack.c.l.b16 %v146
  %v652 = vunpack.c.h.b16 %v146
  %v653 = vunpack.c.l.b16 %v147
  %v654 = vunpack.c.l.b16 %v148
  %v655 = vunpack.c.h.b16 %v148
  %v656 = vunpack.c.l.b16 %v149
  %v657 = vunpack.c.h.b16 %v149
  %v658 = vunpack.c.l.b16 %v150
  %v659 = vunpack.c.l.b16 %v151
  %v660 = vunpack.c.h.b16 %v151
  %v661 = vunpack.c.l.b16 %v152
  %v662 = vunpack.c.h.b16 %v152
  %v663 = vunpack.c.l.b16 %v153
  %v664 = vunpack.c.l.b16 %v154
  %v665 = vunpack.c.h.b16 %v154
  %v666 = vunpack.c.l.b16 %v155
  %v667 = vunpack.c.h.b16 %v155
  %v668 = vunpack.c.l.b16 %v156
  %v669 = vunpack.c.l.b16 %v157
  %v670 = vunpack.c.h.b16 %v157
  %v671 = vunpack.c.l.b16 %v158
  %v672 = vunpack.c.h.b16 %v158
  %v673 = vunpack.c.l.b16 %v159
  %v674 = vunpack.c.l.b16 %v160
  %v675 = vunpack.c.h.b16 %v160
  %v676 = vunpack.c.l.b16 %v161
  %v677 = vunpack.c.h.b16 %v161
  %v678 = vunpack.c.l.b16 %v162
  %v679 = vunpack.c.l.b16 %v163
  %v680 = vunpack.c.h.b16 %v163
  %v681 = vunpack.c.l.b16 %v164
  %v682 = vunpack.c.h.b16 %v164
  %v683 = vunpack.c.l.b16 %v165
  %v684 = vunpack.c.l.b16 %v166
  %v685 = vunpack.c.h.b16 %v166
  %v686 = vunpack.c.l.b16 %v167
  %v687 = vunpack.c.h.b16 %v167
  %v688 = vunpack.c.l.b16 %v168
  %v689 = vunpack.c.l.b16 %v169
  %v690 = vunpack.c.h.b16 %v169
  %v691 = vunpack.c.l.b16 %v170
  %v692 = vunpack.c.h.b16 %v170
  %v693 = vunpack.c.l.b16 %v171
  %v694 = vunpack.c.l.b16 %v172
  %v695 = vunpack.c.h.b16 %v172
  %v696 = vunpack.c.l.b16 %v173
  %v697 = vunpack.c.h.b16 %v173
  %v698 = vunpack.c.l.b16 %v174
  %v699 = vunpack.c.l.b16 %v175
  %v700 = vunpack.c.h.b16 %v175
  %v701 = vunpack.c.l.b16 %v176
  %v702 = vunpack.c.h.b16 %v176
  %v703 = vunpack.c.l.b16 %v177
  %v704 = vunpack.c.l.b16 %v178
  %v705 = vunpack.c.h.b16 %v178
  %v706 = vunpack.c.l.b16 %v179
  %v707 = vunpack.c.h.b16 %v179
  %v708 = vunpack.c.l.b16 %v180
  %v709 = vunpack.c.l.b16 %v181
  %v710 = vunpack.c.h.b16 %v181
  %v711 = vunpack.c.l.b16 %v182
  %v712 = vunpack.c.h.b16 %v182
  %v713 = vunpack.c.l.b16 %v183
  %v714 = vunpack.c.l.b16 %v184
  %v715 = vunpack.c.h.b16 %v184
  %v716 = vunpack.c.l.b16 %v185
  %v717 = vunpack.c.h.b16 %v185
  %v718 = vunpack.c.l.b16 %v186
  %v719 = vunpack.c.l.b16 %v187
  %v720 = vunpack.c.h.b16 %v187
  %v721 = vunpack.c.l.b16 %v188
  %v722 = vunpack.c.h.b16 %v188
  %v723 = vunpack.c.l.b16 %v189
  %v724 = vunpack.c.l.b16 %v190
  %v725 = vunpack.c.h.b16 %v190
  %v726 = vunpack.c.l.b16 %v191
  %v727 = vunpack.c.h.b16 %v191
  %v728 = vunpack.c.l.b16 %v192
  %v729 = vunpack.c.l.b16 %v193
  %v730 = vunpack.c.h.b16 %v193
  %v731 = vunpack.c.l.b16 %v194
  %v732 = vunpack.c.h.b16 %v194
  %v733 = vunpack.c.l.b16 %v195
  %v734 = vunpack.c.l.b16 %v196
  %v735 = vunpack.c.h.b16 %v196
  %v736 = vunpack.c.l.b16 %v197
  %v737 = vunpack.c.h.b16 %v197
  %v738 = vunpack.c.l.b16 %v198
  %v739 = vunpack.c.l.b16 %v199
  %v740 = vunpack.c.h.b16 %v199
  %v741 = vunpack.c.l.b16 %v200
  %v742 = vunpack.c.h.b16 %v200
  %v743 = vunpack.c.l.b16 %v201
  %v744 = vunpack.c.l.b16 %v202
  %v745 = vunpack.c.h.b16 %v202
  %v746 = vunpack.c.l.b16 %v203
  %v747 = vunpack.c.h.b16 %v203
  %v748 = vunpack.c.l.b16 %v204
  %v749 = vunpack.c.l.b16 %v205
  %v750 = vunpack.c.h.b16 %v205
  %v751 = vunpack.c.l.b16 %v206
  %v752 = vunpack.c.h.b16 %v206
  %v753 = vunpack.c.l.b16 %v207
  %v754 = vunpack.c.l.b16 %v208
  %v755 = vunpack.c.h.b16 %v208
  %v756 = vunpack.c.l.b16 %v209
  %v757 = vunpack.c.h.b16 %v209
  %v758 = vunpack.c.l.b16 %v210
  %v759 = vunpack.c.l.b16 %v211
  %v760 = vunpack.c.h.b16 %v211
  %v761 = vunpack.c.l.b16 %v212
  %v762 = vunpack.c.h.b16 %v212
  %v763 = vunpack.c.l.b16 %v213
  %v764 = vunpack.c.l.b16 %v214
  %v765 = vunpack.c.h.b16 %v214
  %v766 = vunpack.c.l.b16 %v215
  %v767 = vunpack.c.h.b16 %v215
  %v768 = vunpack.c.l.b16 %v216
  %v769 = vpack.c.b16 %v454, %v449
  %v770 = vpack.c.b16 %v455, %v450
  %v771 = vpack.c.b16 %v456, %v451
  %v772 = vpack.c.b16 %v457, %v452
  %v773 = vpack.c.b16 %v458, %v453
  %v774 = vpack.c.b16 %v464, %v459
  %v775 = vpack.c.b16 %v465, %v460
  %v776 = vpack.c.b16 %v466, %v461
  %v777 = vpack.c.b16 %v467, %v462
  %v778 = vpack.c.b16 %v468, %v463
  %v779 = vpack.c.b16 %v474, %v469
  %v780 = vpack.c.b16 %v475, %v470
  %v781 = vpack.c.b16 %v476, %v471
  %v782 = vpack.c.b16 %v477, %v472
  %v783 = vpack.c.b16 %v478, %v473
  %v784 = vpack.c.b16 %v484, %v479
  %v785 = vpack.c.b16 %v485, %v480
  %v786 = vpack.c.b16 %v486, %v481
  %v787 = vpack.c.b16 %v487, %v482
  %v788 = vpack.c.b16 %v488, %v483
  %v789 = vpack.c.b16 %v494, %v489
  %v790 = vpack.c.b16 %v495, %v490
  %v791 = vpack.c.b16 %v496, %v491
  %v792 = vpack.c.b16 %v497, %v492
  %v793 = vpack.c.b16 %v498, %v493
  %v794 = vpack.c.b16 %v504, %v499
  %v795 = vpack.c.b16 %v505, %v500
  %v796 = vpack.c.b16 %v506, %v501
  %v797 = vpack.c.b16 %v507, %v502
  %v798 = vpack.c.b16 %v508, %v503
  %v799 = vpack.c.b16 %v514, %v509
  %v800 = vpack.c.b16 %v515, %v510
  %v801 = vpack.c.b16 %v516, %v511
  %v802 = vpack.c.b16 %v517, %v512
  %v803 = vpack.c.b16 %v518, %v513
  %v804 = vpack.c.b16 %v524, %v519
  %v805 = vpack.c.b16 %v525, %v520
  %v806 = vpack.c.b16 %v526, %v521
  %v807 = vpack.c.b16 %v527, %v522
  %v808 = vpack.c.b16 %v528, %v523
  %v809 = vpack.c.b16 %v534, %v529
  %v810 = vpack.c.b16 %v535, %v530
  %v811 = vpack.c.b16 %v536, %v531
  %v812 = vpack.c.b16 %v537, %v532
  %v813 = vpack.c.b16 %v538, %v533
  %v814 = vpack.c.b16 %v544, %v539
  %v815 = vpack.c.b16 %v545, %v540
  %v816 = vpack.c.b16 %v546, %v541
  %v817 = vpack.c.b16 %v547, %v542
  %v818 = vpack.c.b16 %v548, %v543
  %v819 = vpack.c.b16 %v554, %v549
  %v820 = vpack.c.b16 %v555, %v550
  %v821 = vpack.c.b16 %v556, %v551
  %v822 = vpack.c.b16 %v557, %v552
  %v823 = vpack.c.b16 %v558, %v553
  %v824 = vpack.c.b16 %v564, %v559
  %v825 = vpack.c.b16 %v565, %v560
  %v826 = vpack.c.b16 %v566, %v561
  %v827 = vpack.c.b16 %v567, %v562
  %v828 = vpack.c.b16 %v568, %v563
  %v829 = vpack.c.b16 %v574, %v569
  %v830 = vpack.c.b16 %v575, %v570
  %v831 = vpack.c.b16 %v576, %v571
  %v832 = vpack.c.b16 %v577, %v572
  %v833 = vpack.c.b16 %v578, %v573
  %v834 = vpack.c.b16 %v584, %v579
  %v835 = vpack.c.b16 %v585, %v580
  %v836 = vpack.c.b16 %v586, %v581
  %v837 = vpack.c.b16 %v587, %v582
  %v838 = vpack.c.b16 %v588, %v583
  %v839 = vpack.c.b16 %v594, %v589
  %v840 = vpack.c.b16 %v595, %v590
  %v841 = vpack.c.b16 %v596, %v591
  %v842 = vpack.c.b16 %v597, %v592
  %v843 = vpack.c.b16 %v598, %v593
  %v844 = vpack.c.b16 %v604, %v599
  %v845 = vpack.c.b16 %v605, %v600
  %v846 = vpack.c.b16 %v606, %v601
  %v847 = vpack.c.b16 %v607, %v602
  %v848 = vpack.c.b16 %v608, %v603
  %v849 = vpack.c.b16 %v614, %v609
  %v850 = vpack.c.b16 %v615, %v610
  %v851 = vpack.c.b16 %v616, %v611
  %v852 = vpack.c.b16 %v617, %v612
  %v853 = vpack.c.b16 %v618, %v613
  %v854 = vpack.c.b16 %v624, %v619
  %v855 = vpack.c.b16 %v625, %v620
  %v856 = vpack.c.b16 %v626, %v621
  %v857 = vpack.c.b16 %v627, %v622
  %v858 = vpack.c.b16 %v628, %v623
  %v859 = vpack.c.b16 %v634, %v629
  %v860 = vpack.c.b16 %v635, %v630
  %v861 = vpack.c.b16 %v636, %v631
  %v862 = vpack.c.b16 %v637, %v632
  %v863 = vpack.c.b16 %v638, %v633
  %v864 = vpack.c.b16 %v644, %v639
  %v865 = vpack.c.b16 %v645, %v640
  %v866 = vpack.c.b16 %v646, %v641
  %v867 = vpack.c.b16 %v647, %v642
  %v868 = vpack.c.b16 %v648, %v643
  %v869 = vpack.c.b16 %v654, %v649
  %v870 = vpack.c.b16 %v655, %v650
  %v871 = vpack.c.b16 %v656, %v651
  %v872 = vpack.c.b16 %v657, %v652
  %v873 = vpack.c.b16 %v658, %v653
  %v874 = vpack.c.b16 %v664, %v659
  %v875 = vpack.c.b16 %v665, %v660
  %v876 = vpack.c.b16 %v666, %v661
  %v877 = vpack.c.b16 %v667, %v662
  %v878 = vpack.c.b16 %v668, %v663
  %v879 = vpack.c.b16 %v674, %v669
  %v880 = vpack.c.b16 %v675, %v670
  %v881 = vpack.c.b16 %v676, %v671
  %v882 = vpack.c.b16 %v677, %v672
  %v883 = vpack.c.b16 %v678, %v673
  %v884 = vpack.c.b16 %v684, %v679
  %v885 = vpack.c.b16 %v685, %v680
  %v886 = vpack.c.b16 %v686, %v681
  %v887 = vpack.c.b16 %v687, %v682
  %v888 = vpack.c.b16 %v688, %v683
  %v889 = vpack.c.b16 %v694, %v689
  %v890 = vpack.c.b16 %v695, %v690
  %v891 = vpack.c.b16 %v696, %v691
  %v892 = vpack.c.b16 %v697, %v692
  %v893 = vpack.c.b16 %v698, %v693
  %v894 = vpack.c.b16 %v704, %v699
  %v895 = vpack.c.b16 %v705, %v700
  %v896 = vpack.c.b16 %v706, %v701
  %v897 = vpack.c.b16 %v707, %v702
  %v898 = vpack.c.b16 %v708, %v703
  %v899 = vpack.c.b16 %v714, %v709
  %v900 = vpack.c.b16 %v715, %v710
  %v901 = vpack.c.b16 %v716, %v711
  %v902 = vpack.c.b16 %v717, %v712
  %v903 = vpack.c.b16 %v718, %v713
  %v904 = vpack.c.b16 %v724, %v719
  %v905 = vpack.c.b16 %v725, %v720
  %v906 = vpack.c.b16 %v726, %v721
  %v907 = vpack.c.b16 %v727, %v722
  %v908 = vpack.c.b16 %v728, %v723
  %v909 = vpack.c.b16 %v734, %v729
  %v910 = vpack.c.b16 %v735, %v730
  %v911 = vpack.c.b16 %v736, %v731
  %v912 = vpack.c.b16 %v737, %v732
  %v913 = vpack.c.b16 %v738, %v733
  %v914 = vpack.c.b16 %v744, %v739
  %v915 = vpack.c.b16 %v745, %v740
  %v916 = vpack.c.b16 %v746, %v741
  %v917 = vpack.c.b16 %v747, %v742
  %v918 = vpack.c.b16 %v748, %v743
  %v919 = vpack.c.b16 %v754, %v749
  %v920 = vpack.c.b16 %v755, %v750
  %v921 = vpack.c.b16 %v756, %v751
  %v922 = vpack.c.b16 %v757, %v752
  %v923 = vpack.c.b16 %v758, %v753
  %v924 = vpack.c.b16 %v764, %v759
  %v925 = vpack.c.b16 %v765, %v760
  %v926 = vpack.c.b16 %v766, %v761
  %v927 = vpack.c.b16 %v767, %v762
  %v928 = vpack.c.b16 %v768, %v763
  %1089 = vmatpush.bf16.msra.mxu0 %v804
  %1090 = vmatpush.bf16.msra.mxu0 %v799
  %1091 = vmatpush.bf16.msra.mxu0 %v794
  %1092 = vmatpush.bf16.msra.mxu0 %v789
  %1093 = vmatpush.bf16.msra.mxu0 %v784
  %1094 = vmatpush.bf16.msra.mxu0 %v779
  %1095 = vmatpush.bf16.msra.mxu0 %v774
  %1096 = vmatpush.bf16.msra.mxu0 %v769
  %1097 = vmatmul.bf16.gmra.mxu0 %v241
  %v1098 = vpop.f32.mrf.mxu0
  %v1099 = vadd.f32 0.0, %v1098
  %v1100 = vpop.f32.mrf.mxu0
  %v1101 = vadd.f32 0.0, %v1100
  %1102 = vmatmul.bf16.gmra.mxu0 %v245
  %v1103 = vpop.f32.mrf.mxu0
  %v1104 = vadd.f32 0.0, %v1103
  %v1105 = vpop.f32.mrf.mxu0
  %v1106 = vadd.f32 0.0, %v1105
  %1107 = vdwg.mxu0
  %1108 = vmatpush.bf16.msra.mxu0 %v844
  %1109 = vmatpush.bf16.msra.mxu0 %v839
  %1110 = vmatpush.bf16.msra.mxu0 %v834
  %1111 = vmatpush.bf16.msra.mxu0 %v829
  %1112 = vmatpush.bf16.msra.mxu0 %v824
  %1113 = vmatpush.bf16.msra.mxu0 %v819
  %1114 = vmatpush.bf16.msra.mxu0 %v814
  %1115 = vmatpush.bf16.msra.mxu0 %v809
  %1116 = vmatmul.bf16.gmra.mxu0 %v242
  %v1117 = vpop.f32.mrf.mxu0
  %v1118 = vadd.f32 %v1099, %v1117
  %v1119 = vpop.f32.mrf.mxu0
  %v1120 = vadd.f32 %v1101, %v1119
  %1121 = vmatmul.bf16.gmra.mxu0 %v246
  %v1122 = vpop.f32.mrf.mxu0
  %v1123 = vadd.f32 %v1104, %v1122
  %v1124 = vpop.f32.mrf.mxu0
  %v1125 = vadd.f32 %v1106, %v1124
  %1126 = vdwg.mxu0
  %1127 = vmatpush.bf16.msra.mxu0 %v884
  %1128 = vmatpush.bf16.msra.mxu0 %v879
  %1129 = vmatpush.bf16.msra.mxu0 %v874
  %1130 = vmatpush.bf16.msra.mxu0 %v869
  %1131 = vmatpush.bf16.msra.mxu0 %v864
  %1132 = vmatpush.bf16.msra.mxu0 %v859
  %1133 = vmatpush.bf16.msra.mxu0 %v854
  %1134 = vmatpush.bf16.msra.mxu0 %v849
  %1135 = vmatmul.bf16.gmra.mxu0 %v243
  %v1136 = vpop.f32.mrf.mxu0
  %v1137 = vadd.f32 %v1118, %v1136
  %v1138 = vpop.f32.mrf.mxu0
  %v1139 = vadd.f32 %v1120, %v1138
  %1140 = vmatmul.bf16.gmra.mxu0 %v247
  %v1141 = vpop.f32.mrf.mxu0
  %v1142 = vadd.f32 %v1123, %v1141
  %v1143 = vpop.f32.mrf.mxu0
  %v1144 = vadd.f32 %v1125, %v1143
  %1145 = vdwg.mxu0
  %1146 = vmatpush.bf16.msra.mxu0 %v924
  %1147 = vmatpush.bf16.msra.mxu0 %v919
  %1148 = vmatpush.bf16.msra.mxu0 %v914
  %1149 = vmatpush.bf16.msra.mxu0 %v909
  %1150 = vmatpush.bf16.msra.mxu0 %v904
  %1151 = vmatpush.bf16.msra.mxu0 %v899
  %1152 = vmatpush.bf16.msra.mxu0 %v894
  %1153 = vmatpush.bf16.msra.mxu0 %v889
  %1154 = vmatmul.bf16.gmra.mxu0 %v244
  %v1155 = vpop.f32.mrf.mxu0
  %v1156 = vadd.f32 %v1137, %v1155
  %v1157 = vpop.f32.mrf.mxu0
  %v1158 = vadd.f32 %v1139, %v1157
  %1159 = vmatmul.bf16.gmra.mxu0 %v248
  %v1160 = vpop.f32.mrf.mxu0
  %v1161 = vadd.f32 %v1142, %v1160
  %v1162 = vpop.f32.mrf.mxu0
  %v1163 = vadd.f32 %v1144, %v1162
  %1164 = vdwg.mxu0
  %1165 = vmatpush.bf16.msra.mxu0 %v805
  %1166 = vmatpush.bf16.msra.mxu0 %v800
  %1167 = vmatpush.bf16.msra.mxu0 %v795
  %1168 = vmatpush.bf16.msra.mxu0 %v790
  %1169 = vmatpush.bf16.msra.mxu0 %v785
  %1170 = vmatpush.bf16.msra.mxu0 %v780
  %1171 = vmatpush.bf16.msra.mxu0 %v775
  %1172 = vmatpush.bf16.msra.mxu0 %v770
  %1173 = vmatmul.bf16.gmra.mxu0 %v241
  %v1174 = vpop.f32.mrf.mxu0
  %v1175 = vadd.f32 0.0, %v1174
  %v1176 = vpop.f32.mrf.mxu0
  %v1177 = vadd.f32 0.0, %v1176
  %1178 = vmatmul.bf16.gmra.mxu0 %v245
  %v1179 = vpop.f32.mrf.mxu0
  %v1180 = vadd.f32 0.0, %v1179
  %v1181 = vpop.f32.mrf.mxu0
  %v1182 = vadd.f32 0.0, %v1181
  %1183 = vdwg.mxu0
  %1184 = vmatpush.bf16.msra.mxu0 %v845
  %1185 = vmatpush.bf16.msra.mxu0 %v840
  %1186 = vmatpush.bf16.msra.mxu0 %v835
  %1187 = vmatpush.bf16.msra.mxu0 %v830
  %1188 = vmatpush.bf16.msra.mxu0 %v825
  %1189 = vmatpush.bf16.msra.mxu0 %v820
  %1190 = vmatpush.bf16.msra.mxu0 %v815
  %1191 = vmatpush.bf16.msra.mxu0 %v810
  %1192 = vmatmul.bf16.gmra.mxu0 %v242
  %v1193 = vpop.f32.mrf.mxu0
  %v1194 = vadd.f32 %v1175, %v1193
  %v1195 = vpop.f32.mrf.mxu0
  %v1196 = vadd.f32 %v1177, %v1195
  %1197 = vmatmul.bf16.gmra.mxu0 %v246
  %v1198 = vpop.f32.mrf.mxu0
  %v1199 = vadd.f32 %v1180, %v1198
  %v1200 = vpop.f32.mrf.mxu0
  %v1201 = vadd.f32 %v1182, %v1200
  %1202 = vdwg.mxu0
  %1203 = vmatpush.bf16.msra.mxu0 %v885
  %1204 = vmatpush.bf16.msra.mxu0 %v880
  %1205 = vmatpush.bf16.msra.mxu0 %v875
  %1206 = vmatpush.bf16.msra.mxu0 %v870
  %1207 = vmatpush.bf16.msra.mxu0 %v865
  %1208 = vmatpush.bf16.msra.mxu0 %v860
  %1209 = vmatpush.bf16.msra.mxu0 %v855
  %1210 = vmatpush.bf16.msra.mxu0 %v850
  %1211 = vmatmul.bf16.gmra.mxu0 %v243
  %v1212 = vpop.f32.mrf.mxu0
  %v1213 = vadd.f32 %v1194, %v1212
  %v1214 = vpop.f32.mrf.mxu0
  %v1215 = vadd.f32 %v1196, %v1214
  %1216 = vmatmul.bf16.gmra.mxu0 %v247
  %v1217 = vpop.f32.mrf.mxu0
  %v1218 = vadd.f32 %v1199, %v1217
  %v1219 = vpop.f32.mrf.mxu0
  %v1220 = vadd.f32 %v1201, %v1219
  %1221 = vdwg.mxu0
  %1222 = vmatpush.bf16.msra.mxu0 %v925
  %1223 = vmatpush.bf16.msra.mxu0 %v920
  %1224 = vmatpush.bf16.msra.mxu0 %v915
  %1225 = vmatpush.bf16.msra.mxu0 %v910
  %1226 = vmatpush.bf16.msra.mxu0 %v905
  %1227 = vmatpush.bf16.msra.mxu0 %v900
  %1228 = vmatpush.bf16.msra.mxu0 %v895
  %1229 = vmatpush.bf16.msra.mxu0 %v890
  %1230 = vmatmul.bf16.gmra.mxu0 %v244
  %v1231 = vpop.f32.mrf.mxu0
  %v1232 = vadd.f32 %v1213, %v1231
  %v1233 = vpop.f32.mrf.mxu0
  %v1234 = vadd.f32 %v1215, %v1233
  %1235 = vmatmul.bf16.gmra.mxu0 %v248
  %v1236 = vpop.f32.mrf.mxu0
  %v1237 = vadd.f32 %v1218, %v1236
  %v1238 = vpop.f32.mrf.mxu0
  %v1239 = vadd.f32 %v1220, %v1238
  %1240 = vdwg.mxu0
  %1241 = vmatpush.bf16.msra.mxu0 %v806
  %1242 = vmatpush.bf16.msra.mxu0 %v801
  %1243 = vmatpush.bf16.msra.mxu0 %v796
  %1244 = vmatpush.bf16.msra.mxu0 %v791
  %1245 = vmatpush.bf16.msra.mxu0 %v786
  %1246 = vmatpush.bf16.msra.mxu0 %v781
  %1247 = vmatpush.bf16.msra.mxu0 %v776
  %1248 = vmatpush.bf16.msra.mxu0 %v771
  %1249 = vmatmul.bf16.gmra.mxu0 %v241
  %v1250 = vpop.f32.mrf.mxu0
  %v1251 = vadd.f32 0.0, %v1250
  %v1252 = vpop.f32.mrf.mxu0
  %v1253 = vadd.f32 0.0, %v1252
  %1254 = vmatmul.bf16.gmra.mxu0 %v245
  %v1255 = vpop.f32.mrf.mxu0
  %v1256 = vadd.f32 0.0, %v1255
  %v1257 = vpop.f32.mrf.mxu0
  %v1258 = vadd.f32 0.0, %v1257
  %1259 = vdwg.mxu0
  %1260 = vmatpush.bf16.msra.mxu0 %v846
  %1261 = vmatpush.bf16.msra.mxu0 %v841
  %1262 = vmatpush.bf16.msra.mxu0 %v836
  %1263 = vmatpush.bf16.msra.mxu0 %v831
  %1264 = vmatpush.bf16.msra.mxu0 %v826
  %1265 = vmatpush.bf16.msra.mxu0 %v821
  %1266 = vmatpush.bf16.msra.mxu0 %v816
  %1267 = vmatpush.bf16.msra.mxu0 %v811
  %1268 = vmatmul.bf16.gmra.mxu0 %v242
  %v1269 = vpop.f32.mrf.mxu0
  %v1270 = vadd.f32 %v1251, %v1269
  %v1271 = vpop.f32.mrf.mxu0
  %v1272 = vadd.f32 %v1253, %v1271
  %1273 = vmatmul.bf16.gmra.mxu0 %v246
  %v1274 = vpop.f32.mrf.mxu0
  %v1275 = vadd.f32 %v1256, %v1274
  %v1276 = vpop.f32.mrf.mxu0
  %v1277 = vadd.f32 %v1258, %v1276
  %1278 = vdwg.mxu0
  %1279 = vmatpush.bf16.msra.mxu0 %v886
  %1280 = vmatpush.bf16.msra.mxu0 %v881
  %1281 = vmatpush.bf16.msra.mxu0 %v876
  %1282 = vmatpush.bf16.msra.mxu0 %v871
  %1283 = vmatpush.bf16.msra.mxu0 %v866
  %1284 = vmatpush.bf16.msra.mxu0 %v861
  %1285 = vmatpush.bf16.msra.mxu0 %v856
  %1286 = vmatpush.bf16.msra.mxu0 %v851
  %1287 = vmatmul.bf16.gmra.mxu0 %v243
  %v1288 = vpop.f32.mrf.mxu0
  %v1289 = vadd.f32 %v1270, %v1288
  %v1290 = vpop.f32.mrf.mxu0
  %v1291 = vadd.f32 %v1272, %v1290
  %1292 = vmatmul.bf16.gmra.mxu0 %v247
  %v1293 = vpop.f32.mrf.mxu0
  %v1294 = vadd.f32 %v1275, %v1293
  %v1295 = vpop.f32.mrf.mxu0
  %v1296 = vadd.f32 %v1277, %v1295
  %1297 = vdwg.mxu0
  %1298 = vmatpush.bf16.msra.mxu0 %v926
  %1299 = vmatpush.bf16.msra.mxu0 %v921
  %1300 = vmatpush.bf16.msra.mxu0 %v916
  %1301 = vmatpush.bf16.msra.mxu0 %v911
  %1302 = vmatpush.bf16.msra.mxu0 %v906
  %1303 = vmatpush.bf16.msra.mxu0 %v901
  %1304 = vmatpush.bf16.msra.mxu0 %v896
  %1305 = vmatpush.bf16.msra.mxu0 %v891
  %1306 = vmatmul.bf16.gmra.mxu0 %v244
  %v1307 = vpop.f32.mrf.mxu0
  %v1308 = vadd.f32 %v1289, %v1307
  %v1309 = vpop.f32.mrf.mxu0
  %v1310 = vadd.f32 %v1291, %v1309
  %1311 = vmatmul.bf16.gmra.mxu0 %v248
  %v1312 = vpop.f32.mrf.mxu0
  %v1313 = vadd.f32 %v1294, %v1312
  %v1314 = vpop.f32.mrf.mxu0
  %v1315 = vadd.f32 %v1296, %v1314
  %1316 = vdwg.mxu0
  %1317 = vmatpush.bf16.msra.mxu0 %v807
  %1318 = vmatpush.bf16.msra.mxu0 %v802
  %1319 = vmatpush.bf16.msra.mxu0 %v797
  %1320 = vmatpush.bf16.msra.mxu0 %v792
  %1321 = vmatpush.bf16.msra.mxu0 %v787
  %1322 = vmatpush.bf16.msra.mxu0 %v782
  %1323 = vmatpush.bf16.msra.mxu0 %v777
  %1324 = vmatpush.bf16.msra.mxu0 %v772
  %1325 = vmatmul.bf16.gmra.mxu0 %v241
  %v1326 = vpop.f32.mrf.mxu0
  %v1327 = vadd.f32 0.0, %v1326
  %v1328 = vpop.f32.mrf.mxu0
  %v1329 = vadd.f32 0.0, %v1328
  %1330 = vmatmul.bf16.gmra.mxu0 %v245
  %v1331 = vpop.f32.mrf.mxu0
  %v1332 = vadd.f32 0.0, %v1331
  %v1333 = vpop.f32.mrf.mxu0
  %v1334 = vadd.f32 0.0, %v1333
  %1335 = vdwg.mxu0
  %1336 = vmatpush.bf16.msra.mxu0 %v847
  %1337 = vmatpush.bf16.msra.mxu0 %v842
  %1338 = vmatpush.bf16.msra.mxu0 %v837
  %1339 = vmatpush.bf16.msra.mxu0 %v832
  %1340 = vmatpush.bf16.msra.mxu0 %v827
  %1341 = vmatpush.bf16.msra.mxu0 %v822
  %1342 = vmatpush.bf16.msra.mxu0 %v817
  %1343 = vmatpush.bf16.msra.mxu0 %v812
  %1344 = vmatmul.bf16.gmra.mxu0 %v242
  %v1345 = vpop.f32.mrf.mxu0
  %v1346 = vadd.f32 %v1327, %v1345
  %v1347 = vpop.f32.mrf.mxu0
  %v1348 = vadd.f32 %v1329, %v1347
  %1349 = vmatmul.bf16.gmra.mxu0 %v246
  %v1350 = vpop.f32.mrf.mxu0
  %v1351 = vadd.f32 %v1332, %v1350
  %v1352 = vpop.f32.mrf.mxu0
  %v1353 = vadd.f32 %v1334, %v1352
  %1354 = vdwg.mxu0
  %1355 = vmatpush.bf16.msra.mxu0 %v887
  %1356 = vmatpush.bf16.msra.mxu0 %v882
  %1357 = vmatpush.bf16.msra.mxu0 %v877
  %1358 = vmatpush.bf16.msra.mxu0 %v872
  %1359 = vmatpush.bf16.msra.mxu0 %v867
  %1360 = vmatpush.bf16.msra.mxu0 %v862
  %1361 = vmatpush.bf16.msra.mxu0 %v857
  %1362 = vmatpush.bf16.msra.mxu0 %v852
  %1363 = vmatmul.bf16.gmra.mxu0 %v243
  %v1364 = vpop.f32.mrf.mxu0
  %v1365 = vadd.f32 %v1346, %v1364
  %v1366 = vpop.f32.mrf.mxu0
  %v1367 = vadd.f32 %v1348, %v1366
  %1368 = vmatmul.bf16.gmra.mxu0 %v247
  %v1369 = vpop.f32.mrf.mxu0
  %v1370 = vadd.f32 %v1351, %v1369
  %v1371 = vpop.f32.mrf.mxu0
  %v1372 = vadd.f32 %v1353, %v1371
  %1373 = vdwg.mxu0
  %1374 = vmatpush.bf16.msra.mxu0 %v927
  %1375 = vmatpush.bf16.msra.mxu0 %v922
  %1376 = vmatpush.bf16.msra.mxu0 %v917
  %1377 = vmatpush.bf16.msra.mxu0 %v912
  %1378 = vmatpush.bf16.msra.mxu0 %v907
  %1379 = vmatpush.bf16.msra.mxu0 %v902
  %1380 = vmatpush.bf16.msra.mxu0 %v897
  %1381 = vmatpush.bf16.msra.mxu0 %v892
  %1382 = vmatmul.bf16.gmra.mxu0 %v244
  %v1383 = vpop.f32.mrf.mxu0
  %v1384 = vadd.f32 %v1365, %v1383
  %v1385 = vpop.f32.mrf.mxu0
  %v1386 = vadd.f32 %v1367, %v1385
  %1387 = vmatmul.bf16.gmra.mxu0 %v248
  %v1388 = vpop.f32.mrf.mxu0
  %v1389 = vadd.f32 %v1370, %v1388
  %v1390 = vpop.f32.mrf.mxu0
  %v1391 = vadd.f32 %v1372, %v1390
  %1392 = vdwg.mxu0
  %1393 = vmatpush.bf16.msra.mxu0 %v808
  %1394 = vmatpush.bf16.msra.mxu0 %v803
  %1395 = vmatpush.bf16.msra.mxu0 %v798
  %1396 = vmatpush.bf16.msra.mxu0 %v793
  %1397 = vmatpush.bf16.msra.mxu0 %v788
  %1398 = vmatpush.bf16.msra.mxu0 %v783
  %1399 = vmatpush.bf16.msra.mxu0 %v778
  %1400 = vmatpush.bf16.msra.mxu0 %v773
  %1401 = vmatmul.bf16.gmra.mxu0 %v241
  %v1402 = vpop.f32.mrf.mxu0
  %v1403 = vadd.f32 0.0, %v1402
  %v1404 = vpop.f32.mrf.mxu0
  %v1405 = vadd.f32 0.0, %v1404
  %1406 = vmatmul.bf16.gmra.mxu0 %v245
  %v1407 = vpop.f32.mrf.mxu0
  %v1408 = vadd.f32 0.0, %v1407
  %v1409 = vpop.f32.mrf.mxu0
  %v1410 = vadd.f32 0.0, %v1409
  %1411 = vdwg.mxu0
  %1412 = vmatpush.bf16.msra.mxu0 %v848
  %1413 = vmatpush.bf16.msra.mxu0 %v843
  %1414 = vmatpush.bf16.msra.mxu0 %v838
  %1415 = vmatpush.bf16.msra.mxu0 %v833
  %1416 = vmatpush.bf16.msra.mxu0 %v828
  %1417 = vmatpush.bf16.msra.mxu0 %v823
  %1418 = vmatpush.bf16.msra.mxu0 %v818
  %1419 = vmatpush.bf16.msra.mxu0 %v813
  %1420 = vmatmul.bf16.gmra.mxu0 %v242
  %v1421 = vpop.f32.mrf.mxu0
  %v1422 = vadd.f32 %v1403, %v1421
  %v1423 = vpop.f32.mrf.mxu0
  %v1424 = vadd.f32 %v1405, %v1423
  %1425 = vmatmul.bf16.gmra.mxu0 %v246
  %v1426 = vpop.f32.mrf.mxu0
  %v1427 = vadd.f32 %v1408, %v1426
  %v1428 = vpop.f32.mrf.mxu0
  %v1429 = vadd.f32 %v1410, %v1428
  %1430 = vdwg.mxu0
  %1431 = vmatpush.bf16.msra.mxu0 %v888
  %1432 = vmatpush.bf16.msra.mxu0 %v883
  %1433 = vmatpush.bf16.msra.mxu0 %v878
  %1434 = vmatpush.bf16.msra.mxu0 %v873
  %1435 = vmatpush.bf16.msra.mxu0 %v868
  %1436 = vmatpush.bf16.msra.mxu0 %v863
  %1437 = vmatpush.bf16.msra.mxu0 %v858
  %1438 = vmatpush.bf16.msra.mxu0 %v853
  %1439 = vmatmul.bf16.gmra.mxu0 %v243
  %v1440 = vpop.f32.mrf.mxu0
  %v1441 = vadd.f32 %v1422, %v1440
  %v1442 = vpop.f32.mrf.mxu0
  %v1443 = vadd.f32 %v1424, %v1442
  %1444 = vmatmul.bf16.gmra.mxu0 %v247
  %v1445 = vpop.f32.mrf.mxu0
  %v1446 = vadd.f32 %v1427, %v1445
  %v1447 = vpop.f32.mrf.mxu0
  %v1448 = vadd.f32 %v1429, %v1447
  %1449 = vdwg.mxu0
  %1450 = vmatpush.bf16.msra.mxu0 %v928
  %1451 = vmatpush.bf16.msra.mxu0 %v923
  %1452 = vmatpush.bf16.msra.mxu0 %v918
  %1453 = vmatpush.bf16.msra.mxu0 %v913
  %1454 = vmatpush.bf16.msra.mxu0 %v908
  %1455 = vmatpush.bf16.msra.mxu0 %v903
  %1456 = vmatpush.bf16.msra.mxu0 %v898
  %1457 = vmatpush.bf16.msra.mxu0 %v893
  %1458 = vmatmul.bf16.gmra.mxu0 %v244
  %v1459 = vpop.f32.mrf.mxu0
  %v1460 = vadd.f32 %v1441, %v1459
  %v1461 = vpop.f32.mrf.mxu0
  %v1462 = vadd.f32 %v1443, %v1461
  %1463 = vmatmul.bf16.gmra.mxu0 %v248
  %v1464 = vpop.f32.mrf.mxu0
  %v1465 = vadd.f32 %v1446, %v1464
  %v1466 = vpop.f32.mrf.mxu0
  %v1467 = vadd.f32 %v1448, %v1466
  %1468 = vdwg.mxu0
  %v1469 = vadd.f32 %v1156, %v1232
  %v1470 = vadd.f32 %v1469, %v1308
  %v1471 = vadd.f32 %v1470, %v1384
  %v1472 = vadd.f32 %v1471, %v1460
  %1473 = vadd.xlane.f32.xlu0 %v1472
  %v1474 = vpop.xlane.xlu0 %1473
  %v1475 = vadd.f32 %v1158, %v1234
  %v1476 = vadd.f32 %v1475, %v1310
  %v1477 = vadd.f32 %v1476, %v1386
  %v1478 = vadd.f32 %v1477, %v1462
  %1479 = vadd.xlane.f32.xlu0 %v1478
  %v1480 = vpop.xlane.xlu0 %1479
  %v1481 = vadd.f32 %v1161, %v1237
  %v1482 = vadd.f32 %v1481, %v1313
  %v1483 = vadd.f32 %v1482, %v1389
  %v1484 = vadd.f32 %v1483, %v1465
  %1485 = vadd.xlane.f32.xlu0 %v1484
  %v1486 = vpop.xlane.xlu0 %1485
  %v1487 = vadd.f32 %v1163, %v1239
  %v1488 = vadd.f32 %v1487, %v1315
  %v1489 = vadd.f32 %v1488, %v1391
  %v1490 = vadd.f32 %v1489, %v1467
  %1491 = vadd.xlane.f32.xlu0 %v1490
  %v1492 = vpop.xlane.xlu0 %1491
  %v1493 = vmul.f32 %v1156, %v1156
  %v1494 = vmul.f32 %v1232, %v1232
  %v1495 = vmul.f32 %v1308, %v1308
  %v1496 = vmul.f32 %v1384, %v1384
  %v1497 = vmul.f32 %v1460, %v1460
  %v1498 = vmul.f32 %v1158, %v1158
  %v1499 = vmul.f32 %v1234, %v1234
  %v1500 = vmul.f32 %v1310, %v1310
  %v1501 = vmul.f32 %v1386, %v1386
  %v1502 = vmul.f32 %v1462, %v1462
  %v1503 = vmul.f32 %v1161, %v1161
  %v1504 = vmul.f32 %v1237, %v1237
  %v1505 = vmul.f32 %v1313, %v1313
  %v1506 = vmul.f32 %v1389, %v1389
  %v1507 = vmul.f32 %v1465, %v1465
  %v1508 = vmul.f32 %v1163, %v1163
  %v1509 = vmul.f32 %v1239, %v1239
  %v1510 = vmul.f32 %v1315, %v1315
  %v1511 = vmul.f32 %v1391, %v1391
  %v1512 = vmul.f32 %v1467, %v1467
  %v1513 = vadd.f32 %v1493, %v1494
  %v1514 = vadd.f32 %v1513, %v1495
  %v1515 = vadd.f32 %v1514, %v1496
  %v1516 = vadd.f32 %v1515, %v1497
  %1517 = vadd.xlane.f32.xlu0 %v1516
  %v1518 = vpop.xlane.xlu0 %1517
  %v1519 = vadd.f32 %v1498, %v1499
  %v1520 = vadd.f32 %v1519, %v1500
  %v1521 = vadd.f32 %v1520, %v1501
  %v1522 = vadd.f32 %v1521, %v1502
  %1523 = vadd.xlane.f32.xlu0 %v1522
  %v1524 = vpop.xlane.xlu0 %1523
  %v1525 = vadd.f32 %v1503, %v1504
  %v1526 = vadd.f32 %v1525, %v1505
  %v1527 = vadd.f32 %v1526, %v1506
  %v1528 = vadd.f32 %v1527, %v1507
  %1529 = vadd.xlane.f32.xlu0 %v1528
  %v1530 = vpop.xlane.xlu0 %1529
  %v1531 = vadd.f32 %v1508, %v1509
  %v1532 = vadd.f32 %v1531, %v1510
  %v1533 = vadd.f32 %v1532, %v1511
  %v1534 = vadd.f32 %v1533, %v1512
  %1535 = vadd.xlane.f32.xlu0 %v1534
  %v1536 = vpop.xlane.xlu0 %1535
  %v1537 = vmul.f32 %v1474, 0.004132231
  %v1538 = vmul.f32 %v1480, 0.004132231
  %v1539 = vmul.f32 %v1486, 0.004132231
  %v1540 = vmul.f32 %v1492, 0.004132231
  %v1541 = vmul.f32 %v1518, 0.004132231
  %v1542 = vmul.f32 %v1524, 0.004132231
  %v1543 = vmul.f32 %v1530, 0.004132231
  %v1544 = vmul.f32 %v1536, 0.004132231
  %v1545 = vmul.f32 %v1537, %v1537
  %v1546 = vmul.f32 %v1538, %v1538
  %v1547 = vmul.f32 %v1539, %v1539
  %v1548 = vmul.f32 %v1540, %v1540
  %v1549 = vsub.f32 %v1541, %v1545
  %v1550 = vsub.f32 %v1542, %v1546
  %v1551 = vsub.f32 %v1543, %v1547
  %v1552 = vsub.f32 %v1544, %v1548
  %v1553 = vld [vmem:[%s2] sm:$0xff]
  %v1554 = vld [vmem:[%s2 + $0x8] sm:$0xff]
  %v1555 = vld [vmem:[%s2 + $0x10] sm:$0xff]
  %v1556 = vld [vmem:[%s2 + $0x18] sm:$0xff]
  %v1557 = vadd.f32 %v1549, 1e-05
  %v1558 = vadd.f32 %v1550, 1e-05
  %v1559 = vadd.f32 %v1551, 1e-05
  %v1560 = vadd.f32 %v1552, 1e-05
  %v1561 = vrsqrt.pop %v1557
  %v1562 = vmul.f32 %v1561, %v1557
  %v1563 = vmul.f32 %v1562, %v1561
  %v1564 = vmul.f32 0.5, %v1563
  %v1565 = vsub.f32 1.5, %v1564
  %v1566 = vmul.f32 %v1561, %v1565
  %vm1567 = vweird.f32 %v1557
  %vm1568 = vweird.f32 %v1561
  %vm1569 = vmor %vm1567, %vm1568
  %v1570 = vsel %vm1569, %v1561, %v1566
  %v1571 = vrsqrt.pop %v1558
  %v1572 = vmul.f32 %v1571, %v1558
  %v1573 = vmul.f32 %v1572, %v1571
  %v1574 = vmul.f32 0.5, %v1573
  %v1575 = vsub.f32 1.5, %v1574
  %v1576 = vmul.f32 %v1571, %v1575
  %vm1577 = vweird.f32 %v1558
  %vm1578 = vweird.f32 %v1571
  %vm1579 = vmor %vm1577, %vm1578
  %v1580 = vsel %vm1579, %v1571, %v1576
  %v1581 = vrsqrt.pop %v1559
  %v1582 = vmul.f32 %v1581, %v1559
  %v1583 = vmul.f32 %v1582, %v1581
  %v1584 = vmul.f32 0.5, %v1583
  %v1585 = vsub.f32 1.5, %v1584
  %v1586 = vmul.f32 %v1581, %v1585
  %vm1587 = vweird.f32 %v1559
  %vm1588 = vweird.f32 %v1581
  %vm1589 = vmor %vm1587, %vm1588
  %v1590 = vsel %vm1589, %v1581, %v1586
  %v1591 = vrsqrt.pop %v1560
  %v1592 = vmul.f32 %v1591, %v1560
  %v1593 = vmul.f32 %v1592, %v1591
  %v1594 = vmul.f32 0.5, %v1593
  %v1595 = vsub.f32 1.5, %v1594
  %v1596 = vmul.f32 %v1591, %v1595
  %vm1597 = vweird.f32 %v1560
  %vm1598 = vweird.f32 %v1591
  %vm1599 = vmor %vm1597, %vm1598
  %v1600 = vsel %vm1599, %v1591, %v1596
  %v1601 = vmul.f32 %v1553, %v1570
  %v1602 = vmul.f32 %v1554, %v1580
  %v1603 = vmul.f32 %v1555, %v1590
  %v1604 = vmul.f32 %v1556, %v1600
  %v1605 = vld [vmem:[%s3] sm:$0xff]
  %v1606 = vld [vmem:[%s3 + $0x8] sm:$0xff]
  %v1607 = vld [vmem:[%s3 + $0x10] sm:$0xff]
  %v1608 = vld [vmem:[%s3 + $0x18] sm:$0xff]
  %v1609 = vmul.f32 %v1537, %v1601
  %v1610 = vmul.f32 %v1538, %v1602
  %v1611 = vmul.f32 %v1539, %v1603
  %v1612 = vmul.f32 %v1540, %v1604
  %v1613 = vsub.f32 %v1605, %v1609
  %v1614 = vsub.f32 %v1606, %v1610
  %v1615 = vsub.f32 %v1607, %v1611
  %v1616 = vsub.f32 %v1608, %v1612
  %1618 = vset.pattern.permute.xlu0 0
  %1619 = vperm.xlu0 %1618, %v1601
  %v1620 = vpop.permute.xlu0 %1619
  %1623 = vset.pattern.permute.xlu0 0
  %1624 = vperm.xlu0 %1623, %v1602
  %v1625 = vpop.permute.xlu0 %1624
  %1628 = vset.pattern.permute.xlu0 0
  %1629 = vperm.xlu0 %1628, %v1603
  %v1630 = vpop.permute.xlu0 %1629
  %1633 = vset.pattern.permute.xlu0 0
  %1634 = vperm.xlu0 %1633, %v1604
  %v1635 = vpop.permute.xlu0 %1634
  %v1637 = vmul.f32 %v1156, %v1620
  %v1638 = vmul.f32 %v1232, %v1620
  %v1639 = vmul.f32 %v1308, %v1620
  %v1640 = vmul.f32 %v1384, %v1620
  %v1641 = vmul.f32 %v1158, %v1625
  %v1642 = vmul.f32 %v1234, %v1625
  %v1643 = vmul.f32 %v1310, %v1625
  %v1644 = vmul.f32 %v1386, %v1625
  %v1645 = vmul.f32 %v1161, %v1630
  %v1646 = vmul.f32 %v1237, %v1630
  %v1647 = vmul.f32 %v1313, %v1630
  %v1648 = vmul.f32 %v1389, %v1630
  %v1649 = vmul.f32 %v1163, %v1635
  %v1650 = vmul.f32 %v1239, %v1635
  %v1651 = vmul.f32 %v1315, %v1635
  %v1652 = vmul.f32 %v1391, %v1635
  %1654 = vset.pattern.permute.xlu0 0
  %1655 = vperm.xlu0 %1654, %v1613
  %v1656 = vpop.permute.xlu0 %1655
  %1659 = vset.pattern.permute.xlu0 0
  %1660 = vperm.xlu0 %1659, %v1614
  %v1661 = vpop.permute.xlu0 %1660
  %1664 = vset.pattern.permute.xlu0 0
  %1665 = vperm.xlu0 %1664, %v1615
  %v1666 = vpop.permute.xlu0 %1665
  %1669 = vset.pattern.permute.xlu0 0
  %1670 = vperm.xlu0 %1669, %v1616
  %v1671 = vpop.permute.xlu0 %1670
  %v1673 = vadd.f32 %v1637, %v1656
  %v1674 = vadd.f32 %v1638, %v1656
  %v1675 = vadd.f32 %v1639, %v1656
  %v1676 = vadd.f32 %v1640, %v1656
  %v1677 = vadd.f32 %v1641, %v1661
  %v1678 = vadd.f32 %v1642, %v1661
  %v1679 = vadd.f32 %v1643, %v1661
  %v1680 = vadd.f32 %v1644, %v1661
  %v1681 = vadd.f32 %v1645, %v1666
  %v1682 = vadd.f32 %v1646, %v1666
  %v1683 = vadd.f32 %v1647, %v1666
  %v1684 = vadd.f32 %v1648, %v1666
  %v1685 = vadd.f32 %v1649, %v1671
  %v1686 = vadd.f32 %v1650, %v1671
  %v1687 = vadd.f32 %v1651, %v1671
  %v1688 = vadd.f32 %v1652, %v1671
  %v1689 = vmax.f32 %v1673, 0.0
  %v1690 = vmax.f32 %v1674, 0.0
  %v1691 = vmax.f32 %v1675, 0.0
  %v1692 = vmax.f32 %v1676, 0.0
  %v1693 = vmax.f32 %v1677, 0.0
  %v1694 = vmax.f32 %v1678, 0.0
  %v1695 = vmax.f32 %v1679, 0.0
  %v1696 = vmax.f32 %v1680, 0.0
  %v1697 = vmax.f32 %v1681, 0.0
  %v1698 = vmax.f32 %v1682, 0.0
  %v1699 = vmax.f32 %v1683, 0.0
  %v1700 = vmax.f32 %v1684, 0.0
  %v1701 = vmax.f32 %v1685, 0.0
  %v1702 = vmax.f32 %v1686, 0.0
  %v1703 = vmax.f32 %v1687, 0.0
  %v1704 = vmax.f32 %v1688, 0.0
  %v1705 = vmax.f32 %v1689, %v1690
  %v1706 = vmax.f32 %v1693, %v1694
  %v1707 = vmax.f32 %v1697, %v1698
  %v1708 = vmax.f32 %v1701, %v1702
  %v1709 = vmax.f32 %v1691, %v1692
  %v1710 = vmax.f32 %v1695, %v1696
  %v1711 = vmax.f32 %v1699, %v1700
  %v1712 = vmax.f32 %v1703, %v1704
  %v1713 = vmax.f32 %v1705, %v1709
  %v1714 = vmax.f32 %v1706, %v1710
  %v1715 = vmax.f32 %v1707, %v1711
  %v1716 = vmax.f32 %v1708, %v1712
  %v1717 = vpack.c.bf16 %v1713, %v1713
  %v1718 = vpack.c.bf16 %v1714, %v1714
  %v1719 = vpack.c.bf16 %v1715, %v1715
  %v1720 = vpack.c.bf16 %v1716, %v1716
  %1721 = vst [vmem:[%s4] sm:$0xf] %v1717
  %1722 = vst [vmem:[%s4 + $0x4] sm:$0xf] %v1718
  %1723 = vst [vmem:[%s4 + $0x8] sm:$0xf] %v1719
  %1724 = vst [vmem:[%s4 + $0xc] sm:$0xf] %v1720
  // Predicated region
  $region18: #{cnn1_forward.4} parent=0 // pred_check
    _
  $region19: #{cnn1_forward.4} parent=0 // pred_check_branch
    %1726 = sbr.rel (0) target = $region21
  $region20: #{cnn1_forward.4} parent=0 // pred_region
    _
  $region21: #{cnn1_forward.4} parent=0 // pred_fallthru
    _
  // Predicated region
  $region22: #{cnn1_forward.4} parent=0 // pred_check
    _
  $region23: #{cnn1_forward.4} parent=0 // pred_check_branch
    %1728 = sbr.rel (0) target = $region25
  $region24: #{cnn1_forward.4} parent=0 // pred_region
    _
  $region25: #{cnn1_forward.4} parent=0 // pred_fallthru
    _

// kernel: cnn1_forward.5
$region0: #{cnn1_forward.5}
  #allocation0 [shape = 'u32[]', space=smem, size = 0x4, offset = 0x4, fixed_abs, tag = 'smem constant byte address 0x4 - core index']
  #allocation1 [shape = 'u32[72,128]{1,0:T(1,128)}', space=vmem, size = 0x9000, scoped, tag = 'internal scratch']
  %s0 = inlined_call_operand.vmem [shape: bf16[2,800], index: 0, kind: input, shape index: {}]
  %s1 = inlined_call_operand.vmem [shape: bf16[800,256], index: 1, kind: input, shape index: {}]
  %s2 = inlined_call_operand.vmem [shape: f32[1,256], index: 2, kind: input, shape index: {}]
  %s3 = inlined_call_operand.vmem [shape: bf16[256,128], index: 3, kind: input, shape index: {}]
  %s4 = inlined_call_operand.vmem [shape: f32[1,128], index: 4, kind: input, shape index: {}]
  %s5 = inlined_call_operand.hbm [shape: f32[2,128], index: 5, kind: output, shape index: {}]
  %s6 = sld [smem:[#allocation0]]
  $region30: #{cnn1_forward.5} parent=0
    _
  %s8 = ssub.s32 1, %s6
  %s9 = scalar_select 0, %s8, %s6
  $region1: #{cnn1_forward.5} parent=0
    #allocation2 [shape = 'u8[1024]{0}', space=vmem, size = 0x400, scoped, tag = 'output window, operand 0, single buffered']
    #allocation3 [shape = 's32[1]{0}', space=sflag, size = 0x4, scoped, tag = 'scoped memory for cnn1_forward.5']
    %10 = vsyncpa [#allocation3], 0
    // Predicated region
    $region2: #{cnn1_forward.5} parent=1 // pred_check
      _
    $region3: #{cnn1_forward.5} parent=1 // pred_check_branch
      %12 = sbr.rel (0) target = $region5
    $region4: #{cnn1_forward.5} parent=1 // pred_region
      _
    $region5: #{cnn1_forward.5} parent=1 // pred_fallthru
      _
    // Predicated region
    $region6: #{cnn1_forward.5} parent=1 // pred_check
      _
    $region7: #{cnn1_forward.5} parent=1 // pred_check_branch
      %14 = sbr.rel (0) target = $region9
    $region8: #{cnn1_forward.5} parent=1 // pred_region
      _
    $region9: #{cnn1_forward.5} parent=1 // pred_fallthru
      _
    // Predicated region
    $region10: #{cnn1_forward.5} parent=1 // pred_check
      _
    $region11: #{cnn1_forward.5} parent=1 // pred_check_branch
      %16 = sbr.rel (0) target = $region13
    $region12: #{cnn1_forward.5} parent=1 // pred_region
      _
    $region13: #{cnn1_forward.5} parent=1 // pred_fallthru
      _
    // Predicated region
    $region14: #{cnn1_forward.5} parent=1 // pred_check
      _
    $region15: #{cnn1_forward.5} parent=1 // pred_check_branch
      %18 = sbr.rel (0) target = $region17
    $region16: #{cnn1_forward.5} parent=1 // pred_region
      _
    $region17: #{cnn1_forward.5} parent=1 // pred_fallthru
      _
    // Predicated region
    $region18: #{cnn1_forward.5} parent=1 // pred_check
      _
    $region19: #{cnn1_forward.5} parent=1 // pred_check_branch
      %20 = sbr.rel (0) target = $region21
    $region20: #{cnn1_forward.5} parent=1 // pred_region
      _
    $region21: #{cnn1_forward.5} parent=1 // pred_fallthru
      _
    %v22 = vld [vmem:[%s0] sm:$0x7f]
    %v23 = vld [vmem:[%s1] sm:$0xff]
    %v24 = vld [vmem:[%s1 + $0x8] sm:$0xff]
    %v25 = vld [vmem:[%s1 + $0x10] sm:$0xff]
    %v26 = vld [vmem:[%s1 + $0x18] sm:$0xff]
    %v27 = vld [vmem:[%s1 + $0x20] sm:$0xff]
    %v28 = vld [vmem:[%s1 + $0x28] sm:$0xff]
    %v29 = vld [vmem:[%s1 + $0x30] sm:$0xff]
    %v30 = vld [vmem:[%s1 + $0x38] sm:$0xff]
    %v31 = vld [vmem:[%s1 + $0x40] sm:$0xff]
    %v32 = vld [vmem:[%s1 + $0x48] sm:$0xff]
    %v33 = vld [vmem:[%s1 + $0x50] sm:$0xff]
    %v34 = vld [vmem:[%s1 + $0x58] sm:$0xff]
    %v35 = vld [vmem:[%s1 + $0x60] sm:$0xff]
    %v36 = vld [vmem:[%s1 + $0x68] sm:$0xff]
    %v37 = vld [vmem:[%s1 + $0x70] sm:$0xff]
    %v38 = vld [vmem:[%s1 + $0x78] sm:$0xff]
    %v39 = vld [vmem:[%s1 + $0x80] sm:$0xff]
    %v40 = vld [vmem:[%s1 + $0x88] sm:$0xff]
    %v41 = vld [vmem:[%s1 + $0x90] sm:$0xff]
    %v42 = vld [vmem:[%s1 + $0x98] sm:$0xff]
    %v43 = vld [vmem:[%s1 + $0xa0] sm:$0xff]
    %v44 = vld [vmem:[%s1 + $0xa8] sm:$0xff]
    %v45 = vld [vmem:[%s1 + $0xb0] sm:$0xff]
    %v46 = vld [vmem:[%s1 + $0xb8] sm:$0xff]
    %v47 = vld [vmem:[%s1 + $0xc0] sm:$0xff]
    %v48 = vld [vmem:[%s1 + $0xc8] sm:$0xff]
    %v49 = vld [vmem:[%s1 + $0xd0] sm:$0xff]
    %v50 = vld [vmem:[%s1 + $0xd8] sm:$0xff]
    %v51 = vld [vmem:[%s1 + $0xe0] sm:$0xff]
    %v52 = vld [vmem:[%s1 + $0xe8] sm:$0xff]
    %v53 = vld [vmem:[%s1 + $0xf0] sm:$0xff]
    %v54 = vld [vmem:[%s1 + $0xf8] sm:$0xff]
    %v55 = vld [vmem:[%s1 + $0x100] sm:$0xff]
    %v56 = vld [vmem:[%s1 + $0x108] sm:$0xff]
    %v57 = vld [vmem:[%s1 + $0x110] sm:$0xff]
    %v58 = vld [vmem:[%s1 + $0x118] sm:$0xff]
    %v59 = vld [vmem:[%s1 + $0x120] sm:$0xff]
    %v60 = vld [vmem:[%s1 + $0x128] sm:$0xff]
    %v61 = vld [vmem:[%s1 + $0x130] sm:$0xff]
    %v62 = vld [vmem:[%s1 + $0x138] sm:$0xff]
    %v63 = vld [vmem:[%s1 + $0x140] sm:$0xff]
    %v64 = vld [vmem:[%s1 + $0x148] sm:$0xff]
    %v65 = vld [vmem:[%s1 + $0x150] sm:$0xff]
    %v66 = vld [vmem:[%s1 + $0x158] sm:$0xff]
    %v67 = vld [vmem:[%s1 + $0x160] sm:$0xff]
    %v68 = vld [vmem:[%s1 + $0x168] sm:$0xff]
    %v69 = vld [vmem:[%s1 + $0x170] sm:$0xff]
    %v70 = vld [vmem:[%s1 + $0x178] sm:$0xff]
    %v71 = vld [vmem:[%s1 + $0x180] sm:$0xff]
    %v72 = vld [vmem:[%s1 + $0x188] sm:$0xff]
    %v73 = vld [vmem:[%s1 + $0x190] sm:$0xff]
    %v74 = vld [vmem:[%s1 + $0x198] sm:$0xff]
    %v75 = vld [vmem:[%s1 + $0x1a0] sm:$0xff]
    %v76 = vld [vmem:[%s1 + $0x1a8] sm:$0xff]
    %v77 = vld [vmem:[%s1 + $0x1b0] sm:$0xff]
    %v78 = vld [vmem:[%s1 + $0x1b8] sm:$0xff]
    %v79 = vld [vmem:[%s1 + $0x1c0] sm:$0xff]
    %v80 = vld [vmem:[%s1 + $0x1c8] sm:$0xff]
    %v81 = vld [vmem:[%s1 + $0x1d0] sm:$0xff]
    %v82 = vld [vmem:[%s1 + $0x1d8] sm:$0xff]
    %v83 = vld [vmem:[%s1 + $0x1e0] sm:$0xff]
    %v84 = vld [vmem:[%s1 + $0x1e8] sm:$0xff]
    %v85 = vld [vmem:[%s1 + $0x1f0] sm:$0xff]
    %v86 = vld [vmem:[%s1 + $0x1f8] sm:$0xff]
    %v87 = vld [vmem:[%s1 + $0x200] sm:$0xff]
    %v88 = vld [vmem:[%s1 + $0x208] sm:$0xff]
    %v89 = vld [vmem:[%s1 + $0x210] sm:$0xff]
    %v90 = vld [vmem:[%s1 + $0x218] sm:$0xff]
    %v91 = vld [vmem:[%s1 + $0x220] sm:$0xff]
    %v92 = vld [vmem:[%s1 + $0x228] sm:$0xff]
    %v93 = vld [vmem:[%s1 + $0x230] sm:$0xff]
    %v94 = vld [vmem:[%s1 + $0x238] sm:$0xff]
    %v95 = vld [vmem:[%s1 + $0x240] sm:$0xff]
    %v96 = vld [vmem:[%s1 + $0x248] sm:$0xff]
    %v97 = vld [vmem:[%s1 + $0x250] sm:$0xff]
    %v98 = vld [vmem:[%s1 + $0x258] sm:$0xff]
    %v99 = vld [vmem:[%s1 + $0x260] sm:$0xff]
    %v100 = vld [vmem:[%s1 + $0x268] sm:$0xff]
    %v101 = vld [vmem:[%s1 + $0x270] sm:$0xff]
    %v102 = vld [vmem:[%s1 + $0x278] sm:$0xff]
    %v103 = vld [vmem:[%s1 + $0x280] sm:$0xff]
    %v104 = vld [vmem:[%s1 + $0x288] sm:$0xff]
    %v105 = vld [vmem:[%s1 + $0x290] sm:$0xff]
    %v106 = vld [vmem:[%s1 + $0x298] sm:$0xff]
    %v107 = vld [vmem:[%s1 + $0x2a0] sm:$0xff]
    %v108 = vld [vmem:[%s1 + $0x2a8] sm:$0xff]
    %v109 = vld [vmem:[%s1 + $0x2b0] sm:$0xff]
    %v110 = vld [vmem:[%s1 + $0x2b8] sm:$0xff]
    %v111 = vld [vmem:[%s1 + $0x2c0] sm:$0xff]
    %v112 = vld [vmem:[%s1 + $0x2c8] sm:$0xff]
    %v113 = vld [vmem:[%s1 + $0x2d0] sm:$0xff]
    %v114 = vld [vmem:[%s1 + $0x2d8] sm:$0xff]
    %v115 = vld [vmem:[%s1 + $0x2e0] sm:$0xff]
    %v116 = vld [vmem:[%s1 + $0x2e8] sm:$0xff]
    %v117 = vld [vmem:[%s1 + $0x2f0] sm:$0xff]
    %v118 = vld [vmem:[%s1 + $0x2f8] sm:$0xff]
    %v119 = vld [vmem:[%s1 + $0x300] sm:$0xff]
    %v120 = vld [vmem:[%s1 + $0x308] sm:$0xff]
    %v121 = vld [vmem:[%s1 + $0x310] sm:$0xff]
    %v122 = vld [vmem:[%s1 + $0x318] sm:$0xff]
    %v123 = vld [vmem:[%s2] sm:$0x3]
    %v125 = vperm.slane %v123, 0
    %v126 = vperm.slane %v123, 1
    %130 = vst [vmem:[#allocation1] ss:$9 sm:$0xff] %v22
    %v131 = vld [vmem:[#allocation1] sm:$0xff]
    %v132 = vld [vmem:[#allocation1 + $0x9] sm:$0xff]
    %v133 = vld [vmem:[#allocation1 + $0x12] sm:$0xff]
    %v134 = vld [vmem:[#allocation1 + $0x1b] sm:$0xff]
    %v135 = vld [vmem:[#allocation1 + $0x24] sm:$0xff]
    %v136 = vld [vmem:[#allocation1 + $0x2d] sm:$0xff]
    %v137 = vld [vmem:[#allocation1 + $0x36] sm:$0xff]
    %v244 = vunpack.c.l.b16 %v23
    %v245 = vunpack.c.h.b16 %v23
    %v246 = vunpack.c.l.b16 %v24
    %v247 = vunpack.c.h.b16 %v24
    %v248 = vunpack.c.l.b16 %v25
    %v249 = vunpack.c.h.b16 %v25
    %v250 = vunpack.c.l.b16 %v26
    %v251 = vunpack.c.h.b16 %v26
    %v252 = vunpack.c.l.b16 %v27
    %v253 = vunpack.c.h.b16 %v27
    %v254 = vunpack.c.l.b16 %v28
    %v255 = vunpack.c.h.b16 %v28
    %v256 = vunpack.c.l.b16 %v29
    %v257 = vunpack.c.h.b16 %v29
    %v258 = vunpack.c.l.b16 %v30
    %v259 = vunpack.c.h.b16 %v30
    %v260 = vunpack.c.l.b16 %v31
    %v261 = vunpack.c.h.b16 %v31
    %v262 = vunpack.c.l.b16 %v32
    %v263 = vunpack.c.h.b16 %v32
    %v264 = vunpack.c.l.b16 %v33
    %v265 = vunpack.c.h.b16 %v33
    %v266 = vunpack.c.l.b16 %v34
    %v267 = vunpack.c.h.b16 %v34
    %v268 = vunpack.c.l.b16 %v35
    %v269 = vunpack.c.h.b16 %v35
    %v270 = vunpack.c.l.b16 %v36
    %v271 = vunpack.c.h.b16 %v36
    %v272 = vunpack.c.l.b16 %v37
    %v273 = vunpack.c.h.b16 %v37
    %v274 = vunpack.c.l.b16 %v38
    %v275 = vunpack.c.h.b16 %v38
    %v276 = vunpack.c.l.b16 %v39
    %v277 = vunpack.c.h.b16 %v39
    %v278 = vunpack.c.l.b16 %v40
    %v279 = vunpack.c.h.b16 %v40
    %v280 = vunpack.c.l.b16 %v41
    %v281 = vunpack.c.h.b16 %v41
    %v282 = vunpack.c.l.b16 %v42
    %v283 = vunpack.c.h.b16 %v42
    %v284 = vunpack.c.l.b16 %v43
    %v285 = vunpack.c.h.b16 %v43
    %v286 = vunpack.c.l.b16 %v44
    %v287 = vunpack.c.h.b16 %v44
    %v288 = vunpack.c.l.b16 %v45
    %v289 = vunpack.c.h.b16 %v45
    %v290 = vunpack.c.l.b16 %v46
    %v291 = vunpack.c.h.b16 %v46
    %v292 = vunpack.c.l.b16 %v47
    %v293 = vunpack.c.h.b16 %v47
    %v294 = vunpack.c.l.b16 %v48
    %v295 = vunpack.c.h.b16 %v48
    %v296 = vunpack.c.l.b16 %v49
    %v297 = vunpack.c.h.b16 %v49
    %v298 = vunpack.c.l.b16 %v50
    %v299 = vunpack.c.h.b16 %v50
    %v300 = vunpack.c.l.b16 %v51
    %v301 = vunpack.c.h.b16 %v51
    %v302 = vunpack.c.l.b16 %v52
    %v303 = vunpack.c.h.b16 %v52
    %v304 = vunpack.c.l.b16 %v53
    %v305 = vunpack.c.h.b16 %v53
    %v306 = vunpack.c.l.b16 %v54
    %v307 = vunpack.c.h.b16 %v54
    %v308 = vunpack.c.l.b16 %v55
    %v309 = vunpack.c.h.b16 %v55
    %v310 = vunpack.c.l.b16 %v56
    %v311 = vunpack.c.h.b16 %v56
    %v312 = vunpack.c.l.b16 %v57
    %v313 = vunpack.c.h.b16 %v57
    %v314 = vunpack.c.l.b16 %v58
    %v315 = vunpack.c.h.b16 %v58
    %v316 = vunpack.c.l.b16 %v59
    %v317 = vunpack.c.h.b16 %v59
    %v318 = vunpack.c.l.b16 %v60
    %v319 = vunpack.c.h.b16 %v60
    %v320 = vunpack.c.l.b16 %v61
    %v321 = vunpack.c.h.b16 %v61
    %v322 = vunpack.c.l.b16 %v62
    %v323 = vunpack.c.h.b16 %v62
    %v324 = vunpack.c.l.b16 %v63
    %v325 = vunpack.c.h.b16 %v63
    %v326 = vunpack.c.l.b16 %v64
    %v327 = vunpack.c.h.b16 %v64
    %v328 = vunpack.c.l.b16 %v65
    %v329 = vunpack.c.h.b16 %v65
    %v330 = vunpack.c.l.b16 %v66
    %v331 = vunpack.c.h.b16 %v66
    %v332 = vunpack.c.l.b16 %v67
    %v333 = vunpack.c.h.b16 %v67
    %v334 = vunpack.c.l.b16 %v68
    %v335 = vunpack.c.h.b16 %v68
    %v336 = vunpack.c.l.b16 %v69
    %v337 = vunpack.c.h.b16 %v69
    %v338 = vunpack.c.l.b16 %v70
    %v339 = vunpack.c.h.b16 %v70
    %v340 = vunpack.c.l.b16 %v71
    %v341 = vunpack.c.h.b16 %v71
    %v342 = vunpack.c.l.b16 %v72
    %v343 = vunpack.c.h.b16 %v72
    %v344 = vunpack.c.l.b16 %v73
    %v345 = vunpack.c.h.b16 %v73
    %v346 = vunpack.c.l.b16 %v74
    %v347 = vunpack.c.h.b16 %v74
    %v348 = vunpack.c.l.b16 %v75
    %v349 = vunpack.c.h.b16 %v75
    %v350 = vunpack.c.l.b16 %v76
    %v351 = vunpack.c.h.b16 %v76
    %v352 = vunpack.c.l.b16 %v77
    %v353 = vunpack.c.h.b16 %v77
    %v354 = vunpack.c.l.b16 %v78
    %v355 = vunpack.c.h.b16 %v78
    %v356 = vunpack.c.l.b16 %v79
    %v357 = vunpack.c.h.b16 %v79
    %v358 = vunpack.c.l.b16 %v80
    %v359 = vunpack.c.h.b16 %v80
    %v360 = vunpack.c.l.b16 %v81
    %v361 = vunpack.c.h.b16 %v81
    %v362 = vunpack.c.l.b16 %v82
    %v363 = vunpack.c.h.b16 %v82
    %v364 = vunpack.c.l.b16 %v83
    %v365 = vunpack.c.h.b16 %v83
    %v366 = vunpack.c.l.b16 %v84
    %v367 = vunpack.c.h.b16 %v84
    %v368 = vunpack.c.l.b16 %v85
    %v369 = vunpack.c.h.b16 %v85
    %v370 = vunpack.c.l.b16 %v86
    %v371 = vunpack.c.h.b16 %v86
    %v372 = vunpack.c.l.b16 %v87
    %v373 = vunpack.c.h.b16 %v87
    %v374 = vunpack.c.l.b16 %v88
    %v375 = vunpack.c.h.b16 %v88
    %v376 = vunpack.c.l.b16 %v89
    %v377 = vunpack.c.h.b16 %v89
    %v378 = vunpack.c.l.b16 %v90
    %v379 = vunpack.c.h.b16 %v90
    %v380 = vunpack.c.l.b16 %v91
    %v381 = vunpack.c.h.b16 %v91
    %v382 = vunpack.c.l.b16 %v92
    %v383 = vunpack.c.h.b16 %v92
    %v384 = vunpack.c.l.b16 %v93
    %v385 = vunpack.c.h.b16 %v93
    %v386 = vunpack.c.l.b16 %v94
    %v387 = vunpack.c.h.b16 %v94
    %v388 = vunpack.c.l.b16 %v95
    %v389 = vunpack.c.h.b16 %v95
    %v390 = vunpack.c.l.b16 %v96
    %v391 = vunpack.c.h.b16 %v96
    %v392 = vunpack.c.l.b16 %v97
    %v393 = vunpack.c.h.b16 %v97
    %v394 = vunpack.c.l.b16 %v98
    %v395 = vunpack.c.h.b16 %v98
    %v396 = vunpack.c.l.b16 %v99
    %v397 = vunpack.c.h.b16 %v99
    %v398 = vunpack.c.l.b16 %v100
    %v399 = vunpack.c.h.b16 %v100
    %v400 = vunpack.c.l.b16 %v101
    %v401 = vunpack.c.h.b16 %v101
    %v402 = vunpack.c.l.b16 %v102
    %v403 = vunpack.c.h.b16 %v102
    %v404 = vunpack.c.l.b16 %v103
    %v405 = vunpack.c.h.b16 %v103
    %v406 = vunpack.c.l.b16 %v104
    %v407 = vunpack.c.h.b16 %v104
    %v408 = vunpack.c.l.b16 %v105
    %v409 = vunpack.c.h.b16 %v105
    %v410 = vunpack.c.l.b16 %v106
    %v411 = vunpack.c.h.b16 %v106
    %v412 = vunpack.c.l.b16 %v107
    %v413 = vunpack.c.h.b16 %v107
    %v414 = vunpack.c.l.b16 %v108
    %v415 = vunpack.c.h.b16 %v108
    %v416 = vunpack.c.l.b16 %v109
    %v417 = vunpack.c.h.b16 %v109
    %v418 = vunpack.c.l.b16 %v110
    %v419 = vunpack.c.h.b16 %v110
    %v420 = vunpack.c.l.b16 %v111
    %v421 = vunpack.c.h.b16 %v111
    %v422 = vunpack.c.l.b16 %v112
    %v423 = vunpack.c.h.b16 %v112
    %v424 = vunpack.c.l.b16 %v113
    %v425 = vunpack.c.h.b16 %v113
    %v426 = vunpack.c.l.b16 %v114
    %v427 = vunpack.c.h.b16 %v114
    %v428 = vunpack.c.l.b16 %v115
    %v429 = vunpack.c.h.b16 %v115
    %v430 = vunpack.c.l.b16 %v116
    %v431 = vunpack.c.h.b16 %v116
    %v432 = vunpack.c.l.b16 %v117
    %v433 = vunpack.c.h.b16 %v117
    %v434 = vunpack.c.l.b16 %v118
    %v435 = vunpack.c.h.b16 %v118
    %v436 = vunpack.c.l.b16 %v119
    %v437 = vunpack.c.h.b16 %v119
    %v438 = vunpack.c.l.b16 %v120
    %v439 = vunpack.c.h.b16 %v120
    %v440 = vunpack.c.l.b16 %v121
    %v441 = vunpack.c.h.b16 %v121
    %v442 = vunpack.c.l.b16 %v122
    %v443 = vunpack.c.h.b16 %v122
    %v444 = vpack.c.b16 %v246, %v244
    %v445 = vpack.c.b16 %v247, %v245
    %v446 = vpack.c.b16 %v250, %v248
    %v447 = vpack.c.b16 %v251, %v249
    %v448 = vpack.c.b16 %v254, %v252
    %v449 = vpack.c.b16 %v255, %v253
    %v450 = vpack.c.b16 %v258, %v256
    %v451 = vpack.c.b16 %v259, %v257
    %v452 = vpack.c.b16 %v262, %v260
    %v453 = vpack.c.b16 %v263, %v261
    %v454 = vpack.c.b16 %v266, %v264
    %v455 = vpack.c.b16 %v267, %v265
    %v456 = vpack.c.b16 %v270, %v268
    %v457 = vpack.c.b16 %v271, %v269
    %v458 = vpack.c.b16 %v274, %v272
    %v459 = vpack.c.b16 %v275, %v273
    %v460 = vpack.c.b16 %v278, %v276
    %v461 = vpack.c.b16 %v279, %v277
    %v462 = vpack.c.b16 %v282, %v280
    %v463 = vpack.c.b16 %v283, %v281
    %v464 = vpack.c.b16 %v286, %v284
    %v465 = vpack.c.b16 %v287, %v285
    %v466 = vpack.c.b16 %v290, %v288
    %v467 = vpack.c.b16 %v291, %v289
    %v468 = vpack.c.b16 %v294, %v292
    %v469 = vpack.c.b16 %v295, %v293
    %v470 = vpack.c.b16 %v298, %v296
    %v471 = vpack.c.b16 %v299, %v297
    %v472 = vpack.c.b16 %v302, %v300
    %v473 = vpack.c.b16 %v303, %v301
    %v474 = vpack.c.b16 %v306, %v304
    %v475 = vpack.c.b16 %v307, %v305
    %v476 = vpack.c.b16 %v310, %v308
    %v477 = vpack.c.b16 %v311, %v309
    %v478 = vpack.c.b16 %v314, %v312
    %v479 = vpack.c.b16 %v315, %v313
    %v480 = vpack.c.b16 %v318, %v316
    %v481 = vpack.c.b16 %v319, %v317
    %v482 = vpack.c.b16 %v322, %v320
    %v483 = vpack.c.b16 %v323, %v321
    %v484 = vpack.c.b16 %v326, %v324
    %v485 = vpack.c.b16 %v327, %v325
    %v486 = vpack.c.b16 %v330, %v328
    %v487 = vpack.c.b16 %v331, %v329
    %v488 = vpack.c.b16 %v334, %v332
    %v489 = vpack.c.b16 %v335, %v333
    %v490 = vpack.c.b16 %v338, %v336
    %v491 = vpack.c.b16 %v339, %v337
    %v492 = vpack.c.b16 %v342, %v340
    %v493 = vpack.c.b16 %v343, %v341
    %v494 = vpack.c.b16 %v346, %v344
    %v495 = vpack.c.b16 %v347, %v345
    %v496 = vpack.c.b16 %v350, %v348
    %v497 = vpack.c.b16 %v351, %v349
    %v498 = vpack.c.b16 %v354, %v352
    %v499 = vpack.c.b16 %v355, %v353
    %v500 = vpack.c.b16 %v358, %v356
    %v501 = vpack.c.b16 %v359, %v357
    %v502 = vpack.c.b16 %v362, %v360
    %v503 = vpack.c.b16 %v363, %v361
    %v504 = vpack.c.b16 %v366, %v364
    %v505 = vpack.c.b16 %v367, %v365
    %v506 = vpack.c.b16 %v370, %v368
    %v507 = vpack.c.b16 %v371, %v369
    %v508 = vpack.c.b16 %v374, %v372
    %v509 = vpack.c.b16 %v375, %v373
    %v510 = vpack.c.b16 %v378, %v376
    %v511 = vpack.c.b16 %v379, %v377
    %v512 = vpack.c.b16 %v382, %v380
    %v513 = vpack.c.b16 %v383, %v381
    %v514 = vpack.c.b16 %v386, %v384
    %v515 = vpack.c.b16 %v387, %v385
    %v516 = vpack.c.b16 %v390, %v388
    %v517 = vpack.c.b16 %v391, %v389
    %v518 = vpack.c.b16 %v394, %v392
    %v519 = vpack.c.b16 %v395, %v393
    %v520 = vpack.c.b16 %v398, %v396
    %v521 = vpack.c.b16 %v399, %v397
    %v522 = vpack.c.b16 %v402, %v400
    %v523 = vpack.c.b16 %v403, %v401
    %v524 = vpack.c.b16 %v406, %v404
    %v525 = vpack.c.b16 %v407, %v405
    %v526 = vpack.c.b16 %v410, %v408
    %v527 = vpack.c.b16 %v411, %v409
    %v528 = vpack.c.b16 %v414, %v412
    %v529 = vpack.c.b16 %v415, %v413
    %v530 = vpack.c.b16 %v418, %v416
    %v531 = vpack.c.b16 %v419, %v417
    %v532 = vpack.c.b16 %v422, %v420
    %v533 = vpack.c.b16 %v423, %v421
    %v534 = vpack.c.b16 %v426, %v424
    %v535 = vpack.c.b16 %v427, %v425
    %v536 = vpack.c.b16 %v430, %v428
    %v537 = vpack.c.b16 %v431, %v429
    %v538 = vpack.c.b16 %v434, %v432
    %v539 = vpack.c.b16 %v435, %v433
    %v540 = vpack.c.b16 %v438, %v436
    %v541 = vpack.c.b16 %v439, %v437
    %v542 = vpack.c.b16 %v442, %v440
    %v543 = vpack.c.b16 %v443, %v441
    %vm644 = vcmask 261120
    %v645 = vsel %vm644, %v137, 0
    %647 = vmatpush.bf16.msra.mxu0 %v458
    %648 = vmatpush.bf16.msra.mxu0 %v456
    %649 = vmatpush.bf16.msra.mxu0 %v454
    %650 = vmatpush.bf16.msra.mxu0 %v452
    %651 = vmatpush.bf16.msra.mxu0 %v450
    %652 = vmatpush.bf16.msra.mxu0 %v448
    %653 = vmatpush.bf16.msra.mxu0 %v446
    %654 = vmatpush.bf16.msra.mxu0 %v444
    %655 = vmatmul.bf16.gmra.mxu0 %v131
    %v656 = vpop.f32.mrf.mxu0
    %v657 = vadd.f32 %v125, %v656
    %v658 = vpop.f32.mrf.mxu0
    %659 = vdwg.mxu0
    %660 = vmatpush.bf16.msra.mxu0 %v474
    %661 = vmatpush.bf16.msra.mxu0 %v472
    %662 = vmatpush.bf16.msra.mxu0 %v470
    %663 = vmatpush.bf16.msra.mxu0 %v468
    %664 = vmatpush.bf16.msra.mxu0 %v466
    %665 = vmatpush.bf16.msra.mxu0 %v464
    %666 = vmatpush.bf16.msra.mxu0 %v462
    %667 = vmatpush.bf16.msra.mxu0 %v460
    %668 = vmatmul.bf16.gmra.mxu0 %v132
    %v669 = vpop.f32.mrf.mxu0
    %v670 = vadd.f32 %v657, %v669
    %v671 = vpop.f32.mrf.mxu0
    %672 = vdwg.mxu0
    %673 = vmatpush.bf16.msra.mxu0 %v490
    %674 = vmatpush.bf16.msra.mxu0 %v488
    %675 = vmatpush.bf16.msra.mxu0 %v486
    %676 = vmatpush.bf16.msra.mxu0 %v484
    %677 = vmatpush.bf16.msra.mxu0 %v482
    %678 = vmatpush.bf16.msra.mxu0 %v480
    %679 = vmatpush.bf16.msra.mxu0 %v478
    %680 = vmatpush.bf16.msra.mxu0 %v476
    %681 = vmatmul.bf16.gmra.mxu0 %v133
    %v682 = vpop.f32.mrf.mxu0
    %v683 = vadd.f32 %v670, %v682
    %v684 = vpop.f32.mrf.mxu0
    %685 = vdwg.mxu0
    %686 = vmatpush.bf16.msra.mxu0 %v506
    %687 = vmatpush.bf16.msra.mxu0 %v504
    %688 = vmatpush.bf16.msra.mxu0 %v502
    %689 = vmatpush.bf16.msra.mxu0 %v500
    %690 = vmatpush.bf16.msra.mxu0 %v498
    %691 = vmatpush.bf16.msra.mxu0 %v496
    %692 = vmatpush.bf16.msra.mxu0 %v494
    %693 = vmatpush.bf16.msra.mxu0 %v492
    %694 = vmatmul.bf16.gmra.mxu0 %v134
    %v695 = vpop.f32.mrf.mxu0
    %v696 = vadd.f32 %v683, %v695
    %v697 = vpop.f32.mrf.mxu0
    %698 = vdwg.mxu0
    %699 = vmatpush.bf16.msra.mxu0 %v522
    %700 = vmatpush.bf16.msra.mxu0 %v520
    %701 = vmatpush.bf16.msra.mxu0 %v518
    %702 = vmatpush.bf16.msra.mxu0 %v516
    %703 = vmatpush.bf16.msra.mxu0 %v514
    %704 = vmatpush.bf16.msra.mxu0 %v512
    %705 = vmatpush.bf16.msra.mxu0 %v510
    %706 = vmatpush.bf16.msra.mxu0 %v508
    %707 = vmatmul.bf16.gmra.mxu0 %v135
    %v708 = vpop.f32.mrf.mxu0
    %v709 = vadd.f32 %v696, %v708
    %v710 = vpop.f32.mrf.mxu0
    %711 = vdwg.mxu0
    %712 = vmatpush.bf16.msra.mxu0 %v538
    %713 = vmatpush.bf16.msra.mxu0 %v536
    %714 = vmatpush.bf16.msra.mxu0 %v534
    %715 = vmatpush.bf16.msra.mxu0 %v532
    %716 = vmatpush.bf16.msra.mxu0 %v530
    %717 = vmatpush.bf16.msra.mxu0 %v528
    %718 = vmatpush.bf16.msra.mxu0 %v526
    %719 = vmatpush.bf16.msra.mxu0 %v524
    %720 = vmatmul.bf16.gmra.mxu0 %v136
    %v721 = vpop.f32.mrf.mxu0
    %v722 = vadd.f32 %v709, %v721
    %v723 = vpop.f32.mrf.mxu0
    %724 = vdwg.mxu0
    %725 = vmatpush.bf16.msra.mxu0 0
    %726 = vmatpush.bf16.msra.mxu0 0
    %727 = vmatpush.bf16.msra.mxu0 0
    %728 = vmatpush.bf16.msra.mxu0 0
    %729 = vmatpush.bf16.msra.mxu0 0
    %730 = vmatpush.bf16.msra.mxu0 0
    %731 = vmatpush.bf16.msra.mxu0 %v542
    %732 = vmatpush.bf16.msra.mxu0 %v540
    %733 = vmatmul.bf16.gmra.mxu0 %v645
    %v734 = vpop.f32.mrf.mxu0
    %v735 = vadd.f32 %v722, %v734
    %v736 = vpop.f32.mrf.mxu0
    %737 = vdwg.mxu0
    %738 = vmatpush.bf16.msra.mxu0 %v459
    %739 = vmatpush.bf16.msra.mxu0 %v457
    %740 = vmatpush.bf16.msra.mxu0 %v455
    %741 = vmatpush.bf16.msra.mxu0 %v453
    %742 = vmatpush.bf16.msra.mxu0 %v451
    %743 = vmatpush.bf16.msra.mxu0 %v449
    %744 = vmatpush.bf16.msra.mxu0 %v447
    %745 = vmatpush.bf16.msra.mxu0 %v445
    %746 = vmatmul.bf16.gmra.mxu0 %v131
    %v747 = vpop.f32.mrf.mxu0
    %v748 = vadd.f32 %v126, %v747
    %v749 = vpop.f32.mrf.mxu0
    %750 = vdwg.mxu0
    %751 = vmatpush.bf16.msra.mxu0 %v475
    %752 = vmatpush.bf16.msra.mxu0 %v473
    %753 = vmatpush.bf16.msra.mxu0 %v471
    %754 = vmatpush.bf16.msra.mxu0 %v469
    %755 = vmatpush.bf16.msra.mxu0 %v467
    %756 = vmatpush.bf16.msra.mxu0 %v465
    %757 = vmatpush.bf16.msra.mxu0 %v463
    %758 = vmatpush.bf16.msra.mxu0 %v461
    %759 = vmatmul.bf16.gmra.mxu0 %v132
    %v760 = vpop.f32.mrf.mxu0
    %v761 = vadd.f32 %v748, %v760
    %v762 = vpop.f32.mrf.mxu0
    %763 = vdwg.mxu0
    %764 = vmatpush.bf16.msra.mxu0 %v491
    %765 = vmatpush.bf16.msra.mxu0 %v489
    %766 = vmatpush.bf16.msra.mxu0 %v487
    %767 = vmatpush.bf16.msra.mxu0 %v485
    %768 = vmatpush.bf16.msra.mxu0 %v483
    %769 = vmatpush.bf16.msra.mxu0 %v481
    %770 = vmatpush.bf16.msra.mxu0 %v479
    %771 = vmatpush.bf16.msra.mxu0 %v477
    %772 = vmatmul.bf16.gmra.mxu0 %v133
    %v773 = vpop.f32.mrf.mxu0
    %v774 = vadd.f32 %v761, %v773
    %v775 = vpop.f32.mrf.mxu0
    %776 = vdwg.mxu0
    %777 = vmatpush.bf16.msra.mxu0 %v507
    %778 = vmatpush.bf16.msra.mxu0 %v505
    %779 = vmatpush.bf16.msra.mxu0 %v503
    %780 = vmatpush.bf16.msra.mxu0 %v501
    %781 = vmatpush.bf16.msra.mxu0 %v499
    %782 = vmatpush.bf16.msra.mxu0 %v497
    %783 = vmatpush.bf16.msra.mxu0 %v495
    %784 = vmatpush.bf16.msra.mxu0 %v493
    %785 = vmatmul.bf16.gmra.mxu0 %v134
    %v786 = vpop.f32.mrf.mxu0
    %v787 = vadd.f32 %v774, %v786
    %v788 = vpop.f32.mrf.mxu0
    %789 = vdwg.mxu0
    %790 = vmatpush.bf16.msra.mxu0 %v523
    %791 = vmatpush.bf16.msra.mxu0 %v521
    %792 = vmatpush.bf16.msra.mxu0 %v519
    %793 = vmatpush.bf16.msra.mxu0 %v517
    %794 = vmatpush.bf16.msra.mxu0 %v515
    %795 = vmatpush.bf16.msra.mxu0 %v513
    %796 = vmatpush.bf16.msra.mxu0 %v511
    %797 = vmatpush.bf16.msra.mxu0 %v509
    %798 = vmatmul.bf16.gmra.mxu0 %v135
    %v799 = vpop.f32.mrf.mxu0
    %v800 = vadd.f32 %v787, %v799
    %v801 = vpop.f32.mrf.mxu0
    %802 = vdwg.mxu0
    %803 = vmatpush.bf16.msra.mxu0 %v539
    %804 = vmatpush.bf16.msra.mxu0 %v537
    %805 = vmatpush.bf16.msra.mxu0 %v535
    %806 = vmatpush.bf16.msra.mxu0 %v533
    %807 = vmatpush.bf16.msra.mxu0 %v531
    %808 = vmatpush.bf16.msra.mxu0 %v529
    %809 = vmatpush.bf16.msra.mxu0 %v527
    %810 = vmatpush.bf16.msra.mxu0 %v525
    %811 = vmatmul.bf16.gmra.mxu0 %v136
    %v812 = vpop.f32.mrf.mxu0
    %v813 = vadd.f32 %v800, %v812
    %v814 = vpop.f32.mrf.mxu0
    %815 = vdwg.mxu0
    %816 = vmatpush.bf16.msra.mxu0 0
    %817 = vmatpush.bf16.msra.mxu0 0
    %818 = vmatpush.bf16.msra.mxu0 0
    %819 = vmatpush.bf16.msra.mxu0 0
    %820 = vmatpush.bf16.msra.mxu0 0
    %821 = vmatpush.bf16.msra.mxu0 0
    %822 = vmatpush.bf16.msra.mxu0 %v543
    %823 = vmatpush.bf16.msra.mxu0 %v541
    %824 = vmatmul.bf16.gmra.mxu0 %v645
    %v825 = vpop.f32.mrf.mxu0
    %v826 = vadd.f32 %v813, %v825
    %v827 = vpop.f32.mrf.mxu0
    %828 = vdwg.mxu0
    %v829 = vmax.f32 %v735, 0.0
    %v830 = vmax.f32 %v826, 0.0
    %v831 = vpack.c.bf16 %v829, %v829
    %v832 = vpack.c.bf16 %v830, %v830
    %v833 = vld [vmem:[%s3] sm:$0xf]
    %v834 = vld [vmem:[%s3 + $0x4] sm:$0xf]
    %v835 = vld [vmem:[%s3 + $0x8] sm:$0xf]
    %v836 = vld [vmem:[%s3 + $0xc] sm:$0xf]
    %v837 = vld [vmem:[%s3 + $0x10] sm:$0xf]
    %v838 = vld [vmem:[%s3 + $0x14] sm:$0xf]
    %v839 = vld [vmem:[%s3 + $0x18] sm:$0xf]
    %v840 = vld [vmem:[%s3 + $0x1c] sm:$0xf]
    %v841 = vld [vmem:[%s3 + $0x20] sm:$0xf]
    %v842 = vld [vmem:[%s3 + $0x24] sm:$0xf]
    %v843 = vld [vmem:[%s3 + $0x28] sm:$0xf]
    %v844 = vld [vmem:[%s3 + $0x2c] sm:$0xf]
    %v845 = vld [vmem:[%s3 + $0x30] sm:$0xf]
    %v846 = vld [vmem:[%s3 + $0x34] sm:$0xf]
    %v847 = vld [vmem:[%s3 + $0x38] sm:$0xf]
    %v848 = vld [vmem:[%s3 + $0x3c] sm:$0xf]
    %v849 = vld [vmem:[%s3 + $0x40] sm:$0xf]
    %v850 = vld [vmem:[%s3 + $0x44] sm:$0xf]
    %v851 = vld [vmem:[%s3 + $0x48] sm:$0xf]
    %v852 = vld [vmem:[%s3 + $0x4c] sm:$0xf]
    %v853 = vld [vmem:[%s3 + $0x50] sm:$0xf]
    %v854 = vld [vmem:[%s3 + $0x54] sm:$0xf]
    %v855 = vld [vmem:[%s3 + $0x58] sm:$0xf]
    %v856 = vld [vmem:[%s3 + $0x5c] sm:$0xf]
    %v857 = vld [vmem:[%s3 + $0x60] sm:$0xf]
    %v858 = vld [vmem:[%s3 + $0x64] sm:$0xf]
    %v859 = vld [vmem:[%s3 + $0x68] sm:$0xf]
    %v860 = vld [vmem:[%s3 + $0x6c] sm:$0xf]
    %v861 = vld [vmem:[%s3 + $0x70] sm:$0xf]
    %v862 = vld [vmem:[%s3 + $0x74] sm:$0xf]
    %v863 = vld [vmem:[%s3 + $0x78] sm:$0xf]
    %v864 = vld [vmem:[%s3 + $0x7c] sm:$0xf]
    %v865 = vld [vmem:[%s4] sm:$0x1]
    %v867 = vperm.slane %v865, 0
    %v901 = vunpack.c.l.b16 %v833
    %v902 = vunpack.c.l.b16 %v834
    %v903 = vunpack.c.l.b16 %v835
    %v904 = vunpack.c.l.b16 %v836
    %v905 = vunpack.c.l.b16 %v837
    %v906 = vunpack.c.l.b16 %v838
    %v907 = vunpack.c.l.b16 %v839
    %v908 = vunpack.c.l.b16 %v840
    %v909 = vunpack.c.l.b16 %v841
    %v910 = vunpack.c.l.b16 %v842
    %v911 = vunpack.c.l.b16 %v843
    %v912 = vunpack.c.l.b16 %v844
    %v913 = vunpack.c.l.b16 %v845
    %v914 = vunpack.c.l.b16 %v846
    %v915 = vunpack.c.l.b16 %v847
    %v916 = vunpack.c.l.b16 %v848
    %v917 = vunpack.c.l.b16 %v849
    %v918 = vunpack.c.l.b16 %v850
    %v919 = vunpack.c.l.b16 %v851
    %v920 = vunpack.c.l.b16 %v852
    %v921 = vunpack.c.l.b16 %v853
    %v922 = vunpack.c.l.b16 %v854
    %v923 = vunpack.c.l.b16 %v855
    %v924 = vunpack.c.l.b16 %v856
    %v925 = vunpack.c.l.b16 %v857
    %v926 = vunpack.c.l.b16 %v858
    %v927 = vunpack.c.l.b16 %v859
    %v928 = vunpack.c.l.b16 %v860
    %v929 = vunpack.c.l.b16 %v861
    %v930 = vunpack.c.l.b16 %v862
    %v931 = vunpack.c.l.b16 %v863
    %v932 = vunpack.c.l.b16 %v864
    %v933 = vpack.c.b16 %v902, %v901
    %v934 = vpack.c.b16 %v904, %v903
    %v935 = vpack.c.b16 %v906, %v905
    %v936 = vpack.c.b16 %v908, %v907
    %v937 = vpack.c.b16 %v910, %v909
    %v938 = vpack.c.b16 %v912, %v911
    %v939 = vpack.c.b16 %v914, %v913
    %v940 = vpack.c.b16 %v916, %v915
    %v941 = vpack.c.b16 %v918, %v917
    %v942 = vpack.c.b16 %v920, %v919
    %v943 = vpack.c.b16 %v922, %v921
    %v944 = vpack.c.b16 %v924, %v923
    %v945 = vpack.c.b16 %v926, %v925
    %v946 = vpack.c.b16 %v928, %v927
    %v947 = vpack.c.b16 %v930, %v929
    %v948 = vpack.c.b16 %v932, %v931
    %965 = vmatpush.bf16.msra.mxu0 %v940
    %966 = vmatpush.bf16.msra.mxu0 %v939
    %967 = vmatpush.bf16.msra.mxu0 %v938
    %968 = vmatpush.bf16.msra.mxu0 %v937
    %969 = vmatpush.bf16.msra.mxu0 %v936
    %970 = vmatpush.bf16.msra.mxu0 %v935
    %971 = vmatpush.bf16.msra.mxu0 %v934
    %972 = vmatpush.bf16.msra.mxu0 %v933
    %973 = vmatmul.bf16.gmra.mxu0 %v831
    %v974 = vpop.f32.mrf.mxu0
    %v975 = vadd.f32 %v867, %v974
    %v976 = vpop.f32.mrf.mxu0
    %977 = vdwg.mxu0
    %978 = vmatpush.bf16.msra.mxu0 %v948
    %979 = vmatpush.bf16.msra.mxu0 %v947
    %980 = vmatpush.bf16.msra.mxu0 %v946
    %981 = vmatpush.bf16.msra.mxu0 %v945
    %982 = vmatpush.bf16.msra.mxu0 %v944
    %983 = vmatpush.bf16.msra.mxu0 %v943
    %984 = vmatpush.bf16.msra.mxu0 %v942
    %985 = vmatpush.bf16.msra.mxu0 %v941
    %986 = vmatmul.bf16.gmra.mxu0 %v832
    %v987 = vpop.f32.mrf.mxu0
    %v988 = vadd.f32 %v975, %v987
    %v989 = vpop.f32.mrf.mxu0
    %990 = vdwg.mxu0
    %991 = vst [vmem:[#allocation2] sm:$0x3] %v988
    // Predicated region
    $region22: #{cnn1_forward.5} parent=1 // pred_check
      _
    $region23: #{cnn1_forward.5} parent=1 // pred_check_branch
      %993 = sbr.rel (0) target = $region25
    $region24: #{cnn1_forward.5} parent=1 // pred_region
      %995 = vsyncadd [#allocation3], 0
      %s997 = sshll.u32 [#allocation2], 4
      %s998 = int_to_ptr.vmem [resolvable:$true] %s997
      %s999 = sshll.u32 %s5, 4
      %s1000 = int_to_ptr.hbm [resolvable:$true] %s999
      %1002 = dma.vmem_to_hbm [thread:$0]  %s998, 32, %s1000, [#allocation3]
    $region25: #{cnn1_forward.5} parent=1 // pred_fallthru
      _
    // Predicated region
    $region26: #{cnn1_forward.5} parent=1 // pred_check
      _
    $region27: #{cnn1_forward.5} parent=1 // pred_check_branch
      %1004 = sbr.rel (0) target = $region29
    $region28: #{cnn1_forward.5} parent=1 // pred_region
      %1006 = dma.done [#allocation3], 32
    $region29: #{cnn1_forward.5} parent=1 // pred_fallthru
      _
    %1007 = vsyncpa [#allocation3], 1

</llo_original>
